<compile_context>
chip_gen: v7x
topology: tpu7x:2x2x1
jax: 0.10.0
libtpu: 0.0.40
codegen_flags: <defaults>
</compile_context>

<pallas_src>
import numpy as np

import jax
import jax.numpy as jnp
from jax.experimental import pallas as pl
from jax.experimental.pallas import tpu as pltpu


# ---------------------------------------------------------------------------
# Fused forward kernel: one grid step == one batch element.
# ---------------------------------------------------------------------------
def _fused_forward_kernel(p1_ref, w1_ref, b1_ref, g_ref, w2k_ref, b2_ref,
                          p2_ref, fc1w_ref, fc1b_ref, fc2w_ref, fc2b_ref,
                          fc3w_ref, fc3b_ref, o_ref):
    f32 = jnp.float32
    taps = w2k_ref.shape[0]            # 25 taps of the 5x5 conv2 kernel
    oc2 = w2k_ref.shape[2]             # 10 conv2 output channels
    n_pool2, nqp = p2_ref.shape        # pool2 positions S, padded conv2 positions

    # conv1 (im2col matmul, K padded to 128) + bias + ReLU.
    z1 = jnp.dot(p1_ref[0], w1_ref[...], preferred_element_type=f32)
    z1 = jnp.maximum(z1 + b1_ref[...], 0.0)                      # (OH1*OW1, 5)

    # avgpool1 + gather of conv2 receptive fields: one constant 0/0.25 matmul.
    a = jnp.dot(g_ref[...], z1, preferred_element_type=f32)      # (taps*nqp, 5)

    # conv2, evaluated only at positions kept by pool2: 25 accumulated MXU taps.
    acc = jnp.zeros((nqp, oc2), dtype=f32)
    for t in range(taps):              # static unroll; slices start at 8*k
        acc = acc + jnp.dot(a[t * nqp:(t + 1) * nqp, :], w2k_ref[t],
                            preferred_element_type=f32)
    z2 = jnp.maximum(acc + b2_ref[...], 0.0)                     # (nqp, 10)

    # avgpool2 (+ implicit flatten: fc1 weight rows were pre-permuted to match).
    pooled2 = jnp.dot(p2_ref[...], z2, preferred_element_type=f32)   # (S, 10)

    # --- fused StandardFFNN head ---
    h = fc1b_ref[...]
    for s in range(n_pool2):           # S == 1 for 32x32 inputs
        h = h + jnp.dot(pooled2[s:s + 1, :], fc1w_ref[s],
                        preferred_element_type=f32)
    h = jnp.maximum(h, 0.0)                                      # (1, hidden)
    h = jnp.maximum(jnp.dot(h, fc2w_ref[...], preferred_element_type=f32)
                    + fc2b_ref[...], 0.0)
    logits = jnp.dot(h, fc3w_ref[...], preferred_element_type=f32) + fc3b_ref[...]

    # softmax(dim=1); exact reciprocal keeps row sums == 1 to fp accuracy.
    m = jnp.max(logits, axis=-1, keepdims=True)
    e = jnp.exp(logits - m)
    probs = e * pl.reciprocal(jnp.sum(e, axis=-1, keepdims=True), approx=False)
    o_ref[0] = probs.astype(o_ref.dtype)


# ---------------------------------------------------------------------------
# Host-side (trace-time) helpers
# ---------------------------------------------------------------------------
def _im2col_conv1(x, k=5, stride=2):
    """NCHW -> (N, OH*OW, C*k*k) patches, columns ordered (c, kh, kw) to match
    the PyTorch Conv2d weight flatten.  The only layout glue outside the kernel."""
    N, C, H, W = x.shape
    OH = (H - k) // stride + 1
    OW = (W - k) // stride + 1
    cols = []
    for di in range(k):
        for dj in range(k):
            cols.append(x[:, :, di:di + stride * OH:stride,
                             dj:dj + stride * OW:stride])
    p = jnp.stack(cols, axis=2)                    # (N, C, k*k, OH, OW)
    p = p.reshape(N, C * k * k, OH * OW)
    return p.transpose(0, 2, 1), OH, OW            # (N, OH*OW, C*k*k)


def _pool_and_gather_constants(OH1, OW1, h2p, w2p):
    """Constant 0/0.25 matrices implementing
       (a) avgpool1(2x2) fused with gathering conv2's receptive fields at the
           output positions kept by pool2  -> gsel: (25*nqp, OH1*OW1)
       (b) avgpool2(2x2) over those positions -> p2: (S, nqp)
    nqp = 4*S rounded up to a multiple of 8 so in-kernel row slices are
    sublane-aligned; padded rows/columns are zero (exact)."""
    S = h2p * w2p
    nq = 4 * S
    nqp = ((nq + 7) // 8) * 8
    gsel = np.zeros((25 * nqp, OH1 * OW1), dtype=np.float32)
    p2 = np.zeros((S, nqp), dtype=np.float32)
    for kh in range(5):
        for kw in range(5):
            t = kh * 5 + kw
            for oh2 in range(2 * h2p):
                for ow2 in range(2 * w2p):
                    q = oh2 * (2 * w2p) + ow2
                    for di in range(2):
                        for dj in range(2):
                            r = 2 * (oh2 + kh) + di
                            c = 2 * (ow2 + kw) + dj
                            gsel[t * nqp + q, r * OW1 + c] = 0.25
    for oh2 in range(2 * h2p):
        for ow2 in range(2 * w2p):
            q = oh2 * (2 * w2p) + ow2
            s = (oh2 // 2) * w2p + (ow2 // 2)
            p2[s, q] = 0.25
    return jnp.asarray(gsel), jnp.asarray(p2)


def _resident_spec(shape):
    """Full-array block with a constant index_map: DMA'd once, stays in VMEM."""
    n = len(shape)
    return pl.BlockSpec(tuple(shape), lambda i, _n=n: (0,) * _n)


# ---------------------------------------------------------------------------
# Model forward
# ---------------------------------------------------------------------------
def standard_thl_convnet(params, x):
    """Fused Pallas forward pass of StandardTHLConvNet on NCHW input x."""
    N, C, H, W = x.shape
    hidden = params["fc1_w"].shape[1]
    out_size = params["fc3_w"].shape[1]

    # Static geometry: conv1 (k=5,s=2), pool 2x2, conv2 (k=5,s=1), pool 2x2.
    p1, OH1, OW1 = _im2col_conv1(x)                # (N, M1, C*25)
    PH1, PW1 = OH1 // 2, OW1 // 2                  # pool1 output
    OH2, OW2 = PH1 - 4, PW1 - 4                    # conv2 output
    h2p, w2p = OH2 // 2, OW2 // 2                  # pool2 output
    S = h2p * w2p                                  # spatial size per feature channel
    M1 = OH1 * OW1
    K1 = C * 25
    Kpad = ((K1 + 127) // 128) * 128               # lane-align conv1 contraction

    # Tiny, one-shot layout glue on weights (outside the kernel).
    p1 = jnp.pad(p1.astype(jnp.float32), ((0, 0), (0, 0), (0, Kpad - K1)))
    w1 = jnp.pad(params["conv1_w"].reshape(5, K1).T, ((0, Kpad - K1), (0, 0)))
    b1 = params["conv1_b"].reshape(1, 5)
    w2k = params["conv2_w"].transpose(2, 3, 1, 0).reshape(25, 5, 10)  # (t, cin, cout)
    b2 = params["conv2_b"].reshape(1, 10)
    # fc1 rows permuted from torch flatten order (c, s) to the kernel's (s, c).
    fc1_wp = params["fc1_w"].reshape(10, S, hidden).transpose(1, 0, 2)
    fc1_b = params["fc1_b"].reshape(1, hidden)
    fc2_w = params["fc2_w"]
    fc2_b = params["fc2_b"].reshape(1, hidden)
    fc3_w = params["fc3_w"]
    fc3_b = params["fc3_b"].reshape(1, out_size)
    gsel, p2m = _pool_and_gather_constants(OH1, OW1, h2p, w2p)

    # TODO(synk): conv1's im2col gather is built with XLA strided slices above;
    # it could be moved in-kernel with strided VMEM loads if it ever dominates.
    out = pl.pallas_call(
        _fused_forward_kernel,
        out_shape=jax.ShapeDtypeStruct((N, 1, out_size), jnp.float32),
        grid=(N,),
        in_specs=[
            pl.BlockSpec((1, M1, Kpad), lambda i: (i, 0, 0)),  # per-batch patches
            _resident_spec(w1.shape),
            _resident_spec(b1.shape),
            _resident_spec(gsel.shape),
            _resident_spec(w2k.shape),
            _resident_spec(b2.shape),
            _resident_spec(p2m.shape),
            _resident_spec(fc1_wp.shape),
            _resident_spec(fc1_b.shape),
            _resident_spec(fc2_w.shape),
            _resident_spec(fc2_b.shape),
            _resident_spec(fc3_w.shape),
            _resident_spec(fc3_b.shape),
        ],
        out_specs=pl.BlockSpec((1, 1, out_size), lambda i: (i, 0, 0)),
        compiler_params=pltpu.CompilerParams(
            # Batch axis is independent -> shards across v7x's 2 TensorCores.
            # (VMEM footprint here is <1 MiB, so no vmem_limit_bytes needed;
            #  set it explicitly if batch/resolution grows on v7x's 64 MiB VMEM.)
            dimension_semantics=("parallel",)),
    )(p1, w1, b1, gsel, w2k, b2, p2m, fc1_wp, fc1_b, fc2_w, fc2_b, fc3_w, fc3_b)
    return out.reshape(N, out_size)


# ---------------------------------------------------------------------------
# Parameter init (matches the PyTorch module's layer shapes)
# ---------------------------------------------------------------------------
def _conv_out(n, k, s):
    return (n - k) // s + 1


def feature_out_dim(input_shape):
    _, H, W = input_shape
    h = _conv_out(H, 5, 2) // 2
    w = _conv_out(W, 5, 2) // 2
    h = _conv_out(h, 5, 1) // 2
    w = _conv_out(w, 5, 1) // 2
    return 10 * h * w


def init_params(key, input_shape, output_size, hidden_layer_size):
    in_channels = input_shape[0]
    feat_dim = feature_out_dim(input_shape)
    ks = jax.random.split(key, 10)

    def u(k, shape, fan_in):   # PyTorch default U(-1/sqrt(fan_in), 1/sqrt(fan_in))
        lim = 1.0 / float(fan_in) ** 0.5
        return jax.random.uniform(k, shape, jnp.float32, -lim, lim)

    return {
        "conv1_w": u(ks[0], (5, in_channels, 5, 5), in_channels * 25),
        "conv1_b": u(ks[1], (5,), in_channels * 25),
        "conv2_w": u(ks[2], (10, 5, 5, 5), 5 * 25),
        "conv2_b": u(ks[3], (10,), 5 * 25),
        "fc1_w":   u(ks[4], (feat_dim, hidden_layer_size), feat_dim),
        "fc1_b":   u(ks[5], (hidden_layer_size,), feat_dim),
        "fc2_w":   u(ks[6], (hidden_layer_size, hidden_layer_size), hidden_layer_size),
        "fc2_b":   u(ks[7], (hidden_layer_size,), hidden_layer_size),
        "fc3_w":   u(ks[8], (hidden_layer_size, output_size), hidden_layer_size),
        "fc3_b":   u(ks[9], (output_size,), hidden_layer_size),
    }


def _reference_forward(params, x):
    """Pure-JAX (XLA) reference mirroring the PyTorch module, for a sanity check."""
    def conv_relu(x, w, b, stride):
        y = jax.lax.conv_general_dilated(
            x, w, window_strides=(stride, stride), padding="VALID",
            dimension_numbers=("NCHW", "OIHW", "NCHW"))
        return jax.nn.relu(y + b.reshape(1, -1, 1, 1))

    def avgpool2(x):
        n, c, h, w = x.shape
        x = x[:, :, :2 * (h // 2), :2 * (w // 2)]
        return x.reshape(n, c, h // 2, 2, w // 2, 2).mean(axis=(3, 5))

    r = avgpool2(conv_relu(x, params["conv1_w"], params["conv1_b"], 2))
    r = avgpool2(conv_relu(r, params["conv2_w"], params["conv2_b"], 1))
    f = r.reshape(r.shape[0], -1)
    h = jax.nn.relu(f @ params["fc1_w"] + params["fc1_b"])
    h = jax.nn.relu(h @ params["fc2_w"] + params["fc2_b"])
    return jax.nn.softmax(h @ params["fc3_w"] + params["fc3_b"], axis=1)


# ---------------------------------------------------------------------------
if __name__ == "__main__":
    key = jax.random.PRNGKey(0)
    k_param, k_x = jax.random.split(key)

    input_shape = (3, 32, 32)        # (C, H, W); module asserts C <= 3
    batch = 2
    output_size = 8
    hidden_layer_size = 32

    params = init_params(k_param, input_shape, output_size, hidden_layer_size)
    x = jax.random.normal(k_x, (batch,) + input_shape, dtype=jnp.float32)

    fwd = jax.jit(standard_thl_convnet)
    out = jax.block_until_ready(fwd(params, x))

    assert out.shape == (batch, output_size), out.shape
    assert bool(jnp.all(jnp.isfinite(out)))
    # softmax rows sum to 1
    assert bool(jnp.allclose(jnp.sum(out, axis=1), 1.0, atol=1e-5))
    # matches a pure-XLA reference of the same module (loose tol: MXU rounding)
    ref = _reference_forward(params, x)
    assert bool(jnp.allclose(out, ref, atol=1e-2, rtol=1e-2)), \
        float(jnp.max(jnp.abs(out - ref)))
    print("KERNEL_OK")
</pallas_src>

<mosaic_0001>
module attributes {stable_mosaic.version = 11 : i64} {
  func.func @_fused_forward_kernel(%arg0: i32, %arg1: memref<1x196x128xf32, #tpu.memory_space<vmem>>, %arg2: memref<128x5xf32, #tpu.memory_space<vmem>>, %arg3: memref<1x5xf32, #tpu.memory_space<vmem>>, %arg4: memref<200x196xf32, #tpu.memory_space<vmem>>, %arg5: memref<25x5x10xf32, #tpu.memory_space<vmem>>, %arg6: memref<1x10xf32, #tpu.memory_space<vmem>>, %arg7: memref<1x8xf32, #tpu.memory_space<vmem>>, %arg8: memref<1x10x32xf32, #tpu.memory_space<vmem>>, %arg9: memref<1x32xf32, #tpu.memory_space<vmem>>, %arg10: memref<32x32xf32, #tpu.memory_space<vmem>>, %arg11: memref<1x32xf32, #tpu.memory_space<vmem>>, %arg12: memref<32x8xf32, #tpu.memory_space<vmem>>, %arg13: memref<1x8xf32, #tpu.memory_space<vmem>>, %arg14: memref<1x1x8xf32, #tpu.memory_space<vmem>>) attributes {dimension_semantics = [#tpu.dimension_semantics<parallel>], iteration_bounds = array<i64: 2>, scalar_prefetch = 0 : i64, scratch_operands = 0 : i64, tpu.core_type = #tpu.core_type<tc>, window_params = [{transform_indices = @transform_0, window_bounds = array<i64: 1, 196, 128>}, {pipeline_mode = #tpu.pipeline_mode<synchronous>, transform_indices = @transform_1, window_bounds = array<i64: 128, 5>}, {pipeline_mode = #tpu.pipeline_mode<synchronous>, transform_indices = @transform_2, window_bounds = array<i64: 1, 5>}, {pipeline_mode = #tpu.pipeline_mode<synchronous>, transform_indices = @transform_3, window_bounds = array<i64: 200, 196>}, {pipeline_mode = #tpu.pipeline_mode<synchronous>, transform_indices = @transform_4, window_bounds = array<i64: 25, 5, 10>}, {pipeline_mode = #tpu.pipeline_mode<synchronous>, transform_indices = @transform_5, window_bounds = array<i64: 1, 10>}, {pipeline_mode = #tpu.pipeline_mode<synchronous>, transform_indices = @transform_6, window_bounds = array<i64: 1, 8>}, {pipeline_mode = #tpu.pipeline_mode<synchronous>, transform_indices = @transform_7, window_bounds = array<i64: 1, 10, 32>}, {pipeline_mode = #tpu.pipeline_mode<synchronous>, transform_indices = @transform_8, window_bounds = array<i64: 1, 32>}, {pipeline_mode = #tpu.pipeline_mode<synchronous>, transform_indices = @transform_9, window_bounds = array<i64: 32, 32>}, {pipeline_mode = #tpu.pipeline_mode<synchronous>, transform_indices = @transform_10, window_bounds = array<i64: 1, 32>}, {pipeline_mode = #tpu.pipeline_mode<synchronous>, transform_indices = @transform_11, window_bounds = array<i64: 32, 8>}, {pipeline_mode = #tpu.pipeline_mode<synchronous>, transform_indices = @transform_12, window_bounds = array<i64: 1, 8>}, {transform_indices = @transform_13, window_bounds = array<i64: 1, 1, 8>}]} {
    %c0 = arith.constant 0 : index
    %c0_0 = arith.constant 0 : index
    %c0_1 = arith.constant 0 : index
    %0 = vector.load %arg1[%c0, %c0_0, %c0_1] : memref<1x196x128xf32, #tpu.memory_space<vmem>>, vector<1x196x128xf32>
    %1 = vector.shape_cast %0 : vector<1x196x128xf32> to vector<196x128xf32>
    %c0_2 = arith.constant 0 : index
    %c0_3 = arith.constant 0 : index
    %2 = vector.load %arg2[%c0_2, %c0_3] : memref<128x5xf32, #tpu.memory_space<vmem>>, vector<128x5xf32>
    %cst = arith.constant dense<0.000000e+00> : vector<196x5xf32>
    %3 = tpu.matmul %1, %2, %cst {dimension_numbers = #tpu.dot_dimension_numbers<[1], [0], [0], [1], [0, 0, 1, 1], [], []>} : vector<196x128xf32>, vector<128x5xf32>, vector<196x5xf32> -> vector<196x5xf32>
    %c0_4 = arith.constant 0 : index
    %c0_5 = arith.constant 0 : index
    %4 = vector.load %arg3[%c0_4, %c0_5] : memref<1x5xf32, #tpu.memory_space<vmem>>, vector<1x5xf32>
    %5 = vector.broadcast %4 : vector<1x5xf32> to vector<196x5xf32>
    %6 = arith.addf %3, %5 : vector<196x5xf32>
    %cst_6 = arith.constant 0.000000e+00 : f32
    %7 = vector.broadcast %cst_6 : f32 to vector<196x5xf32>
    %8 = arith.maximumf %6, %7 : vector<196x5xf32>
    %c0_7 = arith.constant 0 : index
    %c0_8 = arith.constant 0 : index
    %9 = vector.load %arg4[%c0_7, %c0_8] : memref<200x196xf32, #tpu.memory_space<vmem>>, vector<200x196xf32>
    %cst_9 = arith.constant dense<0.000000e+00> : vector<200x5xf32>
    %10 = tpu.matmul %9, %8, %cst_9 {dimension_numbers = #tpu.dot_dimension_numbers<[1], [0], [0], [1], [0, 0, 1, 1], [], []>} : vector<200x196xf32>, vector<196x5xf32>, vector<200x5xf32> -> vector<200x5xf32>
    %cst_10 = arith.constant 0.000000e+00 : f32
    %11 = vector.broadcast %cst_10 : f32 to vector<8x10xf32>
    %12 = vector.extract_strided_slice %10 {offsets = [0, 0], sizes = [8, 5], strides = [1, 1]} : vector<200x5xf32> to vector<8x5xf32>
    %c0_11 = arith.constant 0 : index
    %c0_12 = arith.constant 0 : index
    %c0_13 = arith.constant 0 : index
    %13 = vector.load %arg5[%c0_11, %c0_12, %c0_13] : memref<25x5x10xf32, #tpu.memory_space<vmem>>, vector<1x5x10xf32>
    %14 = vector.shape_cast %13 : vector<1x5x10xf32> to vector<5x10xf32>
    %cst_14 = arith.constant dense<0.000000e+00> : vector<8x10xf32>
    %15 = tpu.matmul %12, %14, %cst_14 {dimension_numbers = #tpu.dot_dimension_numbers<[1], [0], [0], [1], [0, 0, 1, 1], [], []>} : vector<8x5xf32>, vector<5x10xf32>, vector<8x10xf32> -> vector<8x10xf32>
    %16 = arith.addf %11, %15 : vector<8x10xf32>
    %17 = vector.extract_strided_slice %10 {offsets = [8, 0], sizes = [8, 5], strides = [1, 1]} : vector<200x5xf32> to vector<8x5xf32>
    %c1 = arith.constant 1 : index
    %c0_15 = arith.constant 0 : index
    %c0_16 = arith.constant 0 : index
    %18 = vector.load %arg5[%c1, %c0_15, %c0_16] : memref<25x5x10xf32, #tpu.memory_space<vmem>>, vector<1x5x10xf32>
    %19 = vector.shape_cast %18 : vector<1x5x10xf32> to vector<5x10xf32>
    %cst_17 = arith.constant dense<0.000000e+00> : vector<8x10xf32>
    %20 = tpu.matmul %17, %19, %cst_17 {dimension_numbers = #tpu.dot_dimension_numbers<[1], [0], [0], [1], [0, 0, 1, 1], [], []>} : vector<8x5xf32>, vector<5x10xf32>, vector<8x10xf32> -> vector<8x10xf32>
    %21 = arith.addf %16, %20 : vector<8x10xf32>
    %22 = vector.extract_strided_slice %10 {offsets = [16, 0], sizes = [8, 5], strides = [1, 1]} : vector<200x5xf32> to vector<8x5xf32>
    %c2 = arith.constant 2 : index
    %c0_18 = arith.constant 0 : index
    %c0_19 = arith.constant 0 : index
    %23 = vector.load %arg5[%c2, %c0_18, %c0_19] : memref<25x5x10xf32, #tpu.memory_space<vmem>>, vector<1x5x10xf32>
    %24 = vector.shape_cast %23 : vector<1x5x10xf32> to vector<5x10xf32>
    %cst_20 = arith.constant dense<0.000000e+00> : vector<8x10xf32>
    %25 = tpu.matmul %22, %24, %cst_20 {dimension_numbers = #tpu.dot_dimension_numbers<[1], [0], [0], [1], [0, 0, 1, 1], [], []>} : vector<8x5xf32>, vector<5x10xf32>, vector<8x10xf32> -> vector<8x10xf32>
    %26 = arith.addf %21, %25 : vector<8x10xf32>
    %27 = vector.extract_strided_slice %10 {offsets = [24, 0], sizes = [8, 5], strides = [1, 1]} : vector<200x5xf32> to vector<8x5xf32>
    %c3 = arith.constant 3 : index
    %c0_21 = arith.constant 0 : index
    %c0_22 = arith.constant 0 : index
    %28 = vector.load %arg5[%c3, %c0_21, %c0_22] : memref<25x5x10xf32, #tpu.memory_space<vmem>>, vector<1x5x10xf32>
    %29 = vector.shape_cast %28 : vector<1x5x10xf32> to vector<5x10xf32>
    %cst_23 = arith.constant dense<0.000000e+00> : vector<8x10xf32>
    %30 = tpu.matmul %27, %29, %cst_23 {dimension_numbers = #tpu.dot_dimension_numbers<[1], [0], [0], [1], [0, 0, 1, 1], [], []>} : vector<8x5xf32>, vector<5x10xf32>, vector<8x10xf32> -> vector<8x10xf32>
    %31 = arith.addf %26, %30 : vector<8x10xf32>
    %32 = vector.extract_strided_slice %10 {offsets = [32, 0], sizes = [8, 5], strides = [1, 1]} : vector<200x5xf32> to vector<8x5xf32>
    %c4 = arith.constant 4 : index
    %c0_24 = arith.constant 0 : index
    %c0_25 = arith.constant 0 : index
    %33 = vector.load %arg5[%c4, %c0_24, %c0_25] : memref<25x5x10xf32, #tpu.memory_space<vmem>>, vector<1x5x10xf32>
    %34 = vector.shape_cast %33 : vector<1x5x10xf32> to vector<5x10xf32>
    %cst_26 = arith.constant dense<0.000000e+00> : vector<8x10xf32>
    %35 = tpu.matmul %32, %34, %cst_26 {dimension_numbers = #tpu.dot_dimension_numbers<[1], [0], [0], [1], [0, 0, 1, 1], [], []>} : vector<8x5xf32>, vector<5x10xf32>, vector<8x10xf32> -> vector<8x10xf32>
    %36 = arith.addf %31, %35 : vector<8x10xf32>
    %37 = vector.extract_strided_slice %10 {offsets = [40, 0], sizes = [8, 5], strides = [1, 1]} : vector<200x5xf32> to vector<8x5xf32>
    %c5 = arith.constant 5 : index
    %c0_27 = arith.constant 0 : index
    %c0_28 = arith.constant 0 : index
    %38 = vector.load %arg5[%c5, %c0_27, %c0_28] : memref<25x5x10xf32, #tpu.memory_space<vmem>>, vector<1x5x10xf32>
    %39 = vector.shape_cast %38 : vector<1x5x10xf32> to vector<5x10xf32>
    %cst_29 = arith.constant dense<0.000000e+00> : vector<8x10xf32>
    %40 = tpu.matmul %37, %39, %cst_29 {dimension_numbers = #tpu.dot_dimension_numbers<[1], [0], [0], [1], [0, 0, 1, 1], [], []>} : vector<8x5xf32>, vector<5x10xf32>, vector<8x10xf32> -> vector<8x10xf32>
    %41 = arith.addf %36, %40 : vector<8x10xf32>
    %42 = vector.extract_strided_slice %10 {offsets = [48, 0], sizes = [8, 5], strides = [1, 1]} : vector<200x5xf32> to vector<8x5xf32>
    %c6 = arith.constant 6 : index
    %c0_30 = arith.constant 0 : index
    %c0_31 = arith.constant 0 : index
    %43 = vector.load %arg5[%c6, %c0_30, %c0_31] : memref<25x5x10xf32, #tpu.memory_space<vmem>>, vector<1x5x10xf32>
    %44 = vector.shape_cast %43 : vector<1x5x10xf32> to vector<5x10xf32>
    %cst_32 = arith.constant dense<0.000000e+00> : vector<8x10xf32>
    %45 = tpu.matmul %42, %44, %cst_32 {dimension_numbers = #tpu.dot_dimension_numbers<[1], [0], [0], [1], [0, 0, 1, 1], [], []>} : vector<8x5xf32>, vector<5x10xf32>, vector<8x10xf32> -> vector<8x10xf32>
    %46 = arith.addf %41, %45 : vector<8x10xf32>
    %47 = vector.extract_strided_slice %10 {offsets = [56, 0], sizes = [8, 5], strides = [1, 1]} : vector<200x5xf32> to vector<8x5xf32>
    %c7 = arith.constant 7 : index
    %c0_33 = arith.constant 0 : index
    %c0_34 = arith.constant 0 : index
    %48 = vector.load %arg5[%c7, %c0_33, %c0_34] : memref<25x5x10xf32, #tpu.memory_space<vmem>>, vector<1x5x10xf32>
    %49 = vector.shape_cast %48 : vector<1x5x10xf32> to vector<5x10xf32>
    %cst_35 = arith.constant dense<0.000000e+00> : vector<8x10xf32>
    %50 = tpu.matmul %47, %49, %cst_35 {dimension_numbers = #tpu.dot_dimension_numbers<[1], [0], [0], [1], [0, 0, 1, 1], [], []>} : vector<8x5xf32>, vector<5x10xf32>, vector<8x10xf32> -> vector<8x10xf32>
    %51 = arith.addf %46, %50 : vector<8x10xf32>
    %52 = vector.extract_strided_slice %10 {offsets = [64, 0], sizes = [8, 5], strides = [1, 1]} : vector<200x5xf32> to vector<8x5xf32>
    %c8 = arith.constant 8 : index
    %c0_36 = arith.constant 0 : index
    %c0_37 = arith.constant 0 : index
    %53 = vector.load %arg5[%c8, %c0_36, %c0_37] : memref<25x5x10xf32, #tpu.memory_space<vmem>>, vector<1x5x10xf32>
    %54 = vector.shape_cast %53 : vector<1x5x10xf32> to vector<5x10xf32>
    %cst_38 = arith.constant dense<0.000000e+00> : vector<8x10xf32>
    %55 = tpu.matmul %52, %54, %cst_38 {dimension_numbers = #tpu.dot_dimension_numbers<[1], [0], [0], [1], [0, 0, 1, 1], [], []>} : vector<8x5xf32>, vector<5x10xf32>, vector<8x10xf32> -> vector<8x10xf32>
    %56 = arith.addf %51, %55 : vector<8x10xf32>
    %57 = vector.extract_strided_slice %10 {offsets = [72, 0], sizes = [8, 5], strides = [1, 1]} : vector<200x5xf32> to vector<8x5xf32>
    %c9 = arith.constant 9 : index
    %c0_39 = arith.constant 0 : index
    %c0_40 = arith.constant 0 : index
    %58 = vector.load %arg5[%c9, %c0_39, %c0_40] : memref<25x5x10xf32, #tpu.memory_space<vmem>>, vector<1x5x10xf32>
    %59 = vector.shape_cast %58 : vector<1x5x10xf32> to vector<5x10xf32>
    %cst_41 = arith.constant dense<0.000000e+00> : vector<8x10xf32>
    %60 = tpu.matmul %57, %59, %cst_41 {dimension_numbers = #tpu.dot_dimension_numbers<[1], [0], [0], [1], [0, 0, 1, 1], [], []>} : vector<8x5xf32>, vector<5x10xf32>, vector<8x10xf32> -> vector<8x10xf32>
    %61 = arith.addf %56, %60 : vector<8x10xf32>
    %62 = vector.extract_strided_slice %10 {offsets = [80, 0], sizes = [8, 5], strides = [1, 1]} : vector<200x5xf32> to vector<8x5xf32>
    %c10 = arith.constant 10 : index
    %c0_42 = arith.constant 0 : index
    %c0_43 = arith.constant 0 : index
    %63 = vector.load %arg5[%c10, %c0_42, %c0_43] : memref<25x5x10xf32, #tpu.memory_space<vmem>>, vector<1x5x10xf32>
    %64 = vector.shape_cast %63 : vector<1x5x10xf32> to vector<5x10xf32>
    %cst_44 = arith.constant dense<0.000000e+00> : vector<8x10xf32>
    %65 = tpu.matmul %62, %64, %cst_44 {dimension_numbers = #tpu.dot_dimension_numbers<[1], [0], [0], [1], [0, 0, 1, 1], [], []>} : vector<8x5xf32>, vector<5x10xf32>, vector<8x10xf32> -> vector<8x10xf32>
    %66 = arith.addf %61, %65 : vector<8x10xf32>
    %67 = vector.extract_strided_slice %10 {offsets = [88, 0], sizes = [8, 5], strides = [1, 1]} : vector<200x5xf32> to vector<8x5xf32>
    %c11 = arith.constant 11 : index
    %c0_45 = arith.constant 0 : index
    %c0_46 = arith.constant 0 : index
    %68 = vector.load %arg5[%c11, %c0_45, %c0_46] : memref<25x5x10xf32, #tpu.memory_space<vmem>>, vector<1x5x10xf32>
    %69 = vector.shape_cast %68 : vector<1x5x10xf32> to vector<5x10xf32>
    %cst_47 = arith.constant dense<0.000000e+00> : vector<8x10xf32>
    %70 = tpu.matmul %67, %69, %cst_47 {dimension_numbers = #tpu.dot_dimension_numbers<[1], [0], [0], [1], [0, 0, 1, 1], [], []>} : vector<8x5xf32>, vector<5x10xf32>, vector<8x10xf32> -> vector<8x10xf32>
    %71 = arith.addf %66, %70 : vector<8x10xf32>
    %72 = vector.extract_strided_slice %10 {offsets = [96, 0], sizes = [8, 5], strides = [1, 1]} : vector<200x5xf32> to vector<8x5xf32>
    %c12 = arith.constant 12 : index
    %c0_48 = arith.constant 0 : index
    %c0_49 = arith.constant 0 : index
    %73 = vector.load %arg5[%c12, %c0_48, %c0_49] : memref<25x5x10xf32, #tpu.memory_space<vmem>>, vector<1x5x10xf32>
    %74 = vector.shape_cast %73 : vector<1x5x10xf32> to vector<5x10xf32>
    %cst_50 = arith.constant dense<0.000000e+00> : vector<8x10xf32>
    %75 = tpu.matmul %72, %74, %cst_50 {dimension_numbers = #tpu.dot_dimension_numbers<[1], [0], [0], [1], [0, 0, 1, 1], [], []>} : vector<8x5xf32>, vector<5x10xf32>, vector<8x10xf32> -> vector<8x10xf32>
    %76 = arith.addf %71, %75 : vector<8x10xf32>
    %77 = vector.extract_strided_slice %10 {offsets = [104, 0], sizes = [8, 5], strides = [1, 1]} : vector<200x5xf32> to vector<8x5xf32>
    %c13 = arith.constant 13 : index
    %c0_51 = arith.constant 0 : index
    %c0_52 = arith.constant 0 : index
    %78 = vector.load %arg5[%c13, %c0_51, %c0_52] : memref<25x5x10xf32, #tpu.memory_space<vmem>>, vector<1x5x10xf32>
    %79 = vector.shape_cast %78 : vector<1x5x10xf32> to vector<5x10xf32>
    %cst_53 = arith.constant dense<0.000000e+00> : vector<8x10xf32>
    %80 = tpu.matmul %77, %79, %cst_53 {dimension_numbers = #tpu.dot_dimension_numbers<[1], [0], [0], [1], [0, 0, 1, 1], [], []>} : vector<8x5xf32>, vector<5x10xf32>, vector<8x10xf32> -> vector<8x10xf32>
    %81 = arith.addf %76, %80 : vector<8x10xf32>
    %82 = vector.extract_strided_slice %10 {offsets = [112, 0], sizes = [8, 5], strides = [1, 1]} : vector<200x5xf32> to vector<8x5xf32>
    %c14 = arith.constant 14 : index
    %c0_54 = arith.constant 0 : index
    %c0_55 = arith.constant 0 : index
    %83 = vector.load %arg5[%c14, %c0_54, %c0_55] : memref<25x5x10xf32, #tpu.memory_space<vmem>>, vector<1x5x10xf32>
    %84 = vector.shape_cast %83 : vector<1x5x10xf32> to vector<5x10xf32>
    %cst_56 = arith.constant dense<0.000000e+00> : vector<8x10xf32>
    %85 = tpu.matmul %82, %84, %cst_56 {dimension_numbers = #tpu.dot_dimension_numbers<[1], [0], [0], [1], [0, 0, 1, 1], [], []>} : vector<8x5xf32>, vector<5x10xf32>, vector<8x10xf32> -> vector<8x10xf32>
    %86 = arith.addf %81, %85 : vector<8x10xf32>
    %87 = vector.extract_strided_slice %10 {offsets = [120, 0], sizes = [8, 5], strides = [1, 1]} : vector<200x5xf32> to vector<8x5xf32>
    %c15 = arith.constant 15 : index
    %c0_57 = arith.constant 0 : index
    %c0_58 = arith.constant 0 : index
    %88 = vector.load %arg5[%c15, %c0_57, %c0_58] : memref<25x5x10xf32, #tpu.memory_space<vmem>>, vector<1x5x10xf32>
    %89 = vector.shape_cast %88 : vector<1x5x10xf32> to vector<5x10xf32>
    %cst_59 = arith.constant dense<0.000000e+00> : vector<8x10xf32>
    %90 = tpu.matmul %87, %89, %cst_59 {dimension_numbers = #tpu.dot_dimension_numbers<[1], [0], [0], [1], [0, 0, 1, 1], [], []>} : vector<8x5xf32>, vector<5x10xf32>, vector<8x10xf32> -> vector<8x10xf32>
    %91 = arith.addf %86, %90 : vector<8x10xf32>
    %92 = vector.extract_strided_slice %10 {offsets = [128, 0], sizes = [8, 5], strides = [1, 1]} : vector<200x5xf32> to vector<8x5xf32>
    %c16 = arith.constant 16 : index
    %c0_60 = arith.constant 0 : index
    %c0_61 = arith.constant 0 : index
    %93 = vector.load %arg5[%c16, %c0_60, %c0_61] : memref<25x5x10xf32, #tpu.memory_space<vmem>>, vector<1x5x10xf32>
    %94 = vector.shape_cast %93 : vector<1x5x10xf32> to vector<5x10xf32>
    %cst_62 = arith.constant dense<0.000000e+00> : vector<8x10xf32>
    %95 = tpu.matmul %92, %94, %cst_62 {dimension_numbers = #tpu.dot_dimension_numbers<[1], [0], [0], [1], [0, 0, 1, 1], [], []>} : vector<8x5xf32>, vector<5x10xf32>, vector<8x10xf32> -> vector<8x10xf32>
    %96 = arith.addf %91, %95 : vector<8x10xf32>
    %97 = vector.extract_strided_slice %10 {offsets = [136, 0], sizes = [8, 5], strides = [1, 1]} : vector<200x5xf32> to vector<8x5xf32>
    %c17 = arith.constant 17 : index
    %c0_63 = arith.constant 0 : index
    %c0_64 = arith.constant 0 : index
    %98 = vector.load %arg5[%c17, %c0_63, %c0_64] : memref<25x5x10xf32, #tpu.memory_space<vmem>>, vector<1x5x10xf32>
    %99 = vector.shape_cast %98 : vector<1x5x10xf32> to vector<5x10xf32>
    %cst_65 = arith.constant dense<0.000000e+00> : vector<8x10xf32>
    %100 = tpu.matmul %97, %99, %cst_65 {dimension_numbers = #tpu.dot_dimension_numbers<[1], [0], [0], [1], [0, 0, 1, 1], [], []>} : vector<8x5xf32>, vector<5x10xf32>, vector<8x10xf32> -> vector<8x10xf32>
    %101 = arith.addf %96, %100 : vector<8x10xf32>
    %102 = vector.extract_strided_slice %10 {offsets = [144, 0], sizes = [8, 5], strides = [1, 1]} : vector<200x5xf32> to vector<8x5xf32>
    %c18 = arith.constant 18 : index
    %c0_66 = arith.constant 0 : index
    %c0_67 = arith.constant 0 : index
    %103 = vector.load %arg5[%c18, %c0_66, %c0_67] : memref<25x5x10xf32, #tpu.memory_space<vmem>>, vector<1x5x10xf32>
    %104 = vector.shape_cast %103 : vector<1x5x10xf32> to vector<5x10xf32>
    %cst_68 = arith.constant dense<0.000000e+00> : vector<8x10xf32>
    %105 = tpu.matmul %102, %104, %cst_68 {dimension_numbers = #tpu.dot_dimension_numbers<[1], [0], [0], [1], [0, 0, 1, 1], [], []>} : vector<8x5xf32>, vector<5x10xf32>, vector<8x10xf32> -> vector<8x10xf32>
    %106 = arith.addf %101, %105 : vector<8x10xf32>
    %107 = vector.extract_strided_slice %10 {offsets = [152, 0], sizes = [8, 5], strides = [1, 1]} : vector<200x5xf32> to vector<8x5xf32>
    %c19 = arith.constant 19 : index
    %c0_69 = arith.constant 0 : index
    %c0_70 = arith.constant 0 : index
    %108 = vector.load %arg5[%c19, %c0_69, %c0_70] : memref<25x5x10xf32, #tpu.memory_space<vmem>>, vector<1x5x10xf32>
    %109 = vector.shape_cast %108 : vector<1x5x10xf32> to vector<5x10xf32>
    %cst_71 = arith.constant dense<0.000000e+00> : vector<8x10xf32>
    %110 = tpu.matmul %107, %109, %cst_71 {dimension_numbers = #tpu.dot_dimension_numbers<[1], [0], [0], [1], [0, 0, 1, 1], [], []>} : vector<8x5xf32>, vector<5x10xf32>, vector<8x10xf32> -> vector<8x10xf32>
    %111 = arith.addf %106, %110 : vector<8x10xf32>
    %112 = vector.extract_strided_slice %10 {offsets = [160, 0], sizes = [8, 5], strides = [1, 1]} : vector<200x5xf32> to vector<8x5xf32>
    %c20 = arith.constant 20 : index
    %c0_72 = arith.constant 0 : index
    %c0_73 = arith.constant 0 : index
    %113 = vector.load %arg5[%c20, %c0_72, %c0_73] : memref<25x5x10xf32, #tpu.memory_space<vmem>>, vector<1x5x10xf32>
    %114 = vector.shape_cast %113 : vector<1x5x10xf32> to vector<5x10xf32>
    %cst_74 = arith.constant dense<0.000000e+00> : vector<8x10xf32>
    %115 = tpu.matmul %112, %114, %cst_74 {dimension_numbers = #tpu.dot_dimension_numbers<[1], [0], [0], [1], [0, 0, 1, 1], [], []>} : vector<8x5xf32>, vector<5x10xf32>, vector<8x10xf32> -> vector<8x10xf32>
    %116 = arith.addf %111, %115 : vector<8x10xf32>
    %117 = vector.extract_strided_slice %10 {offsets = [168, 0], sizes = [8, 5], strides = [1, 1]} : vector<200x5xf32> to vector<8x5xf32>
    %c21 = arith.constant 21 : index
    %c0_75 = arith.constant 0 : index
    %c0_76 = arith.constant 0 : index
    %118 = vector.load %arg5[%c21, %c0_75, %c0_76] : memref<25x5x10xf32, #tpu.memory_space<vmem>>, vector<1x5x10xf32>
    %119 = vector.shape_cast %118 : vector<1x5x10xf32> to vector<5x10xf32>
    %cst_77 = arith.constant dense<0.000000e+00> : vector<8x10xf32>
    %120 = tpu.matmul %117, %119, %cst_77 {dimension_numbers = #tpu.dot_dimension_numbers<[1], [0], [0], [1], [0, 0, 1, 1], [], []>} : vector<8x5xf32>, vector<5x10xf32>, vector<8x10xf32> -> vector<8x10xf32>
    %121 = arith.addf %116, %120 : vector<8x10xf32>
    %122 = vector.extract_strided_slice %10 {offsets = [176, 0], sizes = [8, 5], strides = [1, 1]} : vector<200x5xf32> to vector<8x5xf32>
    %c22 = arith.constant 22 : index
    %c0_78 = arith.constant 0 : index
    %c0_79 = arith.constant 0 : index
    %123 = vector.load %arg5[%c22, %c0_78, %c0_79] : memref<25x5x10xf32, #tpu.memory_space<vmem>>, vector<1x5x10xf32>
    %124 = vector.shape_cast %123 : vector<1x5x10xf32> to vector<5x10xf32>
    %cst_80 = arith.constant dense<0.000000e+00> : vector<8x10xf32>
    %125 = tpu.matmul %122, %124, %cst_80 {dimension_numbers = #tpu.dot_dimension_numbers<[1], [0], [0], [1], [0, 0, 1, 1], [], []>} : vector<8x5xf32>, vector<5x10xf32>, vector<8x10xf32> -> vector<8x10xf32>
    %126 = arith.addf %121, %125 : vector<8x10xf32>
    %127 = vector.extract_strided_slice %10 {offsets = [184, 0], sizes = [8, 5], strides = [1, 1]} : vector<200x5xf32> to vector<8x5xf32>
    %c23 = arith.constant 23 : index
    %c0_81 = arith.constant 0 : index
    %c0_82 = arith.constant 0 : index
    %128 = vector.load %arg5[%c23, %c0_81, %c0_82] : memref<25x5x10xf32, #tpu.memory_space<vmem>>, vector<1x5x10xf32>
    %129 = vector.shape_cast %128 : vector<1x5x10xf32> to vector<5x10xf32>
    %cst_83 = arith.constant dense<0.000000e+00> : vector<8x10xf32>
    %130 = tpu.matmul %127, %129, %cst_83 {dimension_numbers = #tpu.dot_dimension_numbers<[1], [0], [0], [1], [0, 0, 1, 1], [], []>} : vector<8x5xf32>, vector<5x10xf32>, vector<8x10xf32> -> vector<8x10xf32>
    %131 = arith.addf %126, %130 : vector<8x10xf32>
    %132 = vector.extract_strided_slice %10 {offsets = [192, 0], sizes = [8, 5], strides = [1, 1]} : vector<200x5xf32> to vector<8x5xf32>
    %c24 = arith.constant 24 : index
    %c0_84 = arith.constant 0 : index
    %c0_85 = arith.constant 0 : index
    %133 = vector.load %arg5[%c24, %c0_84, %c0_85] : memref<25x5x10xf32, #tpu.memory_space<vmem>>, vector<1x5x10xf32>
    %134 = vector.shape_cast %133 : vector<1x5x10xf32> to vector<5x10xf32>
    %cst_86 = arith.constant dense<0.000000e+00> : vector<8x10xf32>
    %135 = tpu.matmul %132, %134, %cst_86 {dimension_numbers = #tpu.dot_dimension_numbers<[1], [0], [0], [1], [0, 0, 1, 1], [], []>} : vector<8x5xf32>, vector<5x10xf32>, vector<8x10xf32> -> vector<8x10xf32>
    %136 = arith.addf %131, %135 : vector<8x10xf32>
    %c0_87 = arith.constant 0 : index
    %c0_88 = arith.constant 0 : index
    %137 = vector.load %arg6[%c0_87, %c0_88] : memref<1x10xf32, #tpu.memory_space<vmem>>, vector<1x10xf32>
    %138 = vector.broadcast %137 : vector<1x10xf32> to vector<8x10xf32>
    %139 = arith.addf %136, %138 : vector<8x10xf32>
    %cst_89 = arith.constant 0.000000e+00 : f32
    %140 = vector.broadcast %cst_89 : f32 to vector<8x10xf32>
    %141 = arith.maximumf %139, %140 : vector<8x10xf32>
    %c0_90 = arith.constant 0 : index
    %c0_91 = arith.constant 0 : index
    %142 = vector.load %arg7[%c0_90, %c0_91] : memref<1x8xf32, #tpu.memory_space<vmem>>, vector<1x8xf32>
    %cst_92 = arith.constant dense<0.000000e+00> : vector<1x10xf32>
    %143 = tpu.matmul %142, %141, %cst_92 {dimension_numbers = #tpu.dot_dimension_numbers<[1], [0], [0], [1], [0, 0, 1, 1], [], []>} : vector<1x8xf32>, vector<8x10xf32>, vector<1x10xf32> -> vector<1x10xf32>
    %c0_93 = arith.constant 0 : index
    %c0_94 = arith.constant 0 : index
    %144 = vector.load %arg9[%c0_93, %c0_94] : memref<1x32xf32, #tpu.memory_space<vmem>>, vector<1x32xf32>
    %c0_95 = arith.constant 0 : index
    %c0_96 = arith.constant 0 : index
    %c0_97 = arith.constant 0 : index
    %145 = vector.load %arg8[%c0_95, %c0_96, %c0_97] : memref<1x10x32xf32, #tpu.memory_space<vmem>>, vector<1x10x32xf32>
    %146 = vector.shape_cast %145 : vector<1x10x32xf32> to vector<10x32xf32>
    %cst_98 = arith.constant dense<0.000000e+00> : vector<1x32xf32>
    %147 = tpu.matmul %143, %146, %cst_98 {dimension_numbers = #tpu.dot_dimension_numbers<[1], [0], [0], [1], [0, 0, 1, 1], [], []>} : vector<1x10xf32>, vector<10x32xf32>, vector<1x32xf32> -> vector<1x32xf32>
    %148 = arith.addf %144, %147 : vector<1x32xf32>
    %cst_99 = arith.constant 0.000000e+00 : f32
    %149 = vector.broadcast %cst_99 : f32 to vector<1x32xf32>
    %150 = arith.maximumf %148, %149 : vector<1x32xf32>
    %c0_100 = arith.constant 0 : index
    %c0_101 = arith.constant 0 : index
    %151 = vector.load %arg10[%c0_100, %c0_101] : memref<32x32xf32, #tpu.memory_space<vmem>>, vector<32x32xf32>
    %cst_102 = arith.constant dense<0.000000e+00> : vector<1x32xf32>
    %152 = tpu.matmul %150, %151, %cst_102 {dimension_numbers = #tpu.dot_dimension_numbers<[1], [0], [0], [1], [0, 0, 1, 1], [], []>} : vector<1x32xf32>, vector<32x32xf32>, vector<1x32xf32> -> vector<1x32xf32>
    %c0_103 = arith.constant 0 : index
    %c0_104 = arith.constant 0 : index
    %153 = vector.load %arg11[%c0_103, %c0_104] : memref<1x32xf32, #tpu.memory_space<vmem>>, vector<1x32xf32>
    %154 = arith.addf %152, %153 : vector<1x32xf32>
    %cst_105 = arith.constant 0.000000e+00 : f32
    %155 = vector.broadcast %cst_105 : f32 to vector<1x32xf32>
    %156 = arith.maximumf %154, %155 : vector<1x32xf32>
    %c0_106 = arith.constant 0 : index
    %c0_107 = arith.constant 0 : index
    %157 = vector.load %arg12[%c0_106, %c0_107] : memref<32x8xf32, #tpu.memory_space<vmem>>, vector<32x8xf32>
    %cst_108 = arith.constant dense<0.000000e+00> : vector<1x8xf32>
    %158 = tpu.matmul %156, %157, %cst_108 {dimension_numbers = #tpu.dot_dimension_numbers<[1], [0], [0], [1], [0, 0, 1, 1], [], []>} : vector<1x32xf32>, vector<32x8xf32>, vector<1x8xf32> -> vector<1x8xf32>
    %c0_109 = arith.constant 0 : index
    %c0_110 = arith.constant 0 : index
    %159 = vector.load %arg13[%c0_109, %c0_110] : memref<1x8xf32, #tpu.memory_space<vmem>>, vector<1x8xf32>
    %160 = arith.addf %158, %159 : vector<1x8xf32>
    %cst_111 = arith.constant dense<0xFF800000> : vector<1xf32>
    %161 = vector.multi_reduction <maximumf>, %160, %cst_111 [1] : vector<1x8xf32> to vector<1xf32>
    %162 = vector.shape_cast %161 : vector<1xf32> to vector<1x1xf32>
    %163 = vector.broadcast %162 : vector<1x1xf32> to vector<1x8xf32>
    %164 = arith.subf %160, %163 : vector<1x8xf32>
    %165 = math.exp %164 : vector<1x8xf32>
    %cst_112 = arith.constant dense<0.000000e+00> : vector<1xf32>
    %166 = vector.multi_reduction <add>, %165, %cst_112 [1] : vector<1x8xf32> to vector<1xf32>
    %167 = vector.shape_cast %166 : vector<1xf32> to vector<1x1xf32>
    %168 = tpu.reciprocal %167 : vector<1x1xf32> -> vector<1x1xf32>
    %169 = vector.broadcast %168 : vector<1x1xf32> to vector<1x8xf32>
    %170 = arith.mulf %165, %169 : vector<1x8xf32>
    %c0_113 = arith.constant 0 : index
    %c0_114 = arith.constant 0 : index
    %c0_115 = arith.constant 0 : index
    %171 = vector.load %arg14[%c0_113, %c0_114, %c0_115] : memref<1x1x8xf32, #tpu.memory_space<vmem>>, vector<1x1x8xf32>
    %172 = vector.shape_cast %171 : vector<1x1x8xf32> to vector<1x8xf32>
    %173 = vector.shape_cast %170 : vector<1x8xf32> to vector<1x1x8xf32>
    tpu.vector_store %arg14[%c0_113, %c0_114, %c0_115], %173 {strides = array<i32>} : memref<1x1x8xf32, #tpu.memory_space<vmem>>, vector<1x1x8xf32>,
    return
  }
  func.func @transform_0(%arg0: i32) -> (i32, i32, i32) {
    %c0_i32 = arith.constant 0 : i32
    %c0_i32_0 = arith.constant 0 : i32
    %c0_i32_1 = arith.constant 0 : i32
    return %arg0, %c0_i32, %c0_i32_0 : i32, i32, i32
  }
  func.func @transform_1(%arg0: i32) -> (i32, i32) {
    %c0_i32 = arith.constant 0 : i32
    %c0_i32_0 = arith.constant 0 : i32
    %c0_i32_1 = arith.constant 0 : i32
    return %c0_i32, %c0_i32_0 : i32, i32
  }
  func.func @transform_2(%arg0: i32) -> (i32, i32) {
    %c0_i32 = arith.constant 0 : i32
    %c0_i32_0 = arith.constant 0 : i32
    %c0_i32_1 = arith.constant 0 : i32
    return %c0_i32, %c0_i32_0 : i32, i32
  }
  func.func @transform_3(%arg0: i32) -> (i32, i32) {
    %c0_i32 = arith.constant 0 : i32
    %c0_i32_0 = arith.constant 0 : i32
    %c0_i32_1 = arith.constant 0 : i32
    return %c0_i32, %c0_i32_0 : i32, i32
  }
  func.func @transform_4(%arg0: i32) -> (i32, i32, i32) {
    %c0_i32 = arith.constant 0 : i32
    %c0_i32_0 = arith.constant 0 : i32
    %c0_i32_1 = arith.constant 0 : i32
    %c0_i32_2 = arith.constant 0 : i32
    return %c0_i32, %c0_i32_0, %c0_i32_1 : i32, i32, i32
  }
  func.func @transform_5(%arg0: i32) -> (i32, i32) {
    %c0_i32 = arith.constant 0 : i32
    %c0_i32_0 = arith.constant 0 : i32
    %c0_i32_1 = arith.constant 0 : i32
    return %c0_i32, %c0_i32_0 : i32, i32
  }
  func.func @transform_6(%arg0: i32) -> (i32, i32) {
    %c0_i32 = arith.constant 0 : i32
    %c0_i32_0 = arith.constant 0 : i32
    %c0_i32_1 = arith.constant 0 : i32
    return %c0_i32, %c0_i32_0 : i32, i32
  }
  func.func @transform_7(%arg0: i32) -> (i32, i32, i32) {
    %c0_i32 = arith.constant 0 : i32
    %c0_i32_0 = arith.constant 0 : i32
    %c0_i32_1 = arith.constant 0 : i32
    %c0_i32_2 = arith.constant 0 : i32
    return %c0_i32, %c0_i32_0, %c0_i32_1 : i32, i32, i32
  }
  func.func @transform_8(%arg0: i32) -> (i32, i32) {
    %c0_i32 = arith.constant 0 : i32
    %c0_i32_0 = arith.constant 0 : i32
    %c0_i32_1 = arith.constant 0 : i32
    return %c0_i32, %c0_i32_0 : i32, i32
  }
  func.func @transform_9(%arg0: i32) -> (i32, i32) {
    %c0_i32 = arith.constant 0 : i32
    %c0_i32_0 = arith.constant 0 : i32
    %c0_i32_1 = arith.constant 0 : i32
    return %c0_i32, %c0_i32_0 : i32, i32
  }
  func.func @transform_10(%arg0: i32) -> (i32, i32) {
    %c0_i32 = arith.constant 0 : i32
    %c0_i32_0 = arith.constant 0 : i32
    %c0_i32_1 = arith.constant 0 : i32
    return %c0_i32, %c0_i32_0 : i32, i32
  }
  func.func @transform_11(%arg0: i32) -> (i32, i32) {
    %c0_i32 = arith.constant 0 : i32
    %c0_i32_0 = arith.constant 0 : i32
    %c0_i32_1 = arith.constant 0 : i32
    return %c0_i32, %c0_i32_0 : i32, i32
  }
  func.func @transform_12(%arg0: i32) -> (i32, i32) {
    %c0_i32 = arith.constant 0 : i32
    %c0_i32_0 = arith.constant 0 : i32
    %c0_i32_1 = arith.constant 0 : i32
    return %c0_i32, %c0_i32_0 : i32, i32
  }
  func.func @transform_13(%arg0: i32) -> (i32, i32, i32) {
    %c0_i32 = arith.constant 0 : i32
    %c0_i32_0 = arith.constant 0 : i32
    %c0_i32_1 = arith.constant 0 : i32
    return %arg0, %c0_i32, %c0_i32_0 : i32, i32, i32
  }
}

</mosaic_0001>

<llo_original>
// kernel: standard_thl_convnet.1
$region0: #{standard_thl_convnet.1}
  #allocation0 [shape = 'u32[]', space=smem, size = 0x4, offset = 0x4, fixed_abs, tag = 'smem constant byte address 0x4 - core index']
  #allocation1 [shape = 'u32[144,128]{1,0:T(1,128)}', space=vmem, size = 0x12000, scoped, tag = 'internal scratch']
  %s0 = inlined_call_operand.vmem [shape: f32[2,196,128], index: 0, kind: input, shape index: {}]
  %s1 = inlined_call_operand.vmem [shape: f32[128,5], index: 1, kind: input, shape index: {}]
  %s2 = inlined_call_operand.vmem [shape: f32[1,5], index: 2, kind: input, shape index: {}]
  %s3 = inlined_call_operand.vmem [shape: f32[200,196], index: 3, kind: input, shape index: {}]
  %s4 = inlined_call_operand.vmem [shape: f32[25,5,10], index: 4, kind: input, shape index: {}]
  %s5 = inlined_call_operand.vmem [shape: f32[1,10], index: 5, kind: input, shape index: {}]
  %s6 = inlined_call_operand.vmem [shape: f32[1,8], index: 6, kind: input, shape index: {}]
  %s7 = inlined_call_operand.vmem [shape: f32[1,10,32], index: 7, kind: input, shape index: {}]
  %s8 = inlined_call_operand.vmem [shape: f32[1,32], index: 8, kind: input, shape index: {}]
  %s9 = inlined_call_operand.vmem [shape: f32[32,32], index: 9, kind: input, shape index: {}]
  %s10 = inlined_call_operand.vmem [shape: f32[1,32], index: 10, kind: input, shape index: {}]
  %s11 = inlined_call_operand.vmem [shape: f32[32,8], index: 11, kind: input, shape index: {}]
  %s12 = inlined_call_operand.vmem [shape: f32[1,8], index: 12, kind: input, shape index: {}]
  %s13 = inlined_call_operand.hbm [shape: f32[2,1,8], index: 13, kind: output, shape index: {}]
  %s14 = sld [smem:[#allocation0]]
  $region85: #{standard_thl_convnet.1} parent=0
    _
  %s16 = ssub.s32 1, %s14
  %s17 = scalar_select 0, %s16, %s14
  $region1: #{standard_thl_convnet.1} parent=0
    #allocation2 [shape = 'u8[1024]{0}', space=vmem, size = 0x400, scoped, tag = 'output window, operand 0']
    #allocation3 [shape = 's32[2]{0}', space=sflag, size = 0x8, scoped, tag = 'scoped memory for standard_thl_convnet.1']
    %18 = vsyncpa [#allocation3], 0
    %s19 = scalar_lea.sflag [#allocation3], 1
    %20 = vsyncpa %s19, 0
    loop: start=0, step=1, limit=4
    $region2: #{standard_thl_convnet.1} parent=1 // loop_pre_header
      _
    $region3: #{standard_thl_convnet.1} parent=1 // loop_header
      %s22 = sphi 0, %s26
      %p23 = scmp.ge.s32.totalorder %s22, 4
      %s32 = sphi 0, %s34
      %s35 = sphi 0, %s32
      %s36 = sphi 0, %s35
      %s52 = sphi 0, %s36
      %s56 = sphi 0, %s56
      %s58 = sphi 0, %s56
      %s59 = sphi 0, %s58
      %s73 = sphi 0, %s59
      %s77 = sphi 0, %s77
      %s79 = sphi 0, %s77
      %s80 = sphi 0, %s79
      %s94 = sphi 0, %s80
      %s98 = sphi 0, %s98
      %s100 = sphi 0, %s98
      %s101 = sphi 0, %s100
      %s115 = sphi 0, %s101
      %s119 = sphi 0, %s119
      %s121 = sphi 0, %s119
      %s122 = sphi 0, %s121
      %s136 = sphi 0, %s122
      %s140 = sphi 0, %s140
      %s142 = sphi 0, %s140
      %s143 = sphi 0, %s142
      %s157 = sphi 0, %s143
      %s161 = sphi 0, %s161
      %s163 = sphi 0, %s161
      %s164 = sphi 0, %s163
      %s178 = sphi 0, %s164
      %s182 = sphi 0, %s182
      %s184 = sphi 0, %s182
      %s185 = sphi 0, %s184
      %s199 = sphi 0, %s185
      %s203 = sphi 0, %s203
      %s205 = sphi 0, %s203
      %s206 = sphi 0, %s205
      %s220 = sphi 0, %s206
      %s224 = sphi 0, %s224
      %s226 = sphi 0, %s224
      %s227 = sphi 0, %s226
      %s241 = sphi 0, %s227
      %s245 = sphi 0, %s245
      %s247 = sphi 0, %s245
      %s248 = sphi 0, %s247
      %s262 = sphi 0, %s248
      %s266 = sphi 0, %s266
      %s268 = sphi 0, %s266
      %s269 = sphi 0, %s268
      %s283 = sphi 0, %s269
      %s287 = sphi 0, %s287
      %s289 = sphi 0, %s287
      %s290 = sphi 0, %s289
      %s304 = sphi 0, %s290
      %s310 = sphi 0, %s312
      %s313 = sphi 0, %s310
      %s314 = sphi 0, %s313
      %s330 = sphi 0, %s314
    $region4: #{standard_thl_convnet.1} parent=1 // loop_header_branch
      %25 = sbr.rel (%p23) target = $region8
    $region5: #{standard_thl_convnet.1} parent=1 // loop_body
      %s27 = ssub.s32 %s22, 1
      %s28 = ssub.s32 %s22, 2
      %s29 = sadd.s32 %s22, 1
      %s30 = ssub.s32 %s22, %s29
      %p31 = scmp.eq.s32.totalorder %s30, 0
      %s33 = sadd.s32 %s32, 1
      %s34 = scalar_select %p31, %s32, %s33
      %p37 = pneg %p31
      %p38 = scmp.eq.s32.totalorder %s22, 1
      %p39 = por %p37, %p38
      %p40 = scmp.ne.s32.totalorder %s32, %s35
      %p41 = scmp.eq.s32.totalorder %s22, 0
      %p42 = por %p40, %p41
      %p43 = scmp.ne.s32.totalorder %s32, %s35
      %p44 = scmp.eq.s32.totalorder %s27, 1
      %p45 = por %p43, %p44
      %p46 = scmp.ne.s32.totalorder %s35, %s36
      %p47 = scmp.eq.s32.totalorder %s27, 0
      %p48 = por %p46, %p47
      %p49 = scmp.ne.s32.totalorder %s35, %s36
      %p50 = scmp.eq.s32.totalorder %s28, 1
      %p51 = por %p49, %p50
      %p53 = scmp.ne.s32.totalorder %s36, %s52
      %p54 = scmp.eq.s32.totalorder %s28, 0
      %p55 = por %p53, %p54
      %s57 = sadd.s32 %s56, 1
      %p60 = scmp.eq.s32.totalorder %s22, 1
      %p61 = scmp.ne.s32.totalorder %s56, %s58
      %p62 = scmp.eq.s32.totalorder %s22, 0
      %p63 = por %p61, %p62
      %p64 = scmp.ne.s32.totalorder %s56, %s58
      %p65 = scmp.eq.s32.totalorder %s27, 1
      %p66 = por %p64, %p65
      %p67 = scmp.ne.s32.totalorder %s58, %s59
      %p68 = scmp.eq.s32.totalorder %s27, 0
      %p69 = por %p67, %p68
      %p70 = scmp.ne.s32.totalorder %s58, %s59
      %p71 = scmp.eq.s32.totalorder %s28, 1
      %p72 = por %p70, %p71
      %p74 = scmp.ne.s32.totalorder %s59, %s73
      %p75 = scmp.eq.s32.totalorder %s28, 0
      %p76 = por %p74, %p75
      %s78 = sadd.s32 %s77, 1
      %p81 = scmp.eq.s32.totalorder %s22, 1
      %p82 = scmp.ne.s32.totalorder %s77, %s79
      %p83 = scmp.eq.s32.totalorder %s22, 0
      %p84 = por %p82, %p83
      %p85 = scmp.ne.s32.totalorder %s77, %s79
      %p86 = scmp.eq.s32.totalorder %s27, 1
      %p87 = por %p85, %p86
      %p88 = scmp.ne.s32.totalorder %s79, %s80
      %p89 = scmp.eq.s32.totalorder %s27, 0
      %p90 = por %p88, %p89
      %p91 = scmp.ne.s32.totalorder %s79, %s80
      %p92 = scmp.eq.s32.totalorder %s28, 1
      %p93 = por %p91, %p92
      %p95 = scmp.ne.s32.totalorder %s80, %s94
      %p96 = scmp.eq.s32.totalorder %s28, 0
      %p97 = por %p95, %p96
      %s99 = sadd.s32 %s98, 1
      %p102 = scmp.eq.s32.totalorder %s22, 1
      %p103 = scmp.ne.s32.totalorder %s98, %s100
      %p104 = scmp.eq.s32.totalorder %s22, 0
      %p105 = por %p103, %p104
      %p106 = scmp.ne.s32.totalorder %s98, %s100
      %p107 = scmp.eq.s32.totalorder %s27, 1
      %p108 = por %p106, %p107
      %p109 = scmp.ne.s32.totalorder %s100, %s101
      %p110 = scmp.eq.s32.totalorder %s27, 0
      %p111 = por %p109, %p110
      %p112 = scmp.ne.s32.totalorder %s100, %s101
      %p113 = scmp.eq.s32.totalorder %s28, 1
      %p114 = por %p112, %p113
      %p116 = scmp.ne.s32.totalorder %s101, %s115
      %p117 = scmp.eq.s32.totalorder %s28, 0
      %p118 = por %p116, %p117
      %s120 = sadd.s32 %s119, 1
      %p123 = scmp.eq.s32.totalorder %s22, 1
      %p124 = scmp.ne.s32.totalorder %s119, %s121
      %p125 = scmp.eq.s32.totalorder %s22, 0
      %p126 = por %p124, %p125
      %p127 = scmp.ne.s32.totalorder %s119, %s121
      %p128 = scmp.eq.s32.totalorder %s27, 1
      %p129 = por %p127, %p128
      %p130 = scmp.ne.s32.totalorder %s121, %s122
      %p131 = scmp.eq.s32.totalorder %s27, 0
      %p132 = por %p130, %p131
      %p133 = scmp.ne.s32.totalorder %s121, %s122
      %p134 = scmp.eq.s32.totalorder %s28, 1
      %p135 = por %p133, %p134
      %p137 = scmp.ne.s32.totalorder %s122, %s136
      %p138 = scmp.eq.s32.totalorder %s28, 0
      %p139 = por %p137, %p138
      %s141 = sadd.s32 %s140, 1
      %p144 = scmp.eq.s32.totalorder %s22, 1
      %p145 = scmp.ne.s32.totalorder %s140, %s142
      %p146 = scmp.eq.s32.totalorder %s22, 0
      %p147 = por %p145, %p146
      %p148 = scmp.ne.s32.totalorder %s140, %s142
      %p149 = scmp.eq.s32.totalorder %s27, 1
      %p150 = por %p148, %p149
      %p151 = scmp.ne.s32.totalorder %s142, %s143
      %p152 = scmp.eq.s32.totalorder %s27, 0
      %p153 = por %p151, %p152
      %p154 = scmp.ne.s32.totalorder %s142, %s143
      %p155 = scmp.eq.s32.totalorder %s28, 1
      %p156 = por %p154, %p155
      %p158 = scmp.ne.s32.totalorder %s143, %s157
      %p159 = scmp.eq.s32.totalorder %s28, 0
      %p160 = por %p158, %p159
      %s162 = sadd.s32 %s161, 1
      %p165 = scmp.eq.s32.totalorder %s22, 1
      %p166 = scmp.ne.s32.totalorder %s161, %s163
      %p167 = scmp.eq.s32.totalorder %s22, 0
      %p168 = por %p166, %p167
      %p169 = scmp.ne.s32.totalorder %s161, %s163
      %p170 = scmp.eq.s32.totalorder %s27, 1
      %p171 = por %p169, %p170
      %p172 = scmp.ne.s32.totalorder %s163, %s164
      %p173 = scmp.eq.s32.totalorder %s27, 0
      %p174 = por %p172, %p173
      %p175 = scmp.ne.s32.totalorder %s163, %s164
      %p176 = scmp.eq.s32.totalorder %s28, 1
      %p177 = por %p175, %p176
      %p179 = scmp.ne.s32.totalorder %s164, %s178
      %p180 = scmp.eq.s32.totalorder %s28, 0
      %p181 = por %p179, %p180
      %s183 = sadd.s32 %s182, 1
      %p186 = scmp.eq.s32.totalorder %s22, 1
      %p187 = scmp.ne.s32.totalorder %s182, %s184
      %p188 = scmp.eq.s32.totalorder %s22, 0
      %p189 = por %p187, %p188
      %p190 = scmp.ne.s32.totalorder %s182, %s184
      %p191 = scmp.eq.s32.totalorder %s27, 1
      %p192 = por %p190, %p191
      %p193 = scmp.ne.s32.totalorder %s184, %s185
      %p194 = scmp.eq.s32.totalorder %s27, 0
      %p195 = por %p193, %p194
      %p196 = scmp.ne.s32.totalorder %s184, %s185
      %p197 = scmp.eq.s32.totalorder %s28, 1
      %p198 = por %p196, %p197
      %p200 = scmp.ne.s32.totalorder %s185, %s199
      %p201 = scmp.eq.s32.totalorder %s28, 0
      %p202 = por %p200, %p201
      %s204 = sadd.s32 %s203, 1
      %p207 = scmp.eq.s32.totalorder %s22, 1
      %p208 = scmp.ne.s32.totalorder %s203, %s205
      %p209 = scmp.eq.s32.totalorder %s22, 0
      %p210 = por %p208, %p209
      %p211 = scmp.ne.s32.totalorder %s203, %s205
      %p212 = scmp.eq.s32.totalorder %s27, 1
      %p213 = por %p211, %p212
      %p214 = scmp.ne.s32.totalorder %s205, %s206
      %p215 = scmp.eq.s32.totalorder %s27, 0
      %p216 = por %p214, %p215
      %p217 = scmp.ne.s32.totalorder %s205, %s206
      %p218 = scmp.eq.s32.totalorder %s28, 1
      %p219 = por %p217, %p218
      %p221 = scmp.ne.s32.totalorder %s206, %s220
      %p222 = scmp.eq.s32.totalorder %s28, 0
      %p223 = por %p221, %p222
      %s225 = sadd.s32 %s224, 1
      %p228 = scmp.eq.s32.totalorder %s22, 1
      %p229 = scmp.ne.s32.totalorder %s224, %s226
      %p230 = scmp.eq.s32.totalorder %s22, 0
      %p231 = por %p229, %p230
      %p232 = scmp.ne.s32.totalorder %s224, %s226
      %p233 = scmp.eq.s32.totalorder %s27, 1
      %p234 = por %p232, %p233
      %p235 = scmp.ne.s32.totalorder %s226, %s227
      %p236 = scmp.eq.s32.totalorder %s27, 0
      %p237 = por %p235, %p236
      %p238 = scmp.ne.s32.totalorder %s226, %s227
      %p239 = scmp.eq.s32.totalorder %s28, 1
      %p240 = por %p238, %p239
      %p242 = scmp.ne.s32.totalorder %s227, %s241
      %p243 = scmp.eq.s32.totalorder %s28, 0
      %p244 = por %p242, %p243
      %s246 = sadd.s32 %s245, 1
      %p249 = scmp.eq.s32.totalorder %s22, 1
      %p250 = scmp.ne.s32.totalorder %s245, %s247
      %p251 = scmp.eq.s32.totalorder %s22, 0
      %p252 = por %p250, %p251
      %p253 = scmp.ne.s32.totalorder %s245, %s247
      %p254 = scmp.eq.s32.totalorder %s27, 1
      %p255 = por %p253, %p254
      %p256 = scmp.ne.s32.totalorder %s247, %s248
      %p257 = scmp.eq.s32.totalorder %s27, 0
      %p258 = por %p256, %p257
      %p259 = scmp.ne.s32.totalorder %s247, %s248
      %p260 = scmp.eq.s32.totalorder %s28, 1
      %p261 = por %p259, %p260
      %p263 = scmp.ne.s32.totalorder %s248, %s262
      %p264 = scmp.eq.s32.totalorder %s28, 0
      %p265 = por %p263, %p264
      %s267 = sadd.s32 %s266, 1
      %p270 = scmp.eq.s32.totalorder %s22, 1
      %p271 = scmp.ne.s32.totalorder %s266, %s268
      %p272 = scmp.eq.s32.totalorder %s22, 0
      %p273 = por %p271, %p272
      %p274 = scmp.ne.s32.totalorder %s266, %s268
      %p275 = scmp.eq.s32.totalorder %s27, 1
      %p276 = por %p274, %p275
      %p277 = scmp.ne.s32.totalorder %s268, %s269
      %p278 = scmp.eq.s32.totalorder %s27, 0
      %p279 = por %p277, %p278
      %p280 = scmp.ne.s32.totalorder %s268, %s269
      %p281 = scmp.eq.s32.totalorder %s28, 1
      %p282 = por %p280, %p281
      %p284 = scmp.ne.s32.totalorder %s269, %s283
      %p285 = scmp.eq.s32.totalorder %s28, 0
      %p286 = por %p284, %p285
      %s288 = sadd.s32 %s287, 1
      %p291 = scmp.eq.s32.totalorder %s22, 1
      %p292 = scmp.ne.s32.totalorder %s287, %s289
      %p293 = scmp.eq.s32.totalorder %s22, 0
      %p294 = por %p292, %p293
      %p295 = scmp.ne.s32.totalorder %s287, %s289
      %p296 = scmp.eq.s32.totalorder %s27, 1
      %p297 = por %p295, %p296
      %p298 = scmp.ne.s32.totalorder %s289, %s290
      %p299 = scmp.eq.s32.totalorder %s27, 0
      %p300 = por %p298, %p299
      %p301 = scmp.ne.s32.totalorder %s289, %s290
      %p302 = scmp.eq.s32.totalorder %s28, 1
      %p303 = por %p301, %p302
      %p305 = scmp.ne.s32.totalorder %s290, %s304
      %p306 = scmp.eq.s32.totalorder %s28, 0
      %p307 = por %p305, %p306
      %s308 = ssub.s32 %s22, %s29
      %p309 = scmp.eq.s32.totalorder %s308, 0
      %s311 = sadd.s32 %s310, 1
      %s312 = scalar_select %p309, %s310, %s311
      %p315 = pneg %p309
      %p316 = scmp.eq.s32.totalorder %s22, 1
      %p317 = por %p315, %p316
      %p318 = scmp.ne.s32.totalorder %s310, %s313
      %p319 = scmp.eq.s32.totalorder %s22, 0
      %p320 = por %p318, %p319
      %p321 = scmp.ne.s32.totalorder %s310, %s313
      %p322 = scmp.eq.s32.totalorder %s27, 1
      %p323 = por %p321, %p322
      %p324 = scmp.ne.s32.totalorder %s313, %s314
      %p325 = scmp.eq.s32.totalorder %s27, 0
      %p326 = por %p324, %p325
      %p327 = scmp.ne.s32.totalorder %s313, %s314
      %p328 = scmp.eq.s32.totalorder %s28, 1
      %p329 = por %p327, %p328
      %p331 = scmp.ne.s32.totalorder %s314, %s330
      %p332 = scmp.eq.s32.totalorder %s28, 0
      %p333 = por %p331, %p332
      %p334 = scmp.le.s32.totalorder 1, %s22
      %p335 = scmp.lt.s32.totalorder %s22, 3
      %p336 = pnand %p334, %p335
      %p337 = pneg %p336
      // Predicated region
      $region9: #{standard_thl_convnet.1} parent=5 // pred_check
        _
      $region10: #{standard_thl_convnet.1} parent=5 // pred_check_branch
        %339 = sbr.rel (%p336) target = $region12
      $region11: #{standard_thl_convnet.1} parent=5 // pred_region
        %s340 = ssub.s32 %s22, 1
        // Predicated region
        $region13: #{standard_thl_convnet.1} parent=11 // pred_check
          %p341 = pneg %p69
        $region14: #{standard_thl_convnet.1} parent=11 // pred_check_branch
          %343 = sbr.rel (%p341) target = $region16
        $region15: #{standard_thl_convnet.1} parent=11 // pred_region
          _
        $region16: #{standard_thl_convnet.1} parent=11 // pred_fallthru
          _
        // Predicated region
        $region17: #{standard_thl_convnet.1} parent=11 // pred_check
          %p344 = pneg %p90
        $region18: #{standard_thl_convnet.1} parent=11 // pred_check_branch
          %346 = sbr.rel (%p344) target = $region20
        $region19: #{standard_thl_convnet.1} parent=11 // pred_region
          _
        $region20: #{standard_thl_convnet.1} parent=11 // pred_fallthru
          _
        // Predicated region
        $region21: #{standard_thl_convnet.1} parent=11 // pred_check
          %p347 = pneg %p111
        $region22: #{standard_thl_convnet.1} parent=11 // pred_check_branch
          %349 = sbr.rel (%p347) target = $region24
        $region23: #{standard_thl_convnet.1} parent=11 // pred_region
          _
        $region24: #{standard_thl_convnet.1} parent=11 // pred_fallthru
          _
        // Predicated region
        $region25: #{standard_thl_convnet.1} parent=11 // pred_check
          %p350 = pneg %p132
        $region26: #{standard_thl_convnet.1} parent=11 // pred_check_branch
          %352 = sbr.rel (%p350) target = $region28
        $region27: #{standard_thl_convnet.1} parent=11 // pred_region
          _
        $region28: #{standard_thl_convnet.1} parent=11 // pred_fallthru
          _
        // Predicated region
        $region29: #{standard_thl_convnet.1} parent=11 // pred_check
          %p353 = pneg %p153
        $region30: #{standard_thl_convnet.1} parent=11 // pred_check_branch
          %355 = sbr.rel (%p353) target = $region32
        $region31: #{standard_thl_convnet.1} parent=11 // pred_region
          _
        $region32: #{standard_thl_convnet.1} parent=11 // pred_fallthru
          _
        // Predicated region
        $region33: #{standard_thl_convnet.1} parent=11 // pred_check
          %p356 = pneg %p174
        $region34: #{standard_thl_convnet.1} parent=11 // pred_check_branch
          %358 = sbr.rel (%p356) target = $region36
        $region35: #{standard_thl_convnet.1} parent=11 // pred_region
          _
        $region36: #{standard_thl_convnet.1} parent=11 // pred_fallthru
          _
        // Predicated region
        $region37: #{standard_thl_convnet.1} parent=11 // pred_check
          %p359 = pneg %p195
        $region38: #{standard_thl_convnet.1} parent=11 // pred_check_branch
          %361 = sbr.rel (%p359) target = $region40
        $region39: #{standard_thl_convnet.1} parent=11 // pred_region
          _
        $region40: #{standard_thl_convnet.1} parent=11 // pred_fallthru
          _
        // Predicated region
        $region41: #{standard_thl_convnet.1} parent=11 // pred_check
          %p362 = pneg %p216
        $region42: #{standard_thl_convnet.1} parent=11 // pred_check_branch
          %364 = sbr.rel (%p362) target = $region44
        $region43: #{standard_thl_convnet.1} parent=11 // pred_region
          _
        $region44: #{standard_thl_convnet.1} parent=11 // pred_fallthru
          _
        // Predicated region
        $region45: #{standard_thl_convnet.1} parent=11 // pred_check
          %p365 = pneg %p237
        $region46: #{standard_thl_convnet.1} parent=11 // pred_check_branch
          %367 = sbr.rel (%p365) target = $region48
        $region47: #{standard_thl_convnet.1} parent=11 // pred_region
          _
        $region48: #{standard_thl_convnet.1} parent=11 // pred_fallthru
          _
        // Predicated region
        $region49: #{standard_thl_convnet.1} parent=11 // pred_check
          %p368 = pneg %p258
        $region50: #{standard_thl_convnet.1} parent=11 // pred_check_branch
          %370 = sbr.rel (%p368) target = $region52
        $region51: #{standard_thl_convnet.1} parent=11 // pred_region
          _
        $region52: #{standard_thl_convnet.1} parent=11 // pred_fallthru
          _
        // Predicated region
        $region53: #{standard_thl_convnet.1} parent=11 // pred_check
          %p371 = pneg %p279
        $region54: #{standard_thl_convnet.1} parent=11 // pred_check_branch
          %373 = sbr.rel (%p371) target = $region56
        $region55: #{standard_thl_convnet.1} parent=11 // pred_region
          _
        $region56: #{standard_thl_convnet.1} parent=11 // pred_fallthru
          _
        // Predicated region
        $region57: #{standard_thl_convnet.1} parent=11 // pred_check
          %p374 = pneg %p300
        $region58: #{standard_thl_convnet.1} parent=11 // pred_check_branch
          %376 = sbr.rel (%p374) target = $region60
        $region59: #{standard_thl_convnet.1} parent=11 // pred_region
          _
        $region60: #{standard_thl_convnet.1} parent=11 // pred_fallthru
          _
      $region12: #{standard_thl_convnet.1} parent=5 // pred_fallthru
        _
      %p377 = scmp.lt.s32.totalorder %s22, 2
      // Predicated region
      $region61: #{standard_thl_convnet.1} parent=5 // pred_check
        %p378 = pneg %p377
      $region62: #{standard_thl_convnet.1} parent=5 // pred_check_branch
        %380 = sbr.rel (%p378) target = $region64
      $region63: #{standard_thl_convnet.1} parent=5 // pred_region
        // Predicated region
        $region65: #{standard_thl_convnet.1} parent=63 // pred_check
          %p381 = pneg %p42
        $region66: #{standard_thl_convnet.1} parent=63 // pred_check_branch
          %383 = sbr.rel (%p381) target = $region68
        $region67: #{standard_thl_convnet.1} parent=63 // pred_region
          %p384 = scmp.lt.s32.totalorder %s22, 1
          %s385 = scalar_select %p384, %s22, 1
          %s386 = smul.addr %s385, 25
          %s387 = smul.addr %s386, 8
          %s388 = scalar_lea.vmem %s0, %s387
        $region68: #{standard_thl_convnet.1} parent=63 // pred_fallthru
          _
      $region64: #{standard_thl_convnet.1} parent=5 // pred_fallthru
        _
      %p389 = scmp.le.s32.totalorder 1, %s22
      %p390 = scmp.lt.s32.totalorder %s22, 3
      %p391 = pnand %p389, %p390
      %p392 = pneg %p391
      // Predicated region
      $region69: #{standard_thl_convnet.1} parent=5 // pred_check
        _
      $region70: #{standard_thl_convnet.1} parent=5 // pred_check_branch
        %394 = sbr.rel (%p391) target = $region72
      $region71: #{standard_thl_convnet.1} parent=5 // pred_region
        %s395 = ssub.s32 %s22, 1
        %p396 = scmp.lt.s32.totalorder %s27, 1
        %s397 = scalar_select %p396, %s27, 1
        %s398 = smul.addr %s397, 25
        %s399 = smul.addr %s398, 8
        %s400 = scalar_lea.vmem %s0, %s399
        %p401 = pneg %p48
        %p402 = pneg %p45
        %p403 = pneg %p69
        %p404 = pneg %p66
        %p405 = pneg %p90
        %p406 = pneg %p87
        %p407 = pneg %p111
        %p408 = pneg %p108
        %p409 = pneg %p132
        %p410 = pneg %p129
        %p411 = pneg %p153
        %p412 = pneg %p150
        %p413 = pneg %p174
        %p414 = pneg %p171
        %p415 = pneg %p195
        %p416 = pneg %p192
        %p417 = pneg %p216
        %p418 = pneg %p213
        %p419 = pneg %p237
        %p420 = pneg %p234
        %p421 = pneg %p258
        %p422 = pneg %p255
        %p423 = pneg %p279
        %p424 = pneg %p276
        %p425 = pneg %p300
        %p426 = pneg %p297
        %p427 = pneg %p326
        %p428 = pneg %p323
        %s429 = sand.u32 %s313, 1
        %s430 = scalar_lea.sflag [#allocation3], %s429
        %s431 = sand.u32 %s313, 1
        %s432 = scalar_lea.vmem [#allocation2], %s431
        %p433 = scmp.lt.s32.totalorder %s27, 1
        %s434 = scalar_select %p433, %s27, 1
        %s435 = smul.addr %s434, 25
        %s436 = smul.addr %s435, 8
        %s437 = scalar_lea.vmem %s0, %s436
        %v438 = vld [vmem:[%s437] sm:$0xff]
        %v439 = vld [vmem:[%s437 + $0x8] sm:$0xff]
        %v440 = vld [vmem:[%s437 + $0x10] sm:$0xff]
        %v441 = vld [vmem:[%s437 + $0x18] sm:$0xff]
        %v442 = vld [vmem:[%s437 + $0x20] sm:$0xff]
        %v443 = vld [vmem:[%s437 + $0x28] sm:$0xff]
        %v444 = vld [vmem:[%s437 + $0x30] sm:$0xff]
        %v445 = vld [vmem:[%s437 + $0x38] sm:$0xff]
        %v446 = vld [vmem:[%s437 + $0x40] sm:$0xff]
        %v447 = vld [vmem:[%s437 + $0x48] sm:$0xff]
        %v448 = vld [vmem:[%s437 + $0x50] sm:$0xff]
        %v449 = vld [vmem:[%s437 + $0x58] sm:$0xff]
        %v450 = vld [vmem:[%s437 + $0x60] sm:$0xff]
        %v451 = vld [vmem:[%s437 + $0x68] sm:$0xff]
        %v452 = vld [vmem:[%s437 + $0x70] sm:$0xff]
        %v453 = vld [vmem:[%s437 + $0x78] sm:$0xff]
        %v454 = vld [vmem:[%s437 + $0x80] sm:$0xff]
        %v455 = vld [vmem:[%s437 + $0x88] sm:$0xff]
        %v456 = vld [vmem:[%s437 + $0x90] sm:$0xff]
        %v457 = vld [vmem:[%s437 + $0x98] sm:$0xff]
        %v458 = vld [vmem:[%s437 + $0xa0] sm:$0xff]
        %v459 = vld [vmem:[%s437 + $0xa8] sm:$0xff]
        %v460 = vld [vmem:[%s437 + $0xb0] sm:$0xff]
        %v461 = vld [vmem:[%s437 + $0xb8] sm:$0xff]
        %v462 = vld [vmem:[%s437 + $0xc0] sm:$0xf]
        %v463 = vld [vmem:[%s1] sm:$0xff]
        %v464 = vld [vmem:[%s1 + $0x8] sm:$0xff]
        %v465 = vld [vmem:[%s1 + $0x10] sm:$0xff]
        %v466 = vld [vmem:[%s1 + $0x18] sm:$0xff]
        %v467 = vld [vmem:[%s1 + $0x20] sm:$0xff]
        %v468 = vld [vmem:[%s1 + $0x28] sm:$0xff]
        %v469 = vld [vmem:[%s1 + $0x30] sm:$0xff]
        %v470 = vld [vmem:[%s1 + $0x38] sm:$0xff]
        %v471 = vld [vmem:[%s1 + $0x40] sm:$0xff]
        %v472 = vld [vmem:[%s1 + $0x48] sm:$0xff]
        %v473 = vld [vmem:[%s1 + $0x50] sm:$0xff]
        %v474 = vld [vmem:[%s1 + $0x58] sm:$0xff]
        %v475 = vld [vmem:[%s1 + $0x60] sm:$0xff]
        %v476 = vld [vmem:[%s1 + $0x68] sm:$0xff]
        %v477 = vld [vmem:[%s1 + $0x70] sm:$0xff]
        %v478 = vld [vmem:[%s1 + $0x78] sm:$0xff]
        %v479 = vld [vmem:[%s2] sm:$0x1]
        %v481 = vlaneseq
        %v482 = vshrl.u32 %v481, 7
        %v483 = vsub.s32 0, %v482
        %v484 = vrot.slane %v479, %v483
        %486 = vmatprep.subr.mxu0 0.0
        %487 = vmatpush1.msra.mxu0 %v463
        %488 = vmatprep.subr.mxu0 0.0
        %489 = vmatpush1.msra.mxu0 %v464
        %490 = vmatprep.subr.mxu0 0.0
        %491 = vmatpush1.msra.mxu0 %v465
        %492 = vmatprep.subr.mxu0 0.0
        %493 = vmatpush1.msra.mxu0 %v466
        %494 = vmatprep.subr.mxu0 0.0
        %495 = vmatpush1.msra.mxu0 %v467
        %496 = vmatprep.subr.mxu0 0.0
        %497 = vmatpush1.msra.mxu0 %v468
        %498 = vmatprep.subr.mxu0 0.0
        %499 = vmatpush1.msra.mxu0 %v469
        %500 = vmatprep.subr.mxu0 0.0
        %501 = vmatpush1.msra.mxu0 %v470
        %502 = vmatprep.subr.mxu0 0.0
        %503 = vmatpush1.msra.mxu0 %v471
        %504 = vmatprep.subr.mxu0 0.0
        %505 = vmatpush1.msra.mxu0 %v472
        %506 = vmatprep.subr.mxu0 0.0
        %507 = vmatpush1.msra.mxu0 %v473
        %508 = vmatprep.subr.mxu0 0.0
        %509 = vmatpush1.msra.mxu0 %v474
        %510 = vmatprep.subr.mxu0 0.0
        %511 = vmatpush1.msra.mxu0 %v475
        %512 = vmatprep.subr.mxu0 0.0
        %513 = vmatpush1.msra.mxu0 %v476
        %514 = vmatprep.subr.mxu0 0.0
        %515 = vmatpush1.msra.mxu0 %v477
        %516 = vmatprep.subr.mxu0 0.0
        %517 = vmatpush1.msra.mxu0 %v478
        %518 = vmatprep.subr.mxu0 0.0
        %519 = vmatpush1.msra.mxu0 0.0
        %520 = vmatprep.subr.mxu0 0.0
        %521 = vmatpush1.msra.mxu0 0.0
        %522 = vmatprep.subr.mxu0 0.0
        %523 = vmatpush1.msra.mxu0 0.0
        %524 = vmatprep.subr.mxu0 0.0
        %525 = vmatpush1.msra.mxu0 0.0
        %526 = vmatprep.subr.mxu0 0.0
        %527 = vmatpush1.msra.mxu0 0.0
        %528 = vmatprep.subr.mxu0 0.0
        %529 = vmatpush1.msra.mxu0 0.0
        %530 = vmatprep.subr.mxu0 0.0
        %531 = vmatpush1.msra.mxu0 0.0
        %532 = vmatprep.subr.mxu0 0.0
        %533 = vmatpush1.msra.mxu0 0.0
        %534 = vmatprep.subr.mxu0 0.0
        %535 = vmatpush1.msra.mxu0 0.0
        %536 = vmatprep.subr.mxu0 0.0
        %537 = vmatpush1.msra.mxu0 0.0
        %538 = vmatprep.subr.mxu0 0.0
        %539 = vmatpush1.msra.mxu0 0.0
        %540 = vmatprep.subr.mxu0 0.0
        %541 = vmatpush1.msra.mxu0 0.0
        %542 = vmatprep.subr.mxu0 0.0
        %543 = vmatpush1.msra.mxu0 0.0
        %544 = vmatprep.subr.mxu0 0.0
        %545 = vmatpush1.msra.mxu0 0.0
        %546 = vmatprep.subr.mxu0 0.0
        %547 = vmatpush1.msra.mxu0 0.0
        %548 = vmatprep.subr.mxu0 0.0
        %549 = vmatpush1.msra.mxu0 0.0
        %550 = vmatprep.mubr.f32.mxu0 0.0
        %551 = vmatmul.mubr.f32.gmra.mrb[0].mxu0 %v438
        %v552 = vpop.f32.mrb[0].mxu0
        %v553 = vadd.f32 %v484, %v552
        %v554 = vpop.f32.mrb[0].mxu0
        %555 = vmatprep.mubr.f32.mxu0 0.0
        %556 = vmatmul.mubr.f32.gmra.mrb[0].mxu0 %v439
        %v557 = vpop.f32.mrb[0].mxu0
        %v558 = vadd.f32 %v484, %v557
        %v559 = vpop.f32.mrb[0].mxu0
        %560 = vmatprep.mubr.f32.mxu0 0.0
        %561 = vmatmul.mubr.f32.gmra.mrb[0].mxu0 %v440
        %v562 = vpop.f32.mrb[0].mxu0
        %v563 = vadd.f32 %v484, %v562
        %v564 = vpop.f32.mrb[0].mxu0
        %565 = vmatprep.mubr.f32.mxu0 0.0
        %566 = vmatmul.mubr.f32.gmra.mrb[0].mxu0 %v441
        %v567 = vpop.f32.mrb[0].mxu0
        %v568 = vadd.f32 %v484, %v567
        %v569 = vpop.f32.mrb[0].mxu0
        %570 = vmatprep.mubr.f32.mxu0 0.0
        %571 = vmatmul.mubr.f32.gmra.mrb[0].mxu0 %v442
        %v572 = vpop.f32.mrb[0].mxu0
        %v573 = vadd.f32 %v484, %v572
        %v574 = vpop.f32.mrb[0].mxu0
        %575 = vmatprep.mubr.f32.mxu0 0.0
        %576 = vmatmul.mubr.f32.gmra.mrb[0].mxu0 %v443
        %v577 = vpop.f32.mrb[0].mxu0
        %v578 = vadd.f32 %v484, %v577
        %v579 = vpop.f32.mrb[0].mxu0
        %580 = vmatprep.mubr.f32.mxu0 0.0
        %581 = vmatmul.mubr.f32.gmra.mrb[0].mxu0 %v444
        %v582 = vpop.f32.mrb[0].mxu0
        %v583 = vadd.f32 %v484, %v582
        %v584 = vpop.f32.mrb[0].mxu0
        %585 = vmatprep.mubr.f32.mxu0 0.0
        %586 = vmatmul.mubr.f32.gmra.mrb[0].mxu0 %v445
        %v587 = vpop.f32.mrb[0].mxu0
        %v588 = vadd.f32 %v484, %v587
        %v589 = vpop.f32.mrb[0].mxu0
        %590 = vmatprep.mubr.f32.mxu0 0.0
        %591 = vmatmul.mubr.f32.gmra.mrb[0].mxu0 %v446
        %v592 = vpop.f32.mrb[0].mxu0
        %v593 = vadd.f32 %v484, %v592
        %v594 = vpop.f32.mrb[0].mxu0
        %595 = vmatprep.mubr.f32.mxu0 0.0
        %596 = vmatmul.mubr.f32.gmra.mrb[0].mxu0 %v447
        %v597 = vpop.f32.mrb[0].mxu0
        %v598 = vadd.f32 %v484, %v597
        %v599 = vpop.f32.mrb[0].mxu0
        %600 = vmatprep.mubr.f32.mxu0 0.0
        %601 = vmatmul.mubr.f32.gmra.mrb[0].mxu0 %v448
        %v602 = vpop.f32.mrb[0].mxu0
        %v603 = vadd.f32 %v484, %v602
        %v604 = vpop.f32.mrb[0].mxu0
        %605 = vmatprep.mubr.f32.mxu0 0.0
        %606 = vmatmul.mubr.f32.gmra.mrb[0].mxu0 %v449
        %v607 = vpop.f32.mrb[0].mxu0
        %v608 = vadd.f32 %v484, %v607
        %v609 = vpop.f32.mrb[0].mxu0
        %610 = vmatprep.mubr.f32.mxu0 0.0
        %611 = vmatmul.mubr.f32.gmra.mrb[0].mxu0 %v450
        %v612 = vpop.f32.mrb[0].mxu0
        %v613 = vadd.f32 %v484, %v612
        %v614 = vpop.f32.mrb[0].mxu0
        %615 = vmatprep.mubr.f32.mxu0 0.0
        %616 = vmatmul.mubr.f32.gmra.mrb[0].mxu0 %v451
        %v617 = vpop.f32.mrb[0].mxu0
        %v618 = vadd.f32 %v484, %v617
        %v619 = vpop.f32.mrb[0].mxu0
        %620 = vmatprep.mubr.f32.mxu0 0.0
        %621 = vmatmul.mubr.f32.gmra.mrb[0].mxu0 %v452
        %v622 = vpop.f32.mrb[0].mxu0
        %v623 = vadd.f32 %v484, %v622
        %v624 = vpop.f32.mrb[0].mxu0
        %625 = vmatprep.mubr.f32.mxu0 0.0
        %626 = vmatmul.mubr.f32.gmra.mrb[0].mxu0 %v453
        %v627 = vpop.f32.mrb[0].mxu0
        %v628 = vadd.f32 %v484, %v627
        %v629 = vpop.f32.mrb[0].mxu0
        %630 = vmatprep.mubr.f32.mxu0 0.0
        %631 = vmatmul.mubr.f32.gmra.mrb[0].mxu0 %v454
        %v632 = vpop.f32.mrb[0].mxu0
        %v633 = vadd.f32 %v484, %v632
        %v634 = vpop.f32.mrb[0].mxu0
        %635 = vmatprep.mubr.f32.mxu0 0.0
        %636 = vmatmul.mubr.f32.gmra.mrb[0].mxu0 %v455
        %v637 = vpop.f32.mrb[0].mxu0
        %v638 = vadd.f32 %v484, %v637
        %v639 = vpop.f32.mrb[0].mxu0
        %640 = vmatprep.mubr.f32.mxu0 0.0
        %641 = vmatmul.mubr.f32.gmra.mrb[0].mxu0 %v456
        %v642 = vpop.f32.mrb[0].mxu0
        %v643 = vadd.f32 %v484, %v642
        %v644 = vpop.f32.mrb[0].mxu0
        %645 = vmatprep.mubr.f32.mxu0 0.0
        %646 = vmatmul.mubr.f32.gmra.mrb[0].mxu0 %v457
        %v647 = vpop.f32.mrb[0].mxu0
        %v648 = vadd.f32 %v484, %v647
        %v649 = vpop.f32.mrb[0].mxu0
        %650 = vmatprep.mubr.f32.mxu0 0.0
        %651 = vmatmul.mubr.f32.gmra.mrb[0].mxu0 %v458
        %v652 = vpop.f32.mrb[0].mxu0
        %v653 = vadd.f32 %v484, %v652
        %v654 = vpop.f32.mrb[0].mxu0
        %655 = vmatprep.mubr.f32.mxu0 0.0
        %656 = vmatmul.mubr.f32.gmra.mrb[0].mxu0 %v459
        %v657 = vpop.f32.mrb[0].mxu0
        %v658 = vadd.f32 %v484, %v657
        %v659 = vpop.f32.mrb[0].mxu0
        %660 = vmatprep.mubr.f32.mxu0 0.0
        %661 = vmatmul.mubr.f32.gmra.mrb[0].mxu0 %v460
        %v662 = vpop.f32.mrb[0].mxu0
        %v663 = vadd.f32 %v484, %v662
        %v664 = vpop.f32.mrb[0].mxu0
        %665 = vmatprep.mubr.f32.mxu0 0.0
        %666 = vmatmul.mubr.f32.gmra.mrb[0].mxu0 %v461
        %v667 = vpop.f32.mrb[0].mxu0
        %v668 = vadd.f32 %v484, %v667
        %v669 = vpop.f32.mrb[0].mxu0
        %670 = vmatprep.mubr.f32.mxu0 0.0
        %671 = vmatmul.mubr.f32.gmra.mrb[0].mxu0 %v462
        %v672 = vpop.f32.mrb[0].mxu0
        %v673 = vadd.f32 %v484, %v672
        %v674 = vpop.f32.mrb[0].mxu0
        %675 = vdwg.mxu0
        %v676 = vmax.f32 %v553, 0.0
        %v677 = vmax.f32 %v558, 0.0
        %v678 = vmax.f32 %v563, 0.0
        %v679 = vmax.f32 %v568, 0.0
        %v680 = vmax.f32 %v573, 0.0
        %v681 = vmax.f32 %v578, 0.0
        %v682 = vmax.f32 %v583, 0.0
        %v683 = vmax.f32 %v588, 0.0
        %v684 = vmax.f32 %v593, 0.0
        %v685 = vmax.f32 %v598, 0.0
        %v686 = vmax.f32 %v603, 0.0
        %v687 = vmax.f32 %v608, 0.0
        %v688 = vmax.f32 %v613, 0.0
        %v689 = vmax.f32 %v618, 0.0
        %v690 = vmax.f32 %v623, 0.0
        %v691 = vmax.f32 %v628, 0.0
        %v692 = vmax.f32 %v633, 0.0
        %v693 = vmax.f32 %v638, 0.0
        %v694 = vmax.f32 %v643, 0.0
        %v695 = vmax.f32 %v648, 0.0
        %v696 = vmax.f32 %v653, 0.0
        %v697 = vmax.f32 %v658, 0.0
        %v698 = vmax.f32 %v663, 0.0
        %v699 = vmax.f32 %v668, 0.0
        %v700 = vmax.f32 %v673, 0.0
        %v701 = vld [vmem:[%s3] sm:$0xff]
        %v702 = vld [vmem:[%s3 + $0x8] sm:$0xff]
        %v703 = vld [vmem:[%s3 + $0x10] sm:$0xff]
        %v704 = vld [vmem:[%s3 + $0x18] sm:$0xff]
        %v705 = vld [vmem:[%s3 + $0x20] sm:$0xff]
        %v706 = vld [vmem:[%s3 + $0x28] sm:$0xff]
        %v707 = vld [vmem:[%s3 + $0x30] sm:$0xff]
        %v708 = vld [vmem:[%s3 + $0x38] sm:$0xff]
        %v709 = vld [vmem:[%s3 + $0x40] sm:$0xff]
        %v710 = vld [vmem:[%s3 + $0x48] sm:$0xff]
        %v711 = vld [vmem:[%s3 + $0x50] sm:$0xff]
        %v712 = vld [vmem:[%s3 + $0x58] sm:$0xff]
        %v713 = vld [vmem:[%s3 + $0x60] sm:$0xff]
        %v714 = vld [vmem:[%s3 + $0x68] sm:$0xff]
        %v715 = vld [vmem:[%s3 + $0x70] sm:$0xff]
        %v716 = vld [vmem:[%s3 + $0x78] sm:$0xff]
        %v717 = vld [vmem:[%s3 + $0x80] sm:$0xff]
        %v718 = vld [vmem:[%s3 + $0x88] sm:$0xff]
        %v719 = vld [vmem:[%s3 + $0x90] sm:$0xff]
        %v720 = vld [vmem:[%s3 + $0x98] sm:$0xff]
        %v721 = vld [vmem:[%s3 + $0xa0] sm:$0xff]
        %v722 = vld [vmem:[%s3 + $0xa8] sm:$0xff]
        %v723 = vld [vmem:[%s3 + $0xb0] sm:$0xff]
        %v724 = vld [vmem:[%s3 + $0xb8] sm:$0xff]
        %v725 = vld [vmem:[%s3 + $0xc0] sm:$0xff]
        %v726 = vld [vmem:[%s3 + $0xc8] sm:$0xff]
        %v727 = vld [vmem:[%s3 + $0xd0] sm:$0xff]
        %v728 = vld [vmem:[%s3 + $0xd8] sm:$0xff]
        %v729 = vld [vmem:[%s3 + $0xe0] sm:$0xff]
        %v730 = vld [vmem:[%s3 + $0xe8] sm:$0xff]
        %v731 = vld [vmem:[%s3 + $0xf0] sm:$0xff]
        %v732 = vld [vmem:[%s3 + $0xf8] sm:$0xff]
        %v733 = vld [vmem:[%s3 + $0x100] sm:$0xff]
        %v734 = vld [vmem:[%s3 + $0x108] sm:$0xff]
        %v735 = vld [vmem:[%s3 + $0x110] sm:$0xff]
        %v736 = vld [vmem:[%s3 + $0x118] sm:$0xff]
        %v737 = vld [vmem:[%s3 + $0x120] sm:$0xff]
        %v738 = vld [vmem:[%s3 + $0x128] sm:$0xff]
        %v739 = vld [vmem:[%s3 + $0x130] sm:$0xff]
        %v740 = vld [vmem:[%s3 + $0x138] sm:$0xff]
        %v741 = vld [vmem:[%s3 + $0x140] sm:$0xff]
        %v742 = vld [vmem:[%s3 + $0x148] sm:$0xff]
        %v743 = vld [vmem:[%s3 + $0x150] sm:$0xff]
        %v744 = vld [vmem:[%s3 + $0x158] sm:$0xff]
        %v745 = vld [vmem:[%s3 + $0x160] sm:$0xff]
        %v746 = vld [vmem:[%s3 + $0x168] sm:$0xff]
        %v747 = vld [vmem:[%s3 + $0x170] sm:$0xff]
        %v748 = vld [vmem:[%s3 + $0x178] sm:$0xff]
        %v749 = vld [vmem:[%s3 + $0x180] sm:$0xff]
        %v750 = vld [vmem:[%s3 + $0x188] sm:$0xff]
        %vm751 = vcmask 556032
        %v753 = vsel %vm751, %v702, 0
        %v756 = vsel %vm751, %v704, 0
        %v759 = vsel %vm751, %v706, 0
        %v762 = vsel %vm751, %v708, 0
        %v765 = vsel %vm751, %v710, 0
        %v768 = vsel %vm751, %v712, 0
        %v771 = vsel %vm751, %v714, 0
        %v774 = vsel %vm751, %v716, 0
        %v777 = vsel %vm751, %v718, 0
        %v780 = vsel %vm751, %v720, 0
        %v783 = vsel %vm751, %v722, 0
        %v786 = vsel %vm751, %v724, 0
        %v789 = vsel %vm751, %v726, 0
        %v792 = vsel %vm751, %v728, 0
        %v795 = vsel %vm751, %v730, 0
        %v798 = vsel %vm751, %v732, 0
        %v801 = vsel %vm751, %v734, 0
        %v804 = vsel %vm751, %v736, 0
        %v807 = vsel %vm751, %v738, 0
        %v810 = vsel %vm751, %v740, 0
        %v813 = vsel %vm751, %v742, 0
        %v816 = vsel %vm751, %v744, 0
        %v819 = vsel %vm751, %v746, 0
        %v822 = vsel %vm751, %v748, 0
        %v825 = vsel %vm751, %v750, 0
        %vm827 = vcmask 1043456
        %v829 = vsel %vm827, %v700, 0
        %831 = vmatprep.subr.mxu0 0.0
        %832 = vmatpush1.msra.mxu0 %v676
        %833 = vmatprep.subr.mxu0 0.0
        %834 = vmatpush1.msra.mxu0 %v677
        %835 = vmatprep.subr.mxu0 0.0
        %836 = vmatpush1.msra.mxu0 %v678
        %837 = vmatprep.subr.mxu0 0.0
        %838 = vmatpush1.msra.mxu0 %v679
        %839 = vmatprep.subr.mxu0 0.0
        %840 = vmatpush1.msra.mxu0 %v680
        %841 = vmatprep.subr.mxu0 0.0
        %842 = vmatpush1.msra.mxu0 %v681
        %843 = vmatprep.subr.mxu0 0.0
        %844 = vmatpush1.msra.mxu0 %v682
        %845 = vmatprep.subr.mxu0 0.0
        %846 = vmatpush1.msra.mxu0 %v683
        %847 = vmatprep.subr.mxu0 0.0
        %848 = vmatpush1.msra.mxu0 %v684
        %849 = vmatprep.subr.mxu0 0.0
        %850 = vmatpush1.msra.mxu0 %v685
        %851 = vmatprep.subr.mxu0 0.0
        %852 = vmatpush1.msra.mxu0 %v686
        %853 = vmatprep.subr.mxu0 0.0
        %854 = vmatpush1.msra.mxu0 %v687
        %855 = vmatprep.subr.mxu0 0.0
        %856 = vmatpush1.msra.mxu0 %v688
        %857 = vmatprep.subr.mxu0 0.0
        %858 = vmatpush1.msra.mxu0 %v689
        %859 = vmatprep.subr.mxu0 0.0
        %860 = vmatpush1.msra.mxu0 %v690
        %861 = vmatprep.subr.mxu0 0.0
        %862 = vmatpush1.msra.mxu0 %v691
        %863 = vmatprep.subr.mxu0 0.0
        %864 = vmatpush1.msra.mxu0 %v692
        %865 = vmatprep.subr.mxu0 0.0
        %866 = vmatpush1.msra.mxu0 %v693
        %867 = vmatprep.subr.mxu0 0.0
        %868 = vmatpush1.msra.mxu0 %v694
        %869 = vmatprep.subr.mxu0 0.0
        %870 = vmatpush1.msra.mxu0 %v695
        %871 = vmatprep.subr.mxu0 0.0
        %872 = vmatpush1.msra.mxu0 %v696
        %873 = vmatprep.subr.mxu0 0.0
        %874 = vmatpush1.msra.mxu0 %v697
        %875 = vmatprep.subr.mxu0 0.0
        %876 = vmatpush1.msra.mxu0 %v698
        %877 = vmatprep.subr.mxu0 0.0
        %878 = vmatpush1.msra.mxu0 %v699
        %879 = vmatprep.subr.mxu0 0.0
        %880 = vmatpush1.msra.mxu0 %v829
        %881 = vmatprep.subr.mxu0 0.0
        %882 = vmatpush1.msra.mxu0 0.0
        %883 = vmatprep.subr.mxu0 0.0
        %884 = vmatpush1.msra.mxu0 0.0
        %885 = vmatprep.subr.mxu0 0.0
        %886 = vmatpush1.msra.mxu0 0.0
        %887 = vmatprep.subr.mxu0 0.0
        %888 = vmatpush1.msra.mxu0 0.0
        %889 = vmatprep.subr.mxu0 0.0
        %890 = vmatpush1.msra.mxu0 0.0
        %891 = vmatprep.subr.mxu0 0.0
        %892 = vmatpush1.msra.mxu0 0.0
        %893 = vmatprep.subr.mxu0 0.0
        %894 = vmatpush1.msra.mxu0 0.0
        %895 = vmatprep.mubr.f32.mxu0 %v753
        %896 = vmatmul.mubr.f32.gmra.mrb[0].mxu0 %v701
        %v897 = vpop.f32.mrb[0].mxu0
        %v898 = vadd.f32 0.0, %v897
        %v899 = vpop.f32.mrb[0].mxu0
        %900 = vmatprep.mubr.f32.mxu0 %v756
        %901 = vmatmul.mubr.f32.gmra.mrb[0].mxu0 %v703
        %v902 = vpop.f32.mrb[0].mxu0
        %v903 = vadd.f32 0.0, %v902
        %v904 = vpop.f32.mrb[0].mxu0
        %905 = vmatprep.mubr.f32.mxu0 %v759
        %906 = vmatmul.mubr.f32.gmra.mrb[0].mxu0 %v705
        %v907 = vpop.f32.mrb[0].mxu0
        %v908 = vadd.f32 0.0, %v907
        %v909 = vpop.f32.mrb[0].mxu0
        %910 = vmatprep.mubr.f32.mxu0 %v762
        %911 = vmatmul.mubr.f32.gmra.mrb[0].mxu0 %v707
        %v912 = vpop.f32.mrb[0].mxu0
        %v913 = vadd.f32 0.0, %v912
        %v914 = vpop.f32.mrb[0].mxu0
        %915 = vmatprep.mubr.f32.mxu0 %v765
        %916 = vmatmul.mubr.f32.gmra.mrb[0].mxu0 %v709
        %v917 = vpop.f32.mrb[0].mxu0
        %v918 = vadd.f32 0.0, %v917
        %v919 = vpop.f32.mrb[0].mxu0
        %920 = vmatprep.mubr.f32.mxu0 %v768
        %921 = vmatmul.mubr.f32.gmra.mrb[0].mxu0 %v711
        %v922 = vpop.f32.mrb[0].mxu0
        %v923 = vadd.f32 0.0, %v922
        %v924 = vpop.f32.mrb[0].mxu0
        %925 = vmatprep.mubr.f32.mxu0 %v771
        %926 = vmatmul.mubr.f32.gmra.mrb[0].mxu0 %v713
        %v927 = vpop.f32.mrb[0].mxu0
        %v928 = vadd.f32 0.0, %v927
        %v929 = vpop.f32.mrb[0].mxu0
        %930 = vmatprep.mubr.f32.mxu0 %v774
        %931 = vmatmul.mubr.f32.gmra.mrb[0].mxu0 %v715
        %v932 = vpop.f32.mrb[0].mxu0
        %v933 = vadd.f32 0.0, %v932
        %v934 = vpop.f32.mrb[0].mxu0
        %935 = vmatprep.mubr.f32.mxu0 %v777
        %936 = vmatmul.mubr.f32.gmra.mrb[0].mxu0 %v717
        %v937 = vpop.f32.mrb[0].mxu0
        %v938 = vadd.f32 0.0, %v937
        %v939 = vpop.f32.mrb[0].mxu0
        %940 = vmatprep.mubr.f32.mxu0 %v780
        %941 = vmatmul.mubr.f32.gmra.mrb[0].mxu0 %v719
        %v942 = vpop.f32.mrb[0].mxu0
        %v943 = vadd.f32 0.0, %v942
        %v944 = vpop.f32.mrb[0].mxu0
        %945 = vmatprep.mubr.f32.mxu0 %v783
        %946 = vmatmul.mubr.f32.gmra.mrb[0].mxu0 %v721
        %v947 = vpop.f32.mrb[0].mxu0
        %v948 = vadd.f32 0.0, %v947
        %v949 = vpop.f32.mrb[0].mxu0
        %950 = vmatprep.mubr.f32.mxu0 %v786
        %951 = vmatmul.mubr.f32.gmra.mrb[0].mxu0 %v723
        %v952 = vpop.f32.mrb[0].mxu0
        %v953 = vadd.f32 0.0, %v952
        %v954 = vpop.f32.mrb[0].mxu0
        %955 = vmatprep.mubr.f32.mxu0 %v789
        %956 = vmatmul.mubr.f32.gmra.mrb[0].mxu0 %v725
        %v957 = vpop.f32.mrb[0].mxu0
        %v958 = vadd.f32 0.0, %v957
        %v959 = vpop.f32.mrb[0].mxu0
        %960 = vmatprep.mubr.f32.mxu0 %v792
        %961 = vmatmul.mubr.f32.gmra.mrb[0].mxu0 %v727
        %v962 = vpop.f32.mrb[0].mxu0
        %v963 = vadd.f32 0.0, %v962
        %v964 = vpop.f32.mrb[0].mxu0
        %965 = vmatprep.mubr.f32.mxu0 %v795
        %966 = vmatmul.mubr.f32.gmra.mrb[0].mxu0 %v729
        %v967 = vpop.f32.mrb[0].mxu0
        %v968 = vadd.f32 0.0, %v967
        %v969 = vpop.f32.mrb[0].mxu0
        %970 = vmatprep.mubr.f32.mxu0 %v798
        %971 = vmatmul.mubr.f32.gmra.mrb[0].mxu0 %v731
        %v972 = vpop.f32.mrb[0].mxu0
        %v973 = vadd.f32 0.0, %v972
        %v974 = vpop.f32.mrb[0].mxu0
        %975 = vmatprep.mubr.f32.mxu0 %v801
        %976 = vmatmul.mubr.f32.gmra.mrb[0].mxu0 %v733
        %v977 = vpop.f32.mrb[0].mxu0
        %v978 = vadd.f32 0.0, %v977
        %v979 = vpop.f32.mrb[0].mxu0
        %980 = vmatprep.mubr.f32.mxu0 %v804
        %981 = vmatmul.mubr.f32.gmra.mrb[0].mxu0 %v735
        %v982 = vpop.f32.mrb[0].mxu0
        %v983 = vadd.f32 0.0, %v982
        %v984 = vpop.f32.mrb[0].mxu0
        %985 = vmatprep.mubr.f32.mxu0 %v807
        %986 = vmatmul.mubr.f32.gmra.mrb[0].mxu0 %v737
        %v987 = vpop.f32.mrb[0].mxu0
        %v988 = vadd.f32 0.0, %v987
        %v989 = vpop.f32.mrb[0].mxu0
        %990 = vmatprep.mubr.f32.mxu0 %v810
        %991 = vmatmul.mubr.f32.gmra.mrb[0].mxu0 %v739
        %v992 = vpop.f32.mrb[0].mxu0
        %v993 = vadd.f32 0.0, %v992
        %v994 = vpop.f32.mrb[0].mxu0
        %995 = vmatprep.mubr.f32.mxu0 %v813
        %996 = vmatmul.mubr.f32.gmra.mrb[0].mxu0 %v741
        %v997 = vpop.f32.mrb[0].mxu0
        %v998 = vadd.f32 0.0, %v997
        %v999 = vpop.f32.mrb[0].mxu0
        %1000 = vmatprep.mubr.f32.mxu0 %v816
        %1001 = vmatmul.mubr.f32.gmra.mrb[0].mxu0 %v743
        %v1002 = vpop.f32.mrb[0].mxu0
        %v1003 = vadd.f32 0.0, %v1002
        %v1004 = vpop.f32.mrb[0].mxu0
        %1005 = vmatprep.mubr.f32.mxu0 %v819
        %1006 = vmatmul.mubr.f32.gmra.mrb[0].mxu0 %v745
        %v1007 = vpop.f32.mrb[0].mxu0
        %v1008 = vadd.f32 0.0, %v1007
        %v1009 = vpop.f32.mrb[0].mxu0
        %1010 = vmatprep.mubr.f32.mxu0 %v822
        %1011 = vmatmul.mubr.f32.gmra.mrb[0].mxu0 %v747
        %v1012 = vpop.f32.mrb[0].mxu0
        %v1013 = vadd.f32 0.0, %v1012
        %v1014 = vpop.f32.mrb[0].mxu0
        %1015 = vmatprep.mubr.f32.mxu0 %v825
        %1016 = vmatmul.mubr.f32.gmra.mrb[0].mxu0 %v749
        %v1017 = vpop.f32.mrb[0].mxu0
        %v1018 = vadd.f32 0.0, %v1017
        %v1019 = vpop.f32.mrb[0].mxu0
        %1020 = vdwg.mxu0
        %v1021 = vld [vmem:[%s4] sm:$0x1f]
        %s1022 = scalar_lea.vmem %s4, 8
        %v1023 = vld [vmem:[%s1022] sm:$0x1f]
        %vm1024 = vcmask 39936
        %v1026 = vsel %vm1024, %v903, 0
        %vm1028 = vcmask 1044480
        %v1030 = vsel %vm1028, %v1023, 0
        %1032 = vmatprep.subr.mxu0 0.0
        %1033 = vmatpush1.msra.mxu0 %v1030
        %1034 = vmatprep.subr.mxu0 0.0
        %1035 = vmatpush1.msra.mxu0 0.0
        %1036 = vmatprep.subr.mxu0 0.0
        %1037 = vmatpush1.msra.mxu0 0.0
        %1038 = vmatprep.subr.mxu0 0.0
        %1039 = vmatpush1.msra.mxu0 0.0
        %1040 = vmatprep.subr.mxu0 0.0
        %1041 = vmatpush1.msra.mxu0 0.0
        %1042 = vmatprep.subr.mxu0 0.0
        %1043 = vmatpush1.msra.mxu0 0.0
        %1044 = vmatprep.subr.mxu0 0.0
        %1045 = vmatpush1.msra.mxu0 0.0
        %1046 = vmatprep.subr.mxu0 0.0
        %1047 = vmatpush1.msra.mxu0 0.0
        %1048 = vmatprep.subr.mxu0 0.0
        %1049 = vmatpush1.msra.mxu0 0.0
        %1050 = vmatprep.subr.mxu0 0.0
        %1051 = vmatpush1.msra.mxu0 0.0
        %1052 = vmatprep.subr.mxu0 0.0
        %1053 = vmatpush1.msra.mxu0 0.0
        %1054 = vmatprep.subr.mxu0 0.0
        %1055 = vmatpush1.msra.mxu0 0.0
        %1056 = vmatprep.subr.mxu0 0.0
        %1057 = vmatpush1.msra.mxu0 0.0
        %1058 = vmatprep.subr.mxu0 0.0
        %1059 = vmatpush1.msra.mxu0 0.0
        %1060 = vmatprep.subr.mxu0 0.0
        %1061 = vmatpush1.msra.mxu0 0.0
        %1062 = vmatprep.subr.mxu0 0.0
        %1063 = vmatpush1.msra.mxu0 0.0
        %1064 = vmatprep.subr.mxu0 0.0
        %1065 = vmatpush1.msra.mxu0 0.0
        %1066 = vmatprep.subr.mxu0 0.0
        %1067 = vmatpush1.msra.mxu0 0.0
        %1068 = vmatprep.subr.mxu0 0.0
        %1069 = vmatpush1.msra.mxu0 0.0
        %1070 = vmatprep.subr.mxu0 0.0
        %1071 = vmatpush1.msra.mxu0 0.0
        %1072 = vmatprep.subr.mxu0 0.0
        %1073 = vmatpush1.msra.mxu0 0.0
        %1074 = vmatprep.subr.mxu0 0.0
        %1075 = vmatpush1.msra.mxu0 0.0
        %1076 = vmatprep.subr.mxu0 0.0
        %1077 = vmatpush1.msra.mxu0 0.0
        %1078 = vmatprep.subr.mxu0 0.0
        %1079 = vmatpush1.msra.mxu0 0.0
        %1080 = vmatprep.subr.mxu0 0.0
        %1081 = vmatpush1.msra.mxu0 0.0
        %1082 = vmatprep.subr.mxu0 0.0
        %1083 = vmatpush1.msra.mxu0 0.0
        %1084 = vmatprep.subr.mxu0 0.0
        %1085 = vmatpush1.msra.mxu0 0.0
        %1086 = vmatprep.subr.mxu0 0.0
        %1087 = vmatpush1.msra.mxu0 0.0
        %1088 = vmatprep.subr.mxu0 0.0
        %1089 = vmatpush1.msra.mxu0 0.0
        %1090 = vmatprep.subr.mxu0 0.0
        %1091 = vmatpush1.msra.mxu0 0.0
        %1092 = vmatprep.subr.mxu0 0.0
        %1093 = vmatpush1.msra.mxu0 0.0
        %1094 = vmatprep.subr.mxu0 0.0
        %1095 = vmatpush1.msra.mxu0 0.0
        %1096 = vmatprep.mubr.f32.mxu0 0.0
        %1097 = vmatmul.mubr.f32.gmra.mrb[0].mxu0 %v1026
        %v1098 = vpop.f32.mrb[0].mxu0
        %v1099 = vadd.f32 0.0, %v1098
        %v1100 = vpop.f32.mrb[0].mxu0
        %1101 = vdwg.mxu0
        %v1103 = vsel %vm1024, %v898, 0
        %v1106 = vsel %vm1028, %v1021, 0
        %1108 = vmatprep.subr.mxu0 0.0
        %1109 = vmatpush1.msra.mxu0 %v1106
        %1110 = vmatprep.subr.mxu0 0.0
        %1111 = vmatpush1.msra.mxu0 0.0
        %1112 = vmatprep.subr.mxu0 0.0
        %1113 = vmatpush1.msra.mxu0 0.0
        %1114 = vmatprep.subr.mxu0 0.0
        %1115 = vmatpush1.msra.mxu0 0.0
        %1116 = vmatprep.subr.mxu0 0.0
        %1117 = vmatpush1.msra.mxu0 0.0
        %1118 = vmatprep.subr.mxu0 0.0
        %1119 = vmatpush1.msra.mxu0 0.0
        %1120 = vmatprep.subr.mxu0 0.0
        %1121 = vmatpush1.msra.mxu0 0.0
        %1122 = vmatprep.subr.mxu0 0.0
        %1123 = vmatpush1.msra.mxu0 0.0
        %1124 = vmatprep.subr.mxu0 0.0
        %1125 = vmatpush1.msra.mxu0 0.0
        %1126 = vmatprep.subr.mxu0 0.0
        %1127 = vmatpush1.msra.mxu0 0.0
        %1128 = vmatprep.subr.mxu0 0.0
        %1129 = vmatpush1.msra.mxu0 0.0
        %1130 = vmatprep.subr.mxu0 0.0
        %1131 = vmatpush1.msra.mxu0 0.0
        %1132 = vmatprep.subr.mxu0 0.0
        %1133 = vmatpush1.msra.mxu0 0.0
        %1134 = vmatprep.subr.mxu0 0.0
        %1135 = vmatpush1.msra.mxu0 0.0
        %1136 = vmatprep.subr.mxu0 0.0
        %1137 = vmatpush1.msra.mxu0 0.0
        %1138 = vmatprep.subr.mxu0 0.0
        %1139 = vmatpush1.msra.mxu0 0.0
        %1140 = vmatprep.subr.mxu0 0.0
        %1141 = vmatpush1.msra.mxu0 0.0
        %1142 = vmatprep.subr.mxu0 0.0
        %1143 = vmatpush1.msra.mxu0 0.0
        %1144 = vmatprep.subr.mxu0 0.0
        %1145 = vmatpush1.msra.mxu0 0.0
        %1146 = vmatprep.subr.mxu0 0.0
        %1147 = vmatpush1.msra.mxu0 0.0
        %1148 = vmatprep.subr.mxu0 0.0
        %1149 = vmatpush1.msra.mxu0 0.0
        %1150 = vmatprep.subr.mxu0 0.0
        %1151 = vmatpush1.msra.mxu0 0.0
        %1152 = vmatprep.subr.mxu0 0.0
        %1153 = vmatpush1.msra.mxu0 0.0
        %1154 = vmatprep.subr.mxu0 0.0
        %1155 = vmatpush1.msra.mxu0 0.0
        %1156 = vmatprep.subr.mxu0 0.0
        %1157 = vmatpush1.msra.mxu0 0.0
        %1158 = vmatprep.subr.mxu0 0.0
        %1159 = vmatpush1.msra.mxu0 0.0
        %1160 = vmatprep.subr.mxu0 0.0
        %1161 = vmatpush1.msra.mxu0 0.0
        %1162 = vmatprep.subr.mxu0 0.0
        %1163 = vmatpush1.msra.mxu0 0.0
        %1164 = vmatprep.subr.mxu0 0.0
        %1165 = vmatpush1.msra.mxu0 0.0
        %1166 = vmatprep.subr.mxu0 0.0
        %1167 = vmatpush1.msra.mxu0 0.0
        %1168 = vmatprep.subr.mxu0 0.0
        %1169 = vmatpush1.msra.mxu0 0.0
        %1170 = vmatprep.subr.mxu0 0.0
        %1171 = vmatpush1.msra.mxu0 0.0
        %1172 = vmatprep.mubr.f32.mxu0 0.0
        %1173 = vmatmul.mubr.f32.gmra.mrb[0].mxu0 %v1103
        %v1174 = vpop.f32.mrb[0].mxu0
        %v1175 = vadd.f32 %v1099, %v1174
        %v1176 = vpop.f32.mrb[0].mxu0
        %1177 = vdwg.mxu0
        %s1178 = scalar_lea.vmem %s4, 16
        %v1179 = vld [vmem:[%s1178] sm:$0x1f]
        %v1181 = vsel %vm1024, %v908, 0
        %v1184 = vsel %vm1028, %v1179, 0
        %1186 = vmatprep.subr.mxu0 0.0
        %1187 = vmatpush1.msra.mxu0 %v1184
        %1188 = vmatprep.subr.mxu0 0.0
        %1189 = vmatpush1.msra.mxu0 0.0
        %1190 = vmatprep.subr.mxu0 0.0
        %1191 = vmatpush1.msra.mxu0 0.0
        %1192 = vmatprep.subr.mxu0 0.0
        %1193 = vmatpush1.msra.mxu0 0.0
        %1194 = vmatprep.subr.mxu0 0.0
        %1195 = vmatpush1.msra.mxu0 0.0
        %1196 = vmatprep.subr.mxu0 0.0
        %1197 = vmatpush1.msra.mxu0 0.0
        %1198 = vmatprep.subr.mxu0 0.0
        %1199 = vmatpush1.msra.mxu0 0.0
        %1200 = vmatprep.subr.mxu0 0.0
        %1201 = vmatpush1.msra.mxu0 0.0
        %1202 = vmatprep.subr.mxu0 0.0
        %1203 = vmatpush1.msra.mxu0 0.0
        %1204 = vmatprep.subr.mxu0 0.0
        %1205 = vmatpush1.msra.mxu0 0.0
        %1206 = vmatprep.subr.mxu0 0.0
        %1207 = vmatpush1.msra.mxu0 0.0
        %1208 = vmatprep.subr.mxu0 0.0
        %1209 = vmatpush1.msra.mxu0 0.0
        %1210 = vmatprep.subr.mxu0 0.0
        %1211 = vmatpush1.msra.mxu0 0.0
        %1212 = vmatprep.subr.mxu0 0.0
        %1213 = vmatpush1.msra.mxu0 0.0
        %1214 = vmatprep.subr.mxu0 0.0
        %1215 = vmatpush1.msra.mxu0 0.0
        %1216 = vmatprep.subr.mxu0 0.0
        %1217 = vmatpush1.msra.mxu0 0.0
        %1218 = vmatprep.subr.mxu0 0.0
        %1219 = vmatpush1.msra.mxu0 0.0
        %1220 = vmatprep.subr.mxu0 0.0
        %1221 = vmatpush1.msra.mxu0 0.0
        %1222 = vmatprep.subr.mxu0 0.0
        %1223 = vmatpush1.msra.mxu0 0.0
        %1224 = vmatprep.subr.mxu0 0.0
        %1225 = vmatpush1.msra.mxu0 0.0
        %1226 = vmatprep.subr.mxu0 0.0
        %1227 = vmatpush1.msra.mxu0 0.0
        %1228 = vmatprep.subr.mxu0 0.0
        %1229 = vmatpush1.msra.mxu0 0.0
        %1230 = vmatprep.subr.mxu0 0.0
        %1231 = vmatpush1.msra.mxu0 0.0
        %1232 = vmatprep.subr.mxu0 0.0
        %1233 = vmatpush1.msra.mxu0 0.0
        %1234 = vmatprep.subr.mxu0 0.0
        %1235 = vmatpush1.msra.mxu0 0.0
        %1236 = vmatprep.subr.mxu0 0.0
        %1237 = vmatpush1.msra.mxu0 0.0
        %1238 = vmatprep.subr.mxu0 0.0
        %1239 = vmatpush1.msra.mxu0 0.0
        %1240 = vmatprep.subr.mxu0 0.0
        %1241 = vmatpush1.msra.mxu0 0.0
        %1242 = vmatprep.subr.mxu0 0.0
        %1243 = vmatpush1.msra.mxu0 0.0
        %1244 = vmatprep.subr.mxu0 0.0
        %1245 = vmatpush1.msra.mxu0 0.0
        %1246 = vmatprep.subr.mxu0 0.0
        %1247 = vmatpush1.msra.mxu0 0.0
        %1248 = vmatprep.subr.mxu0 0.0
        %1249 = vmatpush1.msra.mxu0 0.0
        %1250 = vmatprep.mubr.f32.mxu0 0.0
        %1251 = vmatmul.mubr.f32.gmra.mrb[0].mxu0 %v1181
        %v1252 = vpop.f32.mrb[0].mxu0
        %v1253 = vadd.f32 0.0, %v1252
        %v1254 = vpop.f32.mrb[0].mxu0
        %1255 = vdwg.mxu0
        %v1256 = vadd.f32 %v1175, %v1253
        %s1257 = scalar_lea.vmem %s4, 24
        %v1258 = vld [vmem:[%s1257] sm:$0x1f]
        %v1260 = vsel %vm1024, %v913, 0
        %v1263 = vsel %vm1028, %v1258, 0
        %1265 = vmatprep.subr.mxu0 0.0
        %1266 = vmatpush1.msra.mxu0 %v1263
        %1267 = vmatprep.subr.mxu0 0.0
        %1268 = vmatpush1.msra.mxu0 0.0
        %1269 = vmatprep.subr.mxu0 0.0
        %1270 = vmatpush1.msra.mxu0 0.0
        %1271 = vmatprep.subr.mxu0 0.0
        %1272 = vmatpush1.msra.mxu0 0.0
        %1273 = vmatprep.subr.mxu0 0.0
        %1274 = vmatpush1.msra.mxu0 0.0
        %1275 = vmatprep.subr.mxu0 0.0
        %1276 = vmatpush1.msra.mxu0 0.0
        %1277 = vmatprep.subr.mxu0 0.0
        %1278 = vmatpush1.msra.mxu0 0.0
        %1279 = vmatprep.subr.mxu0 0.0
        %1280 = vmatpush1.msra.mxu0 0.0
        %1281 = vmatprep.subr.mxu0 0.0
        %1282 = vmatpush1.msra.mxu0 0.0
        %1283 = vmatprep.subr.mxu0 0.0
        %1284 = vmatpush1.msra.mxu0 0.0
        %1285 = vmatprep.subr.mxu0 0.0
        %1286 = vmatpush1.msra.mxu0 0.0
        %1287 = vmatprep.subr.mxu0 0.0
        %1288 = vmatpush1.msra.mxu0 0.0
        %1289 = vmatprep.subr.mxu0 0.0
        %1290 = vmatpush1.msra.mxu0 0.0
        %1291 = vmatprep.subr.mxu0 0.0
        %1292 = vmatpush1.msra.mxu0 0.0
        %1293 = vmatprep.subr.mxu0 0.0
        %1294 = vmatpush1.msra.mxu0 0.0
        %1295 = vmatprep.subr.mxu0 0.0
        %1296 = vmatpush1.msra.mxu0 0.0
        %1297 = vmatprep.subr.mxu0 0.0
        %1298 = vmatpush1.msra.mxu0 0.0
        %1299 = vmatprep.subr.mxu0 0.0
        %1300 = vmatpush1.msra.mxu0 0.0
        %1301 = vmatprep.subr.mxu0 0.0
        %1302 = vmatpush1.msra.mxu0 0.0
        %1303 = vmatprep.subr.mxu0 0.0
        %1304 = vmatpush1.msra.mxu0 0.0
        %1305 = vmatprep.subr.mxu0 0.0
        %1306 = vmatpush1.msra.mxu0 0.0
        %1307 = vmatprep.subr.mxu0 0.0
        %1308 = vmatpush1.msra.mxu0 0.0
        %1309 = vmatprep.subr.mxu0 0.0
        %1310 = vmatpush1.msra.mxu0 0.0
        %1311 = vmatprep.subr.mxu0 0.0
        %1312 = vmatpush1.msra.mxu0 0.0
        %1313 = vmatprep.subr.mxu0 0.0
        %1314 = vmatpush1.msra.mxu0 0.0
        %1315 = vmatprep.subr.mxu0 0.0
        %1316 = vmatpush1.msra.mxu0 0.0
        %1317 = vmatprep.subr.mxu0 0.0
        %1318 = vmatpush1.msra.mxu0 0.0
        %1319 = vmatprep.subr.mxu0 0.0
        %1320 = vmatpush1.msra.mxu0 0.0
        %1321 = vmatprep.subr.mxu0 0.0
        %1322 = vmatpush1.msra.mxu0 0.0
        %1323 = vmatprep.subr.mxu0 0.0
        %1324 = vmatpush1.msra.mxu0 0.0
        %1325 = vmatprep.subr.mxu0 0.0
        %1326 = vmatpush1.msra.mxu0 0.0
        %1327 = vmatprep.subr.mxu0 0.0
        %1328 = vmatpush1.msra.mxu0 0.0
        %1329 = vmatprep.mubr.f32.mxu0 0.0
        %1330 = vmatmul.mubr.f32.gmra.mrb[0].mxu0 %v1260
        %v1331 = vpop.f32.mrb[0].mxu0
        %v1332 = vadd.f32 0.0, %v1331
        %v1333 = vpop.f32.mrb[0].mxu0
        %1334 = vdwg.mxu0
        %v1335 = vadd.f32 %v1256, %v1332
        %s1336 = scalar_lea.vmem %s4, 32
        %v1337 = vld [vmem:[%s1336] sm:$0x1f]
        %v1339 = vsel %vm1024, %v918, 0
        %v1342 = vsel %vm1028, %v1337, 0
        %1344 = vmatprep.subr.mxu0 0.0
        %1345 = vmatpush1.msra.mxu0 %v1342
        %1346 = vmatprep.subr.mxu0 0.0
        %1347 = vmatpush1.msra.mxu0 0.0
        %1348 = vmatprep.subr.mxu0 0.0
        %1349 = vmatpush1.msra.mxu0 0.0
        %1350 = vmatprep.subr.mxu0 0.0
        %1351 = vmatpush1.msra.mxu0 0.0
        %1352 = vmatprep.subr.mxu0 0.0
        %1353 = vmatpush1.msra.mxu0 0.0
        %1354 = vmatprep.subr.mxu0 0.0
        %1355 = vmatpush1.msra.mxu0 0.0
        %1356 = vmatprep.subr.mxu0 0.0
        %1357 = vmatpush1.msra.mxu0 0.0
        %1358 = vmatprep.subr.mxu0 0.0
        %1359 = vmatpush1.msra.mxu0 0.0
        %1360 = vmatprep.subr.mxu0 0.0
        %1361 = vmatpush1.msra.mxu0 0.0
        %1362 = vmatprep.subr.mxu0 0.0
        %1363 = vmatpush1.msra.mxu0 0.0
        %1364 = vmatprep.subr.mxu0 0.0
        %1365 = vmatpush1.msra.mxu0 0.0
        %1366 = vmatprep.subr.mxu0 0.0
        %1367 = vmatpush1.msra.mxu0 0.0
        %1368 = vmatprep.subr.mxu0 0.0
        %1369 = vmatpush1.msra.mxu0 0.0
        %1370 = vmatprep.subr.mxu0 0.0
        %1371 = vmatpush1.msra.mxu0 0.0
        %1372 = vmatprep.subr.mxu0 0.0
        %1373 = vmatpush1.msra.mxu0 0.0
        %1374 = vmatprep.subr.mxu0 0.0
        %1375 = vmatpush1.msra.mxu0 0.0
        %1376 = vmatprep.subr.mxu0 0.0
        %1377 = vmatpush1.msra.mxu0 0.0
        %1378 = vmatprep.subr.mxu0 0.0
        %1379 = vmatpush1.msra.mxu0 0.0
        %1380 = vmatprep.subr.mxu0 0.0
        %1381 = vmatpush1.msra.mxu0 0.0
        %1382 = vmatprep.subr.mxu0 0.0
        %1383 = vmatpush1.msra.mxu0 0.0
        %1384 = vmatprep.subr.mxu0 0.0
        %1385 = vmatpush1.msra.mxu0 0.0
        %1386 = vmatprep.subr.mxu0 0.0
        %1387 = vmatpush1.msra.mxu0 0.0
        %1388 = vmatprep.subr.mxu0 0.0
        %1389 = vmatpush1.msra.mxu0 0.0
        %1390 = vmatprep.subr.mxu0 0.0
        %1391 = vmatpush1.msra.mxu0 0.0
        %1392 = vmatprep.subr.mxu0 0.0
        %1393 = vmatpush1.msra.mxu0 0.0
        %1394 = vmatprep.subr.mxu0 0.0
        %1395 = vmatpush1.msra.mxu0 0.0
        %1396 = vmatprep.subr.mxu0 0.0
        %1397 = vmatpush1.msra.mxu0 0.0
        %1398 = vmatprep.subr.mxu0 0.0
        %1399 = vmatpush1.msra.mxu0 0.0
        %1400 = vmatprep.subr.mxu0 0.0
        %1401 = vmatpush1.msra.mxu0 0.0
        %1402 = vmatprep.subr.mxu0 0.0
        %1403 = vmatpush1.msra.mxu0 0.0
        %1404 = vmatprep.subr.mxu0 0.0
        %1405 = vmatpush1.msra.mxu0 0.0
        %1406 = vmatprep.subr.mxu0 0.0
        %1407 = vmatpush1.msra.mxu0 0.0
        %1408 = vmatprep.mubr.f32.mxu0 0.0
        %1409 = vmatmul.mubr.f32.gmra.mrb[0].mxu0 %v1339
        %v1410 = vpop.f32.mrb[0].mxu0
        %v1411 = vadd.f32 0.0, %v1410
        %v1412 = vpop.f32.mrb[0].mxu0
        %1413 = vdwg.mxu0
        %v1414 = vadd.f32 %v1335, %v1411
        %s1415 = scalar_lea.vmem %s4, 40
        %v1416 = vld [vmem:[%s1415] sm:$0x1f]
        %v1418 = vsel %vm1024, %v923, 0
        %v1421 = vsel %vm1028, %v1416, 0
        %1423 = vmatprep.subr.mxu0 0.0
        %1424 = vmatpush1.msra.mxu0 %v1421
        %1425 = vmatprep.subr.mxu0 0.0
        %1426 = vmatpush1.msra.mxu0 0.0
        %1427 = vmatprep.subr.mxu0 0.0
        %1428 = vmatpush1.msra.mxu0 0.0
        %1429 = vmatprep.subr.mxu0 0.0
        %1430 = vmatpush1.msra.mxu0 0.0
        %1431 = vmatprep.subr.mxu0 0.0
        %1432 = vmatpush1.msra.mxu0 0.0
        %1433 = vmatprep.subr.mxu0 0.0
        %1434 = vmatpush1.msra.mxu0 0.0
        %1435 = vmatprep.subr.mxu0 0.0
        %1436 = vmatpush1.msra.mxu0 0.0
        %1437 = vmatprep.subr.mxu0 0.0
        %1438 = vmatpush1.msra.mxu0 0.0
        %1439 = vmatprep.subr.mxu0 0.0
        %1440 = vmatpush1.msra.mxu0 0.0
        %1441 = vmatprep.subr.mxu0 0.0
        %1442 = vmatpush1.msra.mxu0 0.0
        %1443 = vmatprep.subr.mxu0 0.0
        %1444 = vmatpush1.msra.mxu0 0.0
        %1445 = vmatprep.subr.mxu0 0.0
        %1446 = vmatpush1.msra.mxu0 0.0
        %1447 = vmatprep.subr.mxu0 0.0
        %1448 = vmatpush1.msra.mxu0 0.0
        %1449 = vmatprep.subr.mxu0 0.0
        %1450 = vmatpush1.msra.mxu0 0.0
        %1451 = vmatprep.subr.mxu0 0.0
        %1452 = vmatpush1.msra.mxu0 0.0
        %1453 = vmatprep.subr.mxu0 0.0
        %1454 = vmatpush1.msra.mxu0 0.0
        %1455 = vmatprep.subr.mxu0 0.0
        %1456 = vmatpush1.msra.mxu0 0.0
        %1457 = vmatprep.subr.mxu0 0.0
        %1458 = vmatpush1.msra.mxu0 0.0
        %1459 = vmatprep.subr.mxu0 0.0
        %1460 = vmatpush1.msra.mxu0 0.0
        %1461 = vmatprep.subr.mxu0 0.0
        %1462 = vmatpush1.msra.mxu0 0.0
        %1463 = vmatprep.subr.mxu0 0.0
        %1464 = vmatpush1.msra.mxu0 0.0
        %1465 = vmatprep.subr.mxu0 0.0
        %1466 = vmatpush1.msra.mxu0 0.0
        %1467 = vmatprep.subr.mxu0 0.0
        %1468 = vmatpush1.msra.mxu0 0.0
        %1469 = vmatprep.subr.mxu0 0.0
        %1470 = vmatpush1.msra.mxu0 0.0
        %1471 = vmatprep.subr.mxu0 0.0
        %1472 = vmatpush1.msra.mxu0 0.0
        %1473 = vmatprep.subr.mxu0 0.0
        %1474 = vmatpush1.msra.mxu0 0.0
        %1475 = vmatprep.subr.mxu0 0.0
        %1476 = vmatpush1.msra.mxu0 0.0
        %1477 = vmatprep.subr.mxu0 0.0
        %1478 = vmatpush1.msra.mxu0 0.0
        %1479 = vmatprep.subr.mxu0 0.0
        %1480 = vmatpush1.msra.mxu0 0.0
        %1481 = vmatprep.subr.mxu0 0.0
        %1482 = vmatpush1.msra.mxu0 0.0
        %1483 = vmatprep.subr.mxu0 0.0
        %1484 = vmatpush1.msra.mxu0 0.0
        %1485 = vmatprep.subr.mxu0 0.0
        %1486 = vmatpush1.msra.mxu0 0.0
        %1487 = vmatprep.mubr.f32.mxu0 0.0
        %1488 = vmatmul.mubr.f32.gmra.mrb[0].mxu0 %v1418
        %v1489 = vpop.f32.mrb[0].mxu0
        %v1490 = vadd.f32 0.0, %v1489
        %v1491 = vpop.f32.mrb[0].mxu0
        %1492 = vdwg.mxu0
        %v1493 = vadd.f32 %v1414, %v1490
        %s1494 = scalar_lea.vmem %s4, 48
        %v1495 = vld [vmem:[%s1494] sm:$0x1f]
        %v1497 = vsel %vm1024, %v928, 0
        %v1500 = vsel %vm1028, %v1495, 0
        %1502 = vmatprep.subr.mxu0 0.0
        %1503 = vmatpush1.msra.mxu0 %v1500
        %1504 = vmatprep.subr.mxu0 0.0
        %1505 = vmatpush1.msra.mxu0 0.0
        %1506 = vmatprep.subr.mxu0 0.0
        %1507 = vmatpush1.msra.mxu0 0.0
        %1508 = vmatprep.subr.mxu0 0.0
        %1509 = vmatpush1.msra.mxu0 0.0
        %1510 = vmatprep.subr.mxu0 0.0
        %1511 = vmatpush1.msra.mxu0 0.0
        %1512 = vmatprep.subr.mxu0 0.0
        %1513 = vmatpush1.msra.mxu0 0.0
        %1514 = vmatprep.subr.mxu0 0.0
        %1515 = vmatpush1.msra.mxu0 0.0
        %1516 = vmatprep.subr.mxu0 0.0
        %1517 = vmatpush1.msra.mxu0 0.0
        %1518 = vmatprep.subr.mxu0 0.0
        %1519 = vmatpush1.msra.mxu0 0.0
        %1520 = vmatprep.subr.mxu0 0.0
        %1521 = vmatpush1.msra.mxu0 0.0
        %1522 = vmatprep.subr.mxu0 0.0
        %1523 = vmatpush1.msra.mxu0 0.0
        %1524 = vmatprep.subr.mxu0 0.0
        %1525 = vmatpush1.msra.mxu0 0.0
        %1526 = vmatprep.subr.mxu0 0.0
        %1527 = vmatpush1.msra.mxu0 0.0
        %1528 = vmatprep.subr.mxu0 0.0
        %1529 = vmatpush1.msra.mxu0 0.0
        %1530 = vmatprep.subr.mxu0 0.0
        %1531 = vmatpush1.msra.mxu0 0.0
        %1532 = vmatprep.subr.mxu0 0.0
        %1533 = vmatpush1.msra.mxu0 0.0
        %1534 = vmatprep.subr.mxu0 0.0
        %1535 = vmatpush1.msra.mxu0 0.0
        %1536 = vmatprep.subr.mxu0 0.0
        %1537 = vmatpush1.msra.mxu0 0.0
        %1538 = vmatprep.subr.mxu0 0.0
        %1539 = vmatpush1.msra.mxu0 0.0
        %1540 = vmatprep.subr.mxu0 0.0
        %1541 = vmatpush1.msra.mxu0 0.0
        %1542 = vmatprep.subr.mxu0 0.0
        %1543 = vmatpush1.msra.mxu0 0.0
        %1544 = vmatprep.subr.mxu0 0.0
        %1545 = vmatpush1.msra.mxu0 0.0
        %1546 = vmatprep.subr.mxu0 0.0
        %1547 = vmatpush1.msra.mxu0 0.0
        %1548 = vmatprep.subr.mxu0 0.0
        %1549 = vmatpush1.msra.mxu0 0.0
        %1550 = vmatprep.subr.mxu0 0.0
        %1551 = vmatpush1.msra.mxu0 0.0
        %1552 = vmatprep.subr.mxu0 0.0
        %1553 = vmatpush1.msra.mxu0 0.0
        %1554 = vmatprep.subr.mxu0 0.0
        %1555 = vmatpush1.msra.mxu0 0.0
        %1556 = vmatprep.subr.mxu0 0.0
        %1557 = vmatpush1.msra.mxu0 0.0
        %1558 = vmatprep.subr.mxu0 0.0
        %1559 = vmatpush1.msra.mxu0 0.0
        %1560 = vmatprep.subr.mxu0 0.0
        %1561 = vmatpush1.msra.mxu0 0.0
        %1562 = vmatprep.subr.mxu0 0.0
        %1563 = vmatpush1.msra.mxu0 0.0
        %1564 = vmatprep.subr.mxu0 0.0
        %1565 = vmatpush1.msra.mxu0 0.0
        %1566 = vmatprep.mubr.f32.mxu0 0.0
        %1567 = vmatmul.mubr.f32.gmra.mrb[0].mxu0 %v1497
        %v1568 = vpop.f32.mrb[0].mxu0
        %v1569 = vadd.f32 0.0, %v1568
        %v1570 = vpop.f32.mrb[0].mxu0
        %1571 = vdwg.mxu0
        %v1572 = vadd.f32 %v1493, %v1569
        %s1573 = scalar_lea.vmem %s4, 56
        %v1574 = vld [vmem:[%s1573] sm:$0x1f]
        %v1576 = vsel %vm1024, %v933, 0
        %v1579 = vsel %vm1028, %v1574, 0
        %1581 = vmatprep.subr.mxu0 0.0
        %1582 = vmatpush1.msra.mxu0 %v1579
        %1583 = vmatprep.subr.mxu0 0.0
        %1584 = vmatpush1.msra.mxu0 0.0
        %1585 = vmatprep.subr.mxu0 0.0
        %1586 = vmatpush1.msra.mxu0 0.0
        %1587 = vmatprep.subr.mxu0 0.0
        %1588 = vmatpush1.msra.mxu0 0.0
        %1589 = vmatprep.subr.mxu0 0.0
        %1590 = vmatpush1.msra.mxu0 0.0
        %1591 = vmatprep.subr.mxu0 0.0
        %1592 = vmatpush1.msra.mxu0 0.0
        %1593 = vmatprep.subr.mxu0 0.0
        %1594 = vmatpush1.msra.mxu0 0.0
        %1595 = vmatprep.subr.mxu0 0.0
        %1596 = vmatpush1.msra.mxu0 0.0
        %1597 = vmatprep.subr.mxu0 0.0
        %1598 = vmatpush1.msra.mxu0 0.0
        %1599 = vmatprep.subr.mxu0 0.0
        %1600 = vmatpush1.msra.mxu0 0.0
        %1601 = vmatprep.subr.mxu0 0.0
        %1602 = vmatpush1.msra.mxu0 0.0
        %1603 = vmatprep.subr.mxu0 0.0
        %1604 = vmatpush1.msra.mxu0 0.0
        %1605 = vmatprep.subr.mxu0 0.0
        %1606 = vmatpush1.msra.mxu0 0.0
        %1607 = vmatprep.subr.mxu0 0.0
        %1608 = vmatpush1.msra.mxu0 0.0
        %1609 = vmatprep.subr.mxu0 0.0
        %1610 = vmatpush1.msra.mxu0 0.0
        %1611 = vmatprep.subr.mxu0 0.0
        %1612 = vmatpush1.msra.mxu0 0.0
        %1613 = vmatprep.subr.mxu0 0.0
        %1614 = vmatpush1.msra.mxu0 0.0
        %1615 = vmatprep.subr.mxu0 0.0
        %1616 = vmatpush1.msra.mxu0 0.0
        %1617 = vmatprep.subr.mxu0 0.0
        %1618 = vmatpush1.msra.mxu0 0.0
        %1619 = vmatprep.subr.mxu0 0.0
        %1620 = vmatpush1.msra.mxu0 0.0
        %1621 = vmatprep.subr.mxu0 0.0
        %1622 = vmatpush1.msra.mxu0 0.0
        %1623 = vmatprep.subr.mxu0 0.0
        %1624 = vmatpush1.msra.mxu0 0.0
        %1625 = vmatprep.subr.mxu0 0.0
        %1626 = vmatpush1.msra.mxu0 0.0
        %1627 = vmatprep.subr.mxu0 0.0
        %1628 = vmatpush1.msra.mxu0 0.0
        %1629 = vmatprep.subr.mxu0 0.0
        %1630 = vmatpush1.msra.mxu0 0.0
        %1631 = vmatprep.subr.mxu0 0.0
        %1632 = vmatpush1.msra.mxu0 0.0
        %1633 = vmatprep.subr.mxu0 0.0
        %1634 = vmatpush1.msra.mxu0 0.0
        %1635 = vmatprep.subr.mxu0 0.0
        %1636 = vmatpush1.msra.mxu0 0.0
        %1637 = vmatprep.subr.mxu0 0.0
        %1638 = vmatpush1.msra.mxu0 0.0
        %1639 = vmatprep.subr.mxu0 0.0
        %1640 = vmatpush1.msra.mxu0 0.0
        %1641 = vmatprep.subr.mxu0 0.0
        %1642 = vmatpush1.msra.mxu0 0.0
        %1643 = vmatprep.subr.mxu0 0.0
        %1644 = vmatpush1.msra.mxu0 0.0
        %1645 = vmatprep.mubr.f32.mxu0 0.0
        %1646 = vmatmul.mubr.f32.gmra.mrb[0].mxu0 %v1576
        %v1647 = vpop.f32.mrb[0].mxu0
        %v1648 = vadd.f32 0.0, %v1647
        %v1649 = vpop.f32.mrb[0].mxu0
        %1650 = vdwg.mxu0
        %v1651 = vadd.f32 %v1572, %v1648
        %s1652 = scalar_lea.vmem %s4, 64
        %v1653 = vld [vmem:[%s1652] sm:$0x1f]
        %v1655 = vsel %vm1024, %v938, 0
        %v1658 = vsel %vm1028, %v1653, 0
        %1660 = vmatprep.subr.mxu0 0.0
        %1661 = vmatpush1.msra.mxu0 %v1658
        %1662 = vmatprep.subr.mxu0 0.0
        %1663 = vmatpush1.msra.mxu0 0.0
        %1664 = vmatprep.subr.mxu0 0.0
        %1665 = vmatpush1.msra.mxu0 0.0
        %1666 = vmatprep.subr.mxu0 0.0
        %1667 = vmatpush1.msra.mxu0 0.0
        %1668 = vmatprep.subr.mxu0 0.0
        %1669 = vmatpush1.msra.mxu0 0.0
        %1670 = vmatprep.subr.mxu0 0.0
        %1671 = vmatpush1.msra.mxu0 0.0
        %1672 = vmatprep.subr.mxu0 0.0
        %1673 = vmatpush1.msra.mxu0 0.0
        %1674 = vmatprep.subr.mxu0 0.0
        %1675 = vmatpush1.msra.mxu0 0.0
        %1676 = vmatprep.subr.mxu0 0.0
        %1677 = vmatpush1.msra.mxu0 0.0
        %1678 = vmatprep.subr.mxu0 0.0
        %1679 = vmatpush1.msra.mxu0 0.0
        %1680 = vmatprep.subr.mxu0 0.0
        %1681 = vmatpush1.msra.mxu0 0.0
        %1682 = vmatprep.subr.mxu0 0.0
        %1683 = vmatpush1.msra.mxu0 0.0
        %1684 = vmatprep.subr.mxu0 0.0
        %1685 = vmatpush1.msra.mxu0 0.0
        %1686 = vmatprep.subr.mxu0 0.0
        %1687 = vmatpush1.msra.mxu0 0.0
        %1688 = vmatprep.subr.mxu0 0.0
        %1689 = vmatpush1.msra.mxu0 0.0
        %1690 = vmatprep.subr.mxu0 0.0
        %1691 = vmatpush1.msra.mxu0 0.0
        %1692 = vmatprep.subr.mxu0 0.0
        %1693 = vmatpush1.msra.mxu0 0.0
        %1694 = vmatprep.subr.mxu0 0.0
        %1695 = vmatpush1.msra.mxu0 0.0
        %1696 = vmatprep.subr.mxu0 0.0
        %1697 = vmatpush1.msra.mxu0 0.0
        %1698 = vmatprep.subr.mxu0 0.0
        %1699 = vmatpush1.msra.mxu0 0.0
        %1700 = vmatprep.subr.mxu0 0.0
        %1701 = vmatpush1.msra.mxu0 0.0
        %1702 = vmatprep.subr.mxu0 0.0
        %1703 = vmatpush1.msra.mxu0 0.0
        %1704 = vmatprep.subr.mxu0 0.0
        %1705 = vmatpush1.msra.mxu0 0.0
        %1706 = vmatprep.subr.mxu0 0.0
        %1707 = vmatpush1.msra.mxu0 0.0
        %1708 = vmatprep.subr.mxu0 0.0
        %1709 = vmatpush1.msra.mxu0 0.0
        %1710 = vmatprep.subr.mxu0 0.0
        %1711 = vmatpush1.msra.mxu0 0.0
        %1712 = vmatprep.subr.mxu0 0.0
        %1713 = vmatpush1.msra.mxu0 0.0
        %1714 = vmatprep.subr.mxu0 0.0
        %1715 = vmatpush1.msra.mxu0 0.0
        %1716 = vmatprep.subr.mxu0 0.0
        %1717 = vmatpush1.msra.mxu0 0.0
        %1718 = vmatprep.subr.mxu0 0.0
        %1719 = vmatpush1.msra.mxu0 0.0
        %1720 = vmatprep.subr.mxu0 0.0
        %1721 = vmatpush1.msra.mxu0 0.0
        %1722 = vmatprep.subr.mxu0 0.0
        %1723 = vmatpush1.msra.mxu0 0.0
        %1724 = vmatprep.mubr.f32.mxu0 0.0
        %1725 = vmatmul.mubr.f32.gmra.mrb[0].mxu0 %v1655
        %v1726 = vpop.f32.mrb[0].mxu0
        %v1727 = vadd.f32 0.0, %v1726
        %v1728 = vpop.f32.mrb[0].mxu0
        %1729 = vdwg.mxu0
        %v1730 = vadd.f32 %v1651, %v1727
        %s1731 = scalar_lea.vmem %s4, 72
        %v1732 = vld [vmem:[%s1731] sm:$0x1f]
        %v1734 = vsel %vm1024, %v943, 0
        %v1737 = vsel %vm1028, %v1732, 0
        %1739 = vmatprep.subr.mxu0 0.0
        %1740 = vmatpush1.msra.mxu0 %v1737
        %1741 = vmatprep.subr.mxu0 0.0
        %1742 = vmatpush1.msra.mxu0 0.0
        %1743 = vmatprep.subr.mxu0 0.0
        %1744 = vmatpush1.msra.mxu0 0.0
        %1745 = vmatprep.subr.mxu0 0.0
        %1746 = vmatpush1.msra.mxu0 0.0
        %1747 = vmatprep.subr.mxu0 0.0
        %1748 = vmatpush1.msra.mxu0 0.0
        %1749 = vmatprep.subr.mxu0 0.0
        %1750 = vmatpush1.msra.mxu0 0.0
        %1751 = vmatprep.subr.mxu0 0.0
        %1752 = vmatpush1.msra.mxu0 0.0
        %1753 = vmatprep.subr.mxu0 0.0
        %1754 = vmatpush1.msra.mxu0 0.0
        %1755 = vmatprep.subr.mxu0 0.0
        %1756 = vmatpush1.msra.mxu0 0.0
        %1757 = vmatprep.subr.mxu0 0.0
        %1758 = vmatpush1.msra.mxu0 0.0
        %1759 = vmatprep.subr.mxu0 0.0
        %1760 = vmatpush1.msra.mxu0 0.0
        %1761 = vmatprep.subr.mxu0 0.0
        %1762 = vmatpush1.msra.mxu0 0.0
        %1763 = vmatprep.subr.mxu0 0.0
        %1764 = vmatpush1.msra.mxu0 0.0
        %1765 = vmatprep.subr.mxu0 0.0
        %1766 = vmatpush1.msra.mxu0 0.0
        %1767 = vmatprep.subr.mxu0 0.0
        %1768 = vmatpush1.msra.mxu0 0.0
        %1769 = vmatprep.subr.mxu0 0.0
        %1770 = vmatpush1.msra.mxu0 0.0
        %1771 = vmatprep.subr.mxu0 0.0
        %1772 = vmatpush1.msra.mxu0 0.0
        %1773 = vmatprep.subr.mxu0 0.0
        %1774 = vmatpush1.msra.mxu0 0.0
        %1775 = vmatprep.subr.mxu0 0.0
        %1776 = vmatpush1.msra.mxu0 0.0
        %1777 = vmatprep.subr.mxu0 0.0
        %1778 = vmatpush1.msra.mxu0 0.0
        %1779 = vmatprep.subr.mxu0 0.0
        %1780 = vmatpush1.msra.mxu0 0.0
        %1781 = vmatprep.subr.mxu0 0.0
        %1782 = vmatpush1.msra.mxu0 0.0
        %1783 = vmatprep.subr.mxu0 0.0
        %1784 = vmatpush1.msra.mxu0 0.0
        %1785 = vmatprep.subr.mxu0 0.0
        %1786 = vmatpush1.msra.mxu0 0.0
        %1787 = vmatprep.subr.mxu0 0.0
        %1788 = vmatpush1.msra.mxu0 0.0
        %1789 = vmatprep.subr.mxu0 0.0
        %1790 = vmatpush1.msra.mxu0 0.0
        %1791 = vmatprep.subr.mxu0 0.0
        %1792 = vmatpush1.msra.mxu0 0.0
        %1793 = vmatprep.subr.mxu0 0.0
        %1794 = vmatpush1.msra.mxu0 0.0
        %1795 = vmatprep.subr.mxu0 0.0
        %1796 = vmatpush1.msra.mxu0 0.0
        %1797 = vmatprep.subr.mxu0 0.0
        %1798 = vmatpush1.msra.mxu0 0.0
        %1799 = vmatprep.subr.mxu0 0.0
        %1800 = vmatpush1.msra.mxu0 0.0
        %1801 = vmatprep.subr.mxu0 0.0
        %1802 = vmatpush1.msra.mxu0 0.0
        %1803 = vmatprep.mubr.f32.mxu0 0.0
        %1804 = vmatmul.mubr.f32.gmra.mrb[0].mxu0 %v1734
        %v1805 = vpop.f32.mrb[0].mxu0
        %v1806 = vadd.f32 0.0, %v1805
        %v1807 = vpop.f32.mrb[0].mxu0
        %1808 = vdwg.mxu0
        %v1809 = vadd.f32 %v1730, %v1806
        %s1810 = scalar_lea.vmem %s4, 80
        %v1811 = vld [vmem:[%s1810] sm:$0x1f]
        %v1813 = vsel %vm1024, %v948, 0
        %v1816 = vsel %vm1028, %v1811, 0
        %1818 = vmatprep.subr.mxu0 0.0
        %1819 = vmatpush1.msra.mxu0 %v1816
        %1820 = vmatprep.subr.mxu0 0.0
        %1821 = vmatpush1.msra.mxu0 0.0
        %1822 = vmatprep.subr.mxu0 0.0
        %1823 = vmatpush1.msra.mxu0 0.0
        %1824 = vmatprep.subr.mxu0 0.0
        %1825 = vmatpush1.msra.mxu0 0.0
        %1826 = vmatprep.subr.mxu0 0.0
        %1827 = vmatpush1.msra.mxu0 0.0
        %1828 = vmatprep.subr.mxu0 0.0
        %1829 = vmatpush1.msra.mxu0 0.0
        %1830 = vmatprep.subr.mxu0 0.0
        %1831 = vmatpush1.msra.mxu0 0.0
        %1832 = vmatprep.subr.mxu0 0.0
        %1833 = vmatpush1.msra.mxu0 0.0
        %1834 = vmatprep.subr.mxu0 0.0
        %1835 = vmatpush1.msra.mxu0 0.0
        %1836 = vmatprep.subr.mxu0 0.0
        %1837 = vmatpush1.msra.mxu0 0.0
        %1838 = vmatprep.subr.mxu0 0.0
        %1839 = vmatpush1.msra.mxu0 0.0
        %1840 = vmatprep.subr.mxu0 0.0
        %1841 = vmatpush1.msra.mxu0 0.0
        %1842 = vmatprep.subr.mxu0 0.0
        %1843 = vmatpush1.msra.mxu0 0.0
        %1844 = vmatprep.subr.mxu0 0.0
        %1845 = vmatpush1.msra.mxu0 0.0
        %1846 = vmatprep.subr.mxu0 0.0
        %1847 = vmatpush1.msra.mxu0 0.0
        %1848 = vmatprep.subr.mxu0 0.0
        %1849 = vmatpush1.msra.mxu0 0.0
        %1850 = vmatprep.subr.mxu0 0.0
        %1851 = vmatpush1.msra.mxu0 0.0
        %1852 = vmatprep.subr.mxu0 0.0
        %1853 = vmatpush1.msra.mxu0 0.0
        %1854 = vmatprep.subr.mxu0 0.0
        %1855 = vmatpush1.msra.mxu0 0.0
        %1856 = vmatprep.subr.mxu0 0.0
        %1857 = vmatpush1.msra.mxu0 0.0
        %1858 = vmatprep.subr.mxu0 0.0
        %1859 = vmatpush1.msra.mxu0 0.0
        %1860 = vmatprep.subr.mxu0 0.0
        %1861 = vmatpush1.msra.mxu0 0.0
        %1862 = vmatprep.subr.mxu0 0.0
        %1863 = vmatpush1.msra.mxu0 0.0
        %1864 = vmatprep.subr.mxu0 0.0
        %1865 = vmatpush1.msra.mxu0 0.0
        %1866 = vmatprep.subr.mxu0 0.0
        %1867 = vmatpush1.msra.mxu0 0.0
        %1868 = vmatprep.subr.mxu0 0.0
        %1869 = vmatpush1.msra.mxu0 0.0
        %1870 = vmatprep.subr.mxu0 0.0
        %1871 = vmatpush1.msra.mxu0 0.0
        %1872 = vmatprep.subr.mxu0 0.0
        %1873 = vmatpush1.msra.mxu0 0.0
        %1874 = vmatprep.subr.mxu0 0.0
        %1875 = vmatpush1.msra.mxu0 0.0
        %1876 = vmatprep.subr.mxu0 0.0
        %1877 = vmatpush1.msra.mxu0 0.0
        %1878 = vmatprep.subr.mxu0 0.0
        %1879 = vmatpush1.msra.mxu0 0.0
        %1880 = vmatprep.subr.mxu0 0.0
        %1881 = vmatpush1.msra.mxu0 0.0
        %1882 = vmatprep.mubr.f32.mxu0 0.0
        %1883 = vmatmul.mubr.f32.gmra.mrb[0].mxu0 %v1813
        %v1884 = vpop.f32.mrb[0].mxu0
        %v1885 = vadd.f32 0.0, %v1884
        %v1886 = vpop.f32.mrb[0].mxu0
        %1887 = vdwg.mxu0
        %v1888 = vadd.f32 %v1809, %v1885
        %s1889 = scalar_lea.vmem %s4, 88
        %v1890 = vld [vmem:[%s1889] sm:$0x1f]
        %v1892 = vsel %vm1024, %v953, 0
        %v1895 = vsel %vm1028, %v1890, 0
        %1897 = vmatprep.subr.mxu0 0.0
        %1898 = vmatpush1.msra.mxu0 %v1895
        %1899 = vmatprep.subr.mxu0 0.0
        %1900 = vmatpush1.msra.mxu0 0.0
        %1901 = vmatprep.subr.mxu0 0.0
        %1902 = vmatpush1.msra.mxu0 0.0
        %1903 = vmatprep.subr.mxu0 0.0
        %1904 = vmatpush1.msra.mxu0 0.0
        %1905 = vmatprep.subr.mxu0 0.0
        %1906 = vmatpush1.msra.mxu0 0.0
        %1907 = vmatprep.subr.mxu0 0.0
        %1908 = vmatpush1.msra.mxu0 0.0
        %1909 = vmatprep.subr.mxu0 0.0
        %1910 = vmatpush1.msra.mxu0 0.0
        %1911 = vmatprep.subr.mxu0 0.0
        %1912 = vmatpush1.msra.mxu0 0.0
        %1913 = vmatprep.subr.mxu0 0.0
        %1914 = vmatpush1.msra.mxu0 0.0
        %1915 = vmatprep.subr.mxu0 0.0
        %1916 = vmatpush1.msra.mxu0 0.0
        %1917 = vmatprep.subr.mxu0 0.0
        %1918 = vmatpush1.msra.mxu0 0.0
        %1919 = vmatprep.subr.mxu0 0.0
        %1920 = vmatpush1.msra.mxu0 0.0
        %1921 = vmatprep.subr.mxu0 0.0
        %1922 = vmatpush1.msra.mxu0 0.0
        %1923 = vmatprep.subr.mxu0 0.0
        %1924 = vmatpush1.msra.mxu0 0.0
        %1925 = vmatprep.subr.mxu0 0.0
        %1926 = vmatpush1.msra.mxu0 0.0
        %1927 = vmatprep.subr.mxu0 0.0
        %1928 = vmatpush1.msra.mxu0 0.0
        %1929 = vmatprep.subr.mxu0 0.0
        %1930 = vmatpush1.msra.mxu0 0.0
        %1931 = vmatprep.subr.mxu0 0.0
        %1932 = vmatpush1.msra.mxu0 0.0
        %1933 = vmatprep.subr.mxu0 0.0
        %1934 = vmatpush1.msra.mxu0 0.0
        %1935 = vmatprep.subr.mxu0 0.0
        %1936 = vmatpush1.msra.mxu0 0.0
        %1937 = vmatprep.subr.mxu0 0.0
        %1938 = vmatpush1.msra.mxu0 0.0
        %1939 = vmatprep.subr.mxu0 0.0
        %1940 = vmatpush1.msra.mxu0 0.0
        %1941 = vmatprep.subr.mxu0 0.0
        %1942 = vmatpush1.msra.mxu0 0.0
        %1943 = vmatprep.subr.mxu0 0.0
        %1944 = vmatpush1.msra.mxu0 0.0
        %1945 = vmatprep.subr.mxu0 0.0
        %1946 = vmatpush1.msra.mxu0 0.0
        %1947 = vmatprep.subr.mxu0 0.0
        %1948 = vmatpush1.msra.mxu0 0.0
        %1949 = vmatprep.subr.mxu0 0.0
        %1950 = vmatpush1.msra.mxu0 0.0
        %1951 = vmatprep.subr.mxu0 0.0
        %1952 = vmatpush1.msra.mxu0 0.0
        %1953 = vmatprep.subr.mxu0 0.0
        %1954 = vmatpush1.msra.mxu0 0.0
        %1955 = vmatprep.subr.mxu0 0.0
        %1956 = vmatpush1.msra.mxu0 0.0
        %1957 = vmatprep.subr.mxu0 0.0
        %1958 = vmatpush1.msra.mxu0 0.0
        %1959 = vmatprep.subr.mxu0 0.0
        %1960 = vmatpush1.msra.mxu0 0.0
        %1961 = vmatprep.mubr.f32.mxu0 0.0
        %1962 = vmatmul.mubr.f32.gmra.mrb[0].mxu0 %v1892
        %v1963 = vpop.f32.mrb[0].mxu0
        %v1964 = vadd.f32 0.0, %v1963
        %v1965 = vpop.f32.mrb[0].mxu0
        %1966 = vdwg.mxu0
        %v1967 = vadd.f32 %v1888, %v1964
        %s1968 = scalar_lea.vmem %s4, 96
        %v1969 = vld [vmem:[%s1968] sm:$0x1f]
        %v1971 = vsel %vm1024, %v958, 0
        %v1974 = vsel %vm1028, %v1969, 0
        %1976 = vmatprep.subr.mxu0 0.0
        %1977 = vmatpush1.msra.mxu0 %v1974
        %1978 = vmatprep.subr.mxu0 0.0
        %1979 = vmatpush1.msra.mxu0 0.0
        %1980 = vmatprep.subr.mxu0 0.0
        %1981 = vmatpush1.msra.mxu0 0.0
        %1982 = vmatprep.subr.mxu0 0.0
        %1983 = vmatpush1.msra.mxu0 0.0
        %1984 = vmatprep.subr.mxu0 0.0
        %1985 = vmatpush1.msra.mxu0 0.0
        %1986 = vmatprep.subr.mxu0 0.0
        %1987 = vmatpush1.msra.mxu0 0.0
        %1988 = vmatprep.subr.mxu0 0.0
        %1989 = vmatpush1.msra.mxu0 0.0
        %1990 = vmatprep.subr.mxu0 0.0
        %1991 = vmatpush1.msra.mxu0 0.0
        %1992 = vmatprep.subr.mxu0 0.0
        %1993 = vmatpush1.msra.mxu0 0.0
        %1994 = vmatprep.subr.mxu0 0.0
        %1995 = vmatpush1.msra.mxu0 0.0
        %1996 = vmatprep.subr.mxu0 0.0
        %1997 = vmatpush1.msra.mxu0 0.0
        %1998 = vmatprep.subr.mxu0 0.0
        %1999 = vmatpush1.msra.mxu0 0.0
        %2000 = vmatprep.subr.mxu0 0.0
        %2001 = vmatpush1.msra.mxu0 0.0
        %2002 = vmatprep.subr.mxu0 0.0
        %2003 = vmatpush1.msra.mxu0 0.0
        %2004 = vmatprep.subr.mxu0 0.0
        %2005 = vmatpush1.msra.mxu0 0.0
        %2006 = vmatprep.subr.mxu0 0.0
        %2007 = vmatpush1.msra.mxu0 0.0
        %2008 = vmatprep.subr.mxu0 0.0
        %2009 = vmatpush1.msra.mxu0 0.0
        %2010 = vmatprep.subr.mxu0 0.0
        %2011 = vmatpush1.msra.mxu0 0.0
        %2012 = vmatprep.subr.mxu0 0.0
        %2013 = vmatpush1.msra.mxu0 0.0
        %2014 = vmatprep.subr.mxu0 0.0
        %2015 = vmatpush1.msra.mxu0 0.0
        %2016 = vmatprep.subr.mxu0 0.0
        %2017 = vmatpush1.msra.mxu0 0.0
        %2018 = vmatprep.subr.mxu0 0.0
        %2019 = vmatpush1.msra.mxu0 0.0
        %2020 = vmatprep.subr.mxu0 0.0
        %2021 = vmatpush1.msra.mxu0 0.0
        %2022 = vmatprep.subr.mxu0 0.0
        %2023 = vmatpush1.msra.mxu0 0.0
        %2024 = vmatprep.subr.mxu0 0.0
        %2025 = vmatpush1.msra.mxu0 0.0
        %2026 = vmatprep.subr.mxu0 0.0
        %2027 = vmatpush1.msra.mxu0 0.0
        %2028 = vmatprep.subr.mxu0 0.0
        %2029 = vmatpush1.msra.mxu0 0.0
        %2030 = vmatprep.subr.mxu0 0.0
        %2031 = vmatpush1.msra.mxu0 0.0
        %2032 = vmatprep.subr.mxu0 0.0
        %2033 = vmatpush1.msra.mxu0 0.0
        %2034 = vmatprep.subr.mxu0 0.0
        %2035 = vmatpush1.msra.mxu0 0.0
        %2036 = vmatprep.subr.mxu0 0.0
        %2037 = vmatpush1.msra.mxu0 0.0
        %2038 = vmatprep.subr.mxu0 0.0
        %2039 = vmatpush1.msra.mxu0 0.0
        %2040 = vmatprep.mubr.f32.mxu0 0.0
        %2041 = vmatmul.mubr.f32.gmra.mrb[0].mxu0 %v1971
        %v2042 = vpop.f32.mrb[0].mxu0
        %v2043 = vadd.f32 0.0, %v2042
        %v2044 = vpop.f32.mrb[0].mxu0
        %2045 = vdwg.mxu0
        %v2046 = vadd.f32 %v1967, %v2043
        %s2047 = scalar_lea.vmem %s4, 104
        %v2048 = vld [vmem:[%s2047] sm:$0x1f]
        %v2050 = vsel %vm1024, %v963, 0
        %v2053 = vsel %vm1028, %v2048, 0
        %2055 = vmatprep.subr.mxu0 0.0
        %2056 = vmatpush1.msra.mxu0 %v2053
        %2057 = vmatprep.subr.mxu0 0.0
        %2058 = vmatpush1.msra.mxu0 0.0
        %2059 = vmatprep.subr.mxu0 0.0
        %2060 = vmatpush1.msra.mxu0 0.0
        %2061 = vmatprep.subr.mxu0 0.0
        %2062 = vmatpush1.msra.mxu0 0.0
        %2063 = vmatprep.subr.mxu0 0.0
        %2064 = vmatpush1.msra.mxu0 0.0
        %2065 = vmatprep.subr.mxu0 0.0
        %2066 = vmatpush1.msra.mxu0 0.0
        %2067 = vmatprep.subr.mxu0 0.0
        %2068 = vmatpush1.msra.mxu0 0.0
        %2069 = vmatprep.subr.mxu0 0.0
        %2070 = vmatpush1.msra.mxu0 0.0
        %2071 = vmatprep.subr.mxu0 0.0
        %2072 = vmatpush1.msra.mxu0 0.0
        %2073 = vmatprep.subr.mxu0 0.0
        %2074 = vmatpush1.msra.mxu0 0.0
        %2075 = vmatprep.subr.mxu0 0.0
        %2076 = vmatpush1.msra.mxu0 0.0
        %2077 = vmatprep.subr.mxu0 0.0
        %2078 = vmatpush1.msra.mxu0 0.0
        %2079 = vmatprep.subr.mxu0 0.0
        %2080 = vmatpush1.msra.mxu0 0.0
        %2081 = vmatprep.subr.mxu0 0.0
        %2082 = vmatpush1.msra.mxu0 0.0
        %2083 = vmatprep.subr.mxu0 0.0
        %2084 = vmatpush1.msra.mxu0 0.0
        %2085 = vmatprep.subr.mxu0 0.0
        %2086 = vmatpush1.msra.mxu0 0.0
        %2087 = vmatprep.subr.mxu0 0.0
        %2088 = vmatpush1.msra.mxu0 0.0
        %2089 = vmatprep.subr.mxu0 0.0
        %2090 = vmatpush1.msra.mxu0 0.0
        %2091 = vmatprep.subr.mxu0 0.0
        %2092 = vmatpush1.msra.mxu0 0.0
        %2093 = vmatprep.subr.mxu0 0.0
        %2094 = vmatpush1.msra.mxu0 0.0
        %2095 = vmatprep.subr.mxu0 0.0
        %2096 = vmatpush1.msra.mxu0 0.0
        %2097 = vmatprep.subr.mxu0 0.0
        %2098 = vmatpush1.msra.mxu0 0.0
        %2099 = vmatprep.subr.mxu0 0.0
        %2100 = vmatpush1.msra.mxu0 0.0
        %2101 = vmatprep.subr.mxu0 0.0
        %2102 = vmatpush1.msra.mxu0 0.0
        %2103 = vmatprep.subr.mxu0 0.0
        %2104 = vmatpush1.msra.mxu0 0.0
        %2105 = vmatprep.subr.mxu0 0.0
        %2106 = vmatpush1.msra.mxu0 0.0
        %2107 = vmatprep.subr.mxu0 0.0
        %2108 = vmatpush1.msra.mxu0 0.0
        %2109 = vmatprep.subr.mxu0 0.0
        %2110 = vmatpush1.msra.mxu0 0.0
        %2111 = vmatprep.subr.mxu0 0.0
        %2112 = vmatpush1.msra.mxu0 0.0
        %2113 = vmatprep.subr.mxu0 0.0
        %2114 = vmatpush1.msra.mxu0 0.0
        %2115 = vmatprep.subr.mxu0 0.0
        %2116 = vmatpush1.msra.mxu0 0.0
        %2117 = vmatprep.subr.mxu0 0.0
        %2118 = vmatpush1.msra.mxu0 0.0
        %2119 = vmatprep.mubr.f32.mxu0 0.0
        %2120 = vmatmul.mubr.f32.gmra.mrb[0].mxu0 %v2050
        %v2121 = vpop.f32.mrb[0].mxu0
        %v2122 = vadd.f32 0.0, %v2121
        %v2123 = vpop.f32.mrb[0].mxu0
        %2124 = vdwg.mxu0
        %v2125 = vadd.f32 %v2046, %v2122
        %s2126 = scalar_lea.vmem %s4, 112
        %v2127 = vld [vmem:[%s2126] sm:$0x1f]
        %v2129 = vsel %vm1024, %v968, 0
        %v2132 = vsel %vm1028, %v2127, 0
        %2134 = vmatprep.subr.mxu0 0.0
        %2135 = vmatpush1.msra.mxu0 %v2132
        %2136 = vmatprep.subr.mxu0 0.0
        %2137 = vmatpush1.msra.mxu0 0.0
        %2138 = vmatprep.subr.mxu0 0.0
        %2139 = vmatpush1.msra.mxu0 0.0
        %2140 = vmatprep.subr.mxu0 0.0
        %2141 = vmatpush1.msra.mxu0 0.0
        %2142 = vmatprep.subr.mxu0 0.0
        %2143 = vmatpush1.msra.mxu0 0.0
        %2144 = vmatprep.subr.mxu0 0.0
        %2145 = vmatpush1.msra.mxu0 0.0
        %2146 = vmatprep.subr.mxu0 0.0
        %2147 = vmatpush1.msra.mxu0 0.0
        %2148 = vmatprep.subr.mxu0 0.0
        %2149 = vmatpush1.msra.mxu0 0.0
        %2150 = vmatprep.subr.mxu0 0.0
        %2151 = vmatpush1.msra.mxu0 0.0
        %2152 = vmatprep.subr.mxu0 0.0
        %2153 = vmatpush1.msra.mxu0 0.0
        %2154 = vmatprep.subr.mxu0 0.0
        %2155 = vmatpush1.msra.mxu0 0.0
        %2156 = vmatprep.subr.mxu0 0.0
        %2157 = vmatpush1.msra.mxu0 0.0
        %2158 = vmatprep.subr.mxu0 0.0
        %2159 = vmatpush1.msra.mxu0 0.0
        %2160 = vmatprep.subr.mxu0 0.0
        %2161 = vmatpush1.msra.mxu0 0.0
        %2162 = vmatprep.subr.mxu0 0.0
        %2163 = vmatpush1.msra.mxu0 0.0
        %2164 = vmatprep.subr.mxu0 0.0
        %2165 = vmatpush1.msra.mxu0 0.0
        %2166 = vmatprep.subr.mxu0 0.0
        %2167 = vmatpush1.msra.mxu0 0.0
        %2168 = vmatprep.subr.mxu0 0.0
        %2169 = vmatpush1.msra.mxu0 0.0
        %2170 = vmatprep.subr.mxu0 0.0
        %2171 = vmatpush1.msra.mxu0 0.0
        %2172 = vmatprep.subr.mxu0 0.0
        %2173 = vmatpush1.msra.mxu0 0.0
        %2174 = vmatprep.subr.mxu0 0.0
        %2175 = vmatpush1.msra.mxu0 0.0
        %2176 = vmatprep.subr.mxu0 0.0
        %2177 = vmatpush1.msra.mxu0 0.0
        %2178 = vmatprep.subr.mxu0 0.0
        %2179 = vmatpush1.msra.mxu0 0.0
        %2180 = vmatprep.subr.mxu0 0.0
        %2181 = vmatpush1.msra.mxu0 0.0
        %2182 = vmatprep.subr.mxu0 0.0
        %2183 = vmatpush1.msra.mxu0 0.0
        %2184 = vmatprep.subr.mxu0 0.0
        %2185 = vmatpush1.msra.mxu0 0.0
        %2186 = vmatprep.subr.mxu0 0.0
        %2187 = vmatpush1.msra.mxu0 0.0
        %2188 = vmatprep.subr.mxu0 0.0
        %2189 = vmatpush1.msra.mxu0 0.0
        %2190 = vmatprep.subr.mxu0 0.0
        %2191 = vmatpush1.msra.mxu0 0.0
        %2192 = vmatprep.subr.mxu0 0.0
        %2193 = vmatpush1.msra.mxu0 0.0
        %2194 = vmatprep.subr.mxu0 0.0
        %2195 = vmatpush1.msra.mxu0 0.0
        %2196 = vmatprep.subr.mxu0 0.0
        %2197 = vmatpush1.msra.mxu0 0.0
        %2198 = vmatprep.mubr.f32.mxu0 0.0
        %2199 = vmatmul.mubr.f32.gmra.mrb[0].mxu0 %v2129
        %v2200 = vpop.f32.mrb[0].mxu0
        %v2201 = vadd.f32 0.0, %v2200
        %v2202 = vpop.f32.mrb[0].mxu0
        %2203 = vdwg.mxu0
        %v2204 = vadd.f32 %v2125, %v2201
        %s2205 = scalar_lea.vmem %s4, 120
        %v2206 = vld [vmem:[%s2205] sm:$0x1f]
        %v2208 = vsel %vm1024, %v973, 0
        %v2211 = vsel %vm1028, %v2206, 0
        %2213 = vmatprep.subr.mxu0 0.0
        %2214 = vmatpush1.msra.mxu0 %v2211
        %2215 = vmatprep.subr.mxu0 0.0
        %2216 = vmatpush1.msra.mxu0 0.0
        %2217 = vmatprep.subr.mxu0 0.0
        %2218 = vmatpush1.msra.mxu0 0.0
        %2219 = vmatprep.subr.mxu0 0.0
        %2220 = vmatpush1.msra.mxu0 0.0
        %2221 = vmatprep.subr.mxu0 0.0
        %2222 = vmatpush1.msra.mxu0 0.0
        %2223 = vmatprep.subr.mxu0 0.0
        %2224 = vmatpush1.msra.mxu0 0.0
        %2225 = vmatprep.subr.mxu0 0.0
        %2226 = vmatpush1.msra.mxu0 0.0
        %2227 = vmatprep.subr.mxu0 0.0
        %2228 = vmatpush1.msra.mxu0 0.0
        %2229 = vmatprep.subr.mxu0 0.0
        %2230 = vmatpush1.msra.mxu0 0.0
        %2231 = vmatprep.subr.mxu0 0.0
        %2232 = vmatpush1.msra.mxu0 0.0
        %2233 = vmatprep.subr.mxu0 0.0
        %2234 = vmatpush1.msra.mxu0 0.0
        %2235 = vmatprep.subr.mxu0 0.0
        %2236 = vmatpush1.msra.mxu0 0.0
        %2237 = vmatprep.subr.mxu0 0.0
        %2238 = vmatpush1.msra.mxu0 0.0
        %2239 = vmatprep.subr.mxu0 0.0
        %2240 = vmatpush1.msra.mxu0 0.0
        %2241 = vmatprep.subr.mxu0 0.0
        %2242 = vmatpush1.msra.mxu0 0.0
        %2243 = vmatprep.subr.mxu0 0.0
        %2244 = vmatpush1.msra.mxu0 0.0
        %2245 = vmatprep.subr.mxu0 0.0
        %2246 = vmatpush1.msra.mxu0 0.0
        %2247 = vmatprep.subr.mxu0 0.0
        %2248 = vmatpush1.msra.mxu0 0.0
        %2249 = vmatprep.subr.mxu0 0.0
        %2250 = vmatpush1.msra.mxu0 0.0
        %2251 = vmatprep.subr.mxu0 0.0
        %2252 = vmatpush1.msra.mxu0 0.0
        %2253 = vmatprep.subr.mxu0 0.0
        %2254 = vmatpush1.msra.mxu0 0.0
        %2255 = vmatprep.subr.mxu0 0.0
        %2256 = vmatpush1.msra.mxu0 0.0
        %2257 = vmatprep.subr.mxu0 0.0
        %2258 = vmatpush1.msra.mxu0 0.0
        %2259 = vmatprep.subr.mxu0 0.0
        %2260 = vmatpush1.msra.mxu0 0.0
        %2261 = vmatprep.subr.mxu0 0.0
        %2262 = vmatpush1.msra.mxu0 0.0
        %2263 = vmatprep.subr.mxu0 0.0
        %2264 = vmatpush1.msra.mxu0 0.0
        %2265 = vmatprep.subr.mxu0 0.0
        %2266 = vmatpush1.msra.mxu0 0.0
        %2267 = vmatprep.subr.mxu0 0.0
        %2268 = vmatpush1.msra.mxu0 0.0
        %2269 = vmatprep.subr.mxu0 0.0
        %2270 = vmatpush1.msra.mxu0 0.0
        %2271 = vmatprep.subr.mxu0 0.0
        %2272 = vmatpush1.msra.mxu0 0.0
        %2273 = vmatprep.subr.mxu0 0.0
        %2274 = vmatpush1.msra.mxu0 0.0
        %2275 = vmatprep.subr.mxu0 0.0
        %2276 = vmatpush1.msra.mxu0 0.0
        %2277 = vmatprep.mubr.f32.mxu0 0.0
        %2278 = vmatmul.mubr.f32.gmra.mrb[0].mxu0 %v2208
        %v2279 = vpop.f32.mrb[0].mxu0
        %v2280 = vadd.f32 0.0, %v2279
        %v2281 = vpop.f32.mrb[0].mxu0
        %2282 = vdwg.mxu0
        %v2283 = vadd.f32 %v2204, %v2280
        %s2284 = scalar_lea.vmem %s4, 128
        %v2285 = vld [vmem:[%s2284] sm:$0x1f]
        %v2287 = vsel %vm1024, %v978, 0
        %v2290 = vsel %vm1028, %v2285, 0
        %2292 = vmatprep.subr.mxu0 0.0
        %2293 = vmatpush1.msra.mxu0 %v2290
        %2294 = vmatprep.subr.mxu0 0.0
        %2295 = vmatpush1.msra.mxu0 0.0
        %2296 = vmatprep.subr.mxu0 0.0
        %2297 = vmatpush1.msra.mxu0 0.0
        %2298 = vmatprep.subr.mxu0 0.0
        %2299 = vmatpush1.msra.mxu0 0.0
        %2300 = vmatprep.subr.mxu0 0.0
        %2301 = vmatpush1.msra.mxu0 0.0
        %2302 = vmatprep.subr.mxu0 0.0
        %2303 = vmatpush1.msra.mxu0 0.0
        %2304 = vmatprep.subr.mxu0 0.0
        %2305 = vmatpush1.msra.mxu0 0.0
        %2306 = vmatprep.subr.mxu0 0.0
        %2307 = vmatpush1.msra.mxu0 0.0
        %2308 = vmatprep.subr.mxu0 0.0
        %2309 = vmatpush1.msra.mxu0 0.0
        %2310 = vmatprep.subr.mxu0 0.0
        %2311 = vmatpush1.msra.mxu0 0.0
        %2312 = vmatprep.subr.mxu0 0.0
        %2313 = vmatpush1.msra.mxu0 0.0
        %2314 = vmatprep.subr.mxu0 0.0
        %2315 = vmatpush1.msra.mxu0 0.0
        %2316 = vmatprep.subr.mxu0 0.0
        %2317 = vmatpush1.msra.mxu0 0.0
        %2318 = vmatprep.subr.mxu0 0.0
        %2319 = vmatpush1.msra.mxu0 0.0
        %2320 = vmatprep.subr.mxu0 0.0
        %2321 = vmatpush1.msra.mxu0 0.0
        %2322 = vmatprep.subr.mxu0 0.0
        %2323 = vmatpush1.msra.mxu0 0.0
        %2324 = vmatprep.subr.mxu0 0.0
        %2325 = vmatpush1.msra.mxu0 0.0
        %2326 = vmatprep.subr.mxu0 0.0
        %2327 = vmatpush1.msra.mxu0 0.0
        %2328 = vmatprep.subr.mxu0 0.0
        %2329 = vmatpush1.msra.mxu0 0.0
        %2330 = vmatprep.subr.mxu0 0.0
        %2331 = vmatpush1.msra.mxu0 0.0
        %2332 = vmatprep.subr.mxu0 0.0
        %2333 = vmatpush1.msra.mxu0 0.0
        %2334 = vmatprep.subr.mxu0 0.0
        %2335 = vmatpush1.msra.mxu0 0.0
        %2336 = vmatprep.subr.mxu0 0.0
        %2337 = vmatpush1.msra.mxu0 0.0
        %2338 = vmatprep.subr.mxu0 0.0
        %2339 = vmatpush1.msra.mxu0 0.0
        %2340 = vmatprep.subr.mxu0 0.0
        %2341 = vmatpush1.msra.mxu0 0.0
        %2342 = vmatprep.subr.mxu0 0.0
        %2343 = vmatpush1.msra.mxu0 0.0
        %2344 = vmatprep.subr.mxu0 0.0
        %2345 = vmatpush1.msra.mxu0 0.0
        %2346 = vmatprep.subr.mxu0 0.0
        %2347 = vmatpush1.msra.mxu0 0.0
        %2348 = vmatprep.subr.mxu0 0.0
        %2349 = vmatpush1.msra.mxu0 0.0
        %2350 = vmatprep.subr.mxu0 0.0
        %2351 = vmatpush1.msra.mxu0 0.0
        %2352 = vmatprep.subr.mxu0 0.0
        %2353 = vmatpush1.msra.mxu0 0.0
        %2354 = vmatprep.subr.mxu0 0.0
        %2355 = vmatpush1.msra.mxu0 0.0
        %2356 = vmatprep.mubr.f32.mxu0 0.0
        %2357 = vmatmul.mubr.f32.gmra.mrb[0].mxu0 %v2287
        %v2358 = vpop.f32.mrb[0].mxu0
        %v2359 = vadd.f32 0.0, %v2358
        %v2360 = vpop.f32.mrb[0].mxu0
        %2361 = vdwg.mxu0
        %v2362 = vadd.f32 %v2283, %v2359
        %s2363 = scalar_lea.vmem %s4, 136
        %v2364 = vld [vmem:[%s2363] sm:$0x1f]
        %v2366 = vsel %vm1024, %v983, 0
        %v2369 = vsel %vm1028, %v2364, 0
        %2371 = vmatprep.subr.mxu0 0.0
        %2372 = vmatpush1.msra.mxu0 %v2369
        %2373 = vmatprep.subr.mxu0 0.0
        %2374 = vmatpush1.msra.mxu0 0.0
        %2375 = vmatprep.subr.mxu0 0.0
        %2376 = vmatpush1.msra.mxu0 0.0
        %2377 = vmatprep.subr.mxu0 0.0
        %2378 = vmatpush1.msra.mxu0 0.0
        %2379 = vmatprep.subr.mxu0 0.0
        %2380 = vmatpush1.msra.mxu0 0.0
        %2381 = vmatprep.subr.mxu0 0.0
        %2382 = vmatpush1.msra.mxu0 0.0
        %2383 = vmatprep.subr.mxu0 0.0
        %2384 = vmatpush1.msra.mxu0 0.0
        %2385 = vmatprep.subr.mxu0 0.0
        %2386 = vmatpush1.msra.mxu0 0.0
        %2387 = vmatprep.subr.mxu0 0.0
        %2388 = vmatpush1.msra.mxu0 0.0
        %2389 = vmatprep.subr.mxu0 0.0
        %2390 = vmatpush1.msra.mxu0 0.0
        %2391 = vmatprep.subr.mxu0 0.0
        %2392 = vmatpush1.msra.mxu0 0.0
        %2393 = vmatprep.subr.mxu0 0.0
        %2394 = vmatpush1.msra.mxu0 0.0
        %2395 = vmatprep.subr.mxu0 0.0
        %2396 = vmatpush1.msra.mxu0 0.0
        %2397 = vmatprep.subr.mxu0 0.0
        %2398 = vmatpush1.msra.mxu0 0.0
        %2399 = vmatprep.subr.mxu0 0.0
        %2400 = vmatpush1.msra.mxu0 0.0
        %2401 = vmatprep.subr.mxu0 0.0
        %2402 = vmatpush1.msra.mxu0 0.0
        %2403 = vmatprep.subr.mxu0 0.0
        %2404 = vmatpush1.msra.mxu0 0.0
        %2405 = vmatprep.subr.mxu0 0.0
        %2406 = vmatpush1.msra.mxu0 0.0
        %2407 = vmatprep.subr.mxu0 0.0
        %2408 = vmatpush1.msra.mxu0 0.0
        %2409 = vmatprep.subr.mxu0 0.0
        %2410 = vmatpush1.msra.mxu0 0.0
        %2411 = vmatprep.subr.mxu0 0.0
        %2412 = vmatpush1.msra.mxu0 0.0
        %2413 = vmatprep.subr.mxu0 0.0
        %2414 = vmatpush1.msra.mxu0 0.0
        %2415 = vmatprep.subr.mxu0 0.0
        %2416 = vmatpush1.msra.mxu0 0.0
        %2417 = vmatprep.subr.mxu0 0.0
        %2418 = vmatpush1.msra.mxu0 0.0
        %2419 = vmatprep.subr.mxu0 0.0
        %2420 = vmatpush1.msra.mxu0 0.0
        %2421 = vmatprep.subr.mxu0 0.0
        %2422 = vmatpush1.msra.mxu0 0.0
        %2423 = vmatprep.subr.mxu0 0.0
        %2424 = vmatpush1.msra.mxu0 0.0
        %2425 = vmatprep.subr.mxu0 0.0
        %2426 = vmatpush1.msra.mxu0 0.0
        %2427 = vmatprep.subr.mxu0 0.0
        %2428 = vmatpush1.msra.mxu0 0.0
        %2429 = vmatprep.subr.mxu0 0.0
        %2430 = vmatpush1.msra.mxu0 0.0
        %2431 = vmatprep.subr.mxu0 0.0
        %2432 = vmatpush1.msra.mxu0 0.0
        %2433 = vmatprep.subr.mxu0 0.0
        %2434 = vmatpush1.msra.mxu0 0.0
        %2435 = vmatprep.mubr.f32.mxu0 0.0
        %2436 = vmatmul.mubr.f32.gmra.mrb[0].mxu0 %v2366
        %v2437 = vpop.f32.mrb[0].mxu0
        %v2438 = vadd.f32 0.0, %v2437
        %v2439 = vpop.f32.mrb[0].mxu0
        %2440 = vdwg.mxu0
        %v2441 = vadd.f32 %v2362, %v2438
        %s2442 = scalar_lea.vmem %s4, 144
        %v2443 = vld [vmem:[%s2442] sm:$0x1f]
        %v2445 = vsel %vm1024, %v988, 0
        %v2448 = vsel %vm1028, %v2443, 0
        %2450 = vmatprep.subr.mxu0 0.0
        %2451 = vmatpush1.msra.mxu0 %v2448
        %2452 = vmatprep.subr.mxu0 0.0
        %2453 = vmatpush1.msra.mxu0 0.0
        %2454 = vmatprep.subr.mxu0 0.0
        %2455 = vmatpush1.msra.mxu0 0.0
        %2456 = vmatprep.subr.mxu0 0.0
        %2457 = vmatpush1.msra.mxu0 0.0
        %2458 = vmatprep.subr.mxu0 0.0
        %2459 = vmatpush1.msra.mxu0 0.0
        %2460 = vmatprep.subr.mxu0 0.0
        %2461 = vmatpush1.msra.mxu0 0.0
        %2462 = vmatprep.subr.mxu0 0.0
        %2463 = vmatpush1.msra.mxu0 0.0
        %2464 = vmatprep.subr.mxu0 0.0
        %2465 = vmatpush1.msra.mxu0 0.0
        %2466 = vmatprep.subr.mxu0 0.0
        %2467 = vmatpush1.msra.mxu0 0.0
        %2468 = vmatprep.subr.mxu0 0.0
        %2469 = vmatpush1.msra.mxu0 0.0
        %2470 = vmatprep.subr.mxu0 0.0
        %2471 = vmatpush1.msra.mxu0 0.0
        %2472 = vmatprep.subr.mxu0 0.0
        %2473 = vmatpush1.msra.mxu0 0.0
        %2474 = vmatprep.subr.mxu0 0.0
        %2475 = vmatpush1.msra.mxu0 0.0
        %2476 = vmatprep.subr.mxu0 0.0
        %2477 = vmatpush1.msra.mxu0 0.0
        %2478 = vmatprep.subr.mxu0 0.0
        %2479 = vmatpush1.msra.mxu0 0.0
        %2480 = vmatprep.subr.mxu0 0.0
        %2481 = vmatpush1.msra.mxu0 0.0
        %2482 = vmatprep.subr.mxu0 0.0
        %2483 = vmatpush1.msra.mxu0 0.0
        %2484 = vmatprep.subr.mxu0 0.0
        %2485 = vmatpush1.msra.mxu0 0.0
        %2486 = vmatprep.subr.mxu0 0.0
        %2487 = vmatpush1.msra.mxu0 0.0
        %2488 = vmatprep.subr.mxu0 0.0
        %2489 = vmatpush1.msra.mxu0 0.0
        %2490 = vmatprep.subr.mxu0 0.0
        %2491 = vmatpush1.msra.mxu0 0.0
        %2492 = vmatprep.subr.mxu0 0.0
        %2493 = vmatpush1.msra.mxu0 0.0
        %2494 = vmatprep.subr.mxu0 0.0
        %2495 = vmatpush1.msra.mxu0 0.0
        %2496 = vmatprep.subr.mxu0 0.0
        %2497 = vmatpush1.msra.mxu0 0.0
        %2498 = vmatprep.subr.mxu0 0.0
        %2499 = vmatpush1.msra.mxu0 0.0
        %2500 = vmatprep.subr.mxu0 0.0
        %2501 = vmatpush1.msra.mxu0 0.0
        %2502 = vmatprep.subr.mxu0 0.0
        %2503 = vmatpush1.msra.mxu0 0.0
        %2504 = vmatprep.subr.mxu0 0.0
        %2505 = vmatpush1.msra.mxu0 0.0
        %2506 = vmatprep.subr.mxu0 0.0
        %2507 = vmatpush1.msra.mxu0 0.0
        %2508 = vmatprep.subr.mxu0 0.0
        %2509 = vmatpush1.msra.mxu0 0.0
        %2510 = vmatprep.subr.mxu0 0.0
        %2511 = vmatpush1.msra.mxu0 0.0
        %2512 = vmatprep.subr.mxu0 0.0
        %2513 = vmatpush1.msra.mxu0 0.0
        %2514 = vmatprep.mubr.f32.mxu0 0.0
        %2515 = vmatmul.mubr.f32.gmra.mrb[0].mxu0 %v2445
        %v2516 = vpop.f32.mrb[0].mxu0
        %v2517 = vadd.f32 0.0, %v2516
        %v2518 = vpop.f32.mrb[0].mxu0
        %2519 = vdwg.mxu0
        %v2520 = vadd.f32 %v2441, %v2517
        %s2521 = scalar_lea.vmem %s4, 152
        %v2522 = vld [vmem:[%s2521] sm:$0x1f]
        %v2524 = vsel %vm1024, %v993, 0
        %v2527 = vsel %vm1028, %v2522, 0
        %2529 = vmatprep.subr.mxu0 0.0
        %2530 = vmatpush1.msra.mxu0 %v2527
        %2531 = vmatprep.subr.mxu0 0.0
        %2532 = vmatpush1.msra.mxu0 0.0
        %2533 = vmatprep.subr.mxu0 0.0
        %2534 = vmatpush1.msra.mxu0 0.0
        %2535 = vmatprep.subr.mxu0 0.0
        %2536 = vmatpush1.msra.mxu0 0.0
        %2537 = vmatprep.subr.mxu0 0.0
        %2538 = vmatpush1.msra.mxu0 0.0
        %2539 = vmatprep.subr.mxu0 0.0
        %2540 = vmatpush1.msra.mxu0 0.0
        %2541 = vmatprep.subr.mxu0 0.0
        %2542 = vmatpush1.msra.mxu0 0.0
        %2543 = vmatprep.subr.mxu0 0.0
        %2544 = vmatpush1.msra.mxu0 0.0
        %2545 = vmatprep.subr.mxu0 0.0
        %2546 = vmatpush1.msra.mxu0 0.0
        %2547 = vmatprep.subr.mxu0 0.0
        %2548 = vmatpush1.msra.mxu0 0.0
        %2549 = vmatprep.subr.mxu0 0.0
        %2550 = vmatpush1.msra.mxu0 0.0
        %2551 = vmatprep.subr.mxu0 0.0
        %2552 = vmatpush1.msra.mxu0 0.0
        %2553 = vmatprep.subr.mxu0 0.0
        %2554 = vmatpush1.msra.mxu0 0.0
        %2555 = vmatprep.subr.mxu0 0.0
        %2556 = vmatpush1.msra.mxu0 0.0
        %2557 = vmatprep.subr.mxu0 0.0
        %2558 = vmatpush1.msra.mxu0 0.0
        %2559 = vmatprep.subr.mxu0 0.0
        %2560 = vmatpush1.msra.mxu0 0.0
        %2561 = vmatprep.subr.mxu0 0.0
        %2562 = vmatpush1.msra.mxu0 0.0
        %2563 = vmatprep.subr.mxu0 0.0
        %2564 = vmatpush1.msra.mxu0 0.0
        %2565 = vmatprep.subr.mxu0 0.0
        %2566 = vmatpush1.msra.mxu0 0.0
        %2567 = vmatprep.subr.mxu0 0.0
        %2568 = vmatpush1.msra.mxu0 0.0
        %2569 = vmatprep.subr.mxu0 0.0
        %2570 = vmatpush1.msra.mxu0 0.0
        %2571 = vmatprep.subr.mxu0 0.0
        %2572 = vmatpush1.msra.mxu0 0.0
        %2573 = vmatprep.subr.mxu0 0.0
        %2574 = vmatpush1.msra.mxu0 0.0
        %2575 = vmatprep.subr.mxu0 0.0
        %2576 = vmatpush1.msra.mxu0 0.0
        %2577 = vmatprep.subr.mxu0 0.0
        %2578 = vmatpush1.msra.mxu0 0.0
        %2579 = vmatprep.subr.mxu0 0.0
        %2580 = vmatpush1.msra.mxu0 0.0
        %2581 = vmatprep.subr.mxu0 0.0
        %2582 = vmatpush1.msra.mxu0 0.0
        %2583 = vmatprep.subr.mxu0 0.0
        %2584 = vmatpush1.msra.mxu0 0.0
        %2585 = vmatprep.subr.mxu0 0.0
        %2586 = vmatpush1.msra.mxu0 0.0
        %2587 = vmatprep.subr.mxu0 0.0
        %2588 = vmatpush1.msra.mxu0 0.0
        %2589 = vmatprep.subr.mxu0 0.0
        %2590 = vmatpush1.msra.mxu0 0.0
        %2591 = vmatprep.subr.mxu0 0.0
        %2592 = vmatpush1.msra.mxu0 0.0
        %2593 = vmatprep.mubr.f32.mxu0 0.0
        %2594 = vmatmul.mubr.f32.gmra.mrb[0].mxu0 %v2524
        %v2595 = vpop.f32.mrb[0].mxu0
        %v2596 = vadd.f32 0.0, %v2595
        %v2597 = vpop.f32.mrb[0].mxu0
        %2598 = vdwg.mxu0
        %v2599 = vadd.f32 %v2520, %v2596
        %s2600 = scalar_lea.vmem %s4, 160
        %v2601 = vld [vmem:[%s2600] sm:$0x1f]
        %v2603 = vsel %vm1024, %v998, 0
        %v2606 = vsel %vm1028, %v2601, 0
        %2608 = vmatprep.subr.mxu0 0.0
        %2609 = vmatpush1.msra.mxu0 %v2606
        %2610 = vmatprep.subr.mxu0 0.0
        %2611 = vmatpush1.msra.mxu0 0.0
        %2612 = vmatprep.subr.mxu0 0.0
        %2613 = vmatpush1.msra.mxu0 0.0
        %2614 = vmatprep.subr.mxu0 0.0
        %2615 = vmatpush1.msra.mxu0 0.0
        %2616 = vmatprep.subr.mxu0 0.0
        %2617 = vmatpush1.msra.mxu0 0.0
        %2618 = vmatprep.subr.mxu0 0.0
        %2619 = vmatpush1.msra.mxu0 0.0
        %2620 = vmatprep.subr.mxu0 0.0
        %2621 = vmatpush1.msra.mxu0 0.0
        %2622 = vmatprep.subr.mxu0 0.0
        %2623 = vmatpush1.msra.mxu0 0.0
        %2624 = vmatprep.subr.mxu0 0.0
        %2625 = vmatpush1.msra.mxu0 0.0
        %2626 = vmatprep.subr.mxu0 0.0
        %2627 = vmatpush1.msra.mxu0 0.0
        %2628 = vmatprep.subr.mxu0 0.0
        %2629 = vmatpush1.msra.mxu0 0.0
        %2630 = vmatprep.subr.mxu0 0.0
        %2631 = vmatpush1.msra.mxu0 0.0
        %2632 = vmatprep.subr.mxu0 0.0
        %2633 = vmatpush1.msra.mxu0 0.0
        %2634 = vmatprep.subr.mxu0 0.0
        %2635 = vmatpush1.msra.mxu0 0.0
        %2636 = vmatprep.subr.mxu0 0.0
        %2637 = vmatpush1.msra.mxu0 0.0
        %2638 = vmatprep.subr.mxu0 0.0
        %2639 = vmatpush1.msra.mxu0 0.0
        %2640 = vmatprep.subr.mxu0 0.0
        %2641 = vmatpush1.msra.mxu0 0.0
        %2642 = vmatprep.subr.mxu0 0.0
        %2643 = vmatpush1.msra.mxu0 0.0
        %2644 = vmatprep.subr.mxu0 0.0
        %2645 = vmatpush1.msra.mxu0 0.0
        %2646 = vmatprep.subr.mxu0 0.0
        %2647 = vmatpush1.msra.mxu0 0.0
        %2648 = vmatprep.subr.mxu0 0.0
        %2649 = vmatpush1.msra.mxu0 0.0
        %2650 = vmatprep.subr.mxu0 0.0
        %2651 = vmatpush1.msra.mxu0 0.0
        %2652 = vmatprep.subr.mxu0 0.0
        %2653 = vmatpush1.msra.mxu0 0.0
        %2654 = vmatprep.subr.mxu0 0.0
        %2655 = vmatpush1.msra.mxu0 0.0
        %2656 = vmatprep.subr.mxu0 0.0
        %2657 = vmatpush1.msra.mxu0 0.0
        %2658 = vmatprep.subr.mxu0 0.0
        %2659 = vmatpush1.msra.mxu0 0.0
        %2660 = vmatprep.subr.mxu0 0.0
        %2661 = vmatpush1.msra.mxu0 0.0
        %2662 = vmatprep.subr.mxu0 0.0
        %2663 = vmatpush1.msra.mxu0 0.0
        %2664 = vmatprep.subr.mxu0 0.0
        %2665 = vmatpush1.msra.mxu0 0.0
        %2666 = vmatprep.subr.mxu0 0.0
        %2667 = vmatpush1.msra.mxu0 0.0
        %2668 = vmatprep.subr.mxu0 0.0
        %2669 = vmatpush1.msra.mxu0 0.0
        %2670 = vmatprep.subr.mxu0 0.0
        %2671 = vmatpush1.msra.mxu0 0.0
        %2672 = vmatprep.mubr.f32.mxu0 0.0
        %2673 = vmatmul.mubr.f32.gmra.mrb[0].mxu0 %v2603
        %v2674 = vpop.f32.mrb[0].mxu0
        %v2675 = vadd.f32 0.0, %v2674
        %v2676 = vpop.f32.mrb[0].mxu0
        %2677 = vdwg.mxu0
        %v2678 = vadd.f32 %v2599, %v2675
        %s2679 = scalar_lea.vmem %s4, 168
        %v2680 = vld [vmem:[%s2679] sm:$0x1f]
        %v2682 = vsel %vm1024, %v1003, 0
        %v2685 = vsel %vm1028, %v2680, 0
        %2687 = vmatprep.subr.mxu0 0.0
        %2688 = vmatpush1.msra.mxu0 %v2685
        %2689 = vmatprep.subr.mxu0 0.0
        %2690 = vmatpush1.msra.mxu0 0.0
        %2691 = vmatprep.subr.mxu0 0.0
        %2692 = vmatpush1.msra.mxu0 0.0
        %2693 = vmatprep.subr.mxu0 0.0
        %2694 = vmatpush1.msra.mxu0 0.0
        %2695 = vmatprep.subr.mxu0 0.0
        %2696 = vmatpush1.msra.mxu0 0.0
        %2697 = vmatprep.subr.mxu0 0.0
        %2698 = vmatpush1.msra.mxu0 0.0
        %2699 = vmatprep.subr.mxu0 0.0
        %2700 = vmatpush1.msra.mxu0 0.0
        %2701 = vmatprep.subr.mxu0 0.0
        %2702 = vmatpush1.msra.mxu0 0.0
        %2703 = vmatprep.subr.mxu0 0.0
        %2704 = vmatpush1.msra.mxu0 0.0
        %2705 = vmatprep.subr.mxu0 0.0
        %2706 = vmatpush1.msra.mxu0 0.0
        %2707 = vmatprep.subr.mxu0 0.0
        %2708 = vmatpush1.msra.mxu0 0.0
        %2709 = vmatprep.subr.mxu0 0.0
        %2710 = vmatpush1.msra.mxu0 0.0
        %2711 = vmatprep.subr.mxu0 0.0
        %2712 = vmatpush1.msra.mxu0 0.0
        %2713 = vmatprep.subr.mxu0 0.0
        %2714 = vmatpush1.msra.mxu0 0.0
        %2715 = vmatprep.subr.mxu0 0.0
        %2716 = vmatpush1.msra.mxu0 0.0
        %2717 = vmatprep.subr.mxu0 0.0
        %2718 = vmatpush1.msra.mxu0 0.0
        %2719 = vmatprep.subr.mxu0 0.0
        %2720 = vmatpush1.msra.mxu0 0.0
        %2721 = vmatprep.subr.mxu0 0.0
        %2722 = vmatpush1.msra.mxu0 0.0
        %2723 = vmatprep.subr.mxu0 0.0
        %2724 = vmatpush1.msra.mxu0 0.0
        %2725 = vmatprep.subr.mxu0 0.0
        %2726 = vmatpush1.msra.mxu0 0.0
        %2727 = vmatprep.subr.mxu0 0.0
        %2728 = vmatpush1.msra.mxu0 0.0
        %2729 = vmatprep.subr.mxu0 0.0
        %2730 = vmatpush1.msra.mxu0 0.0
        %2731 = vmatprep.subr.mxu0 0.0
        %2732 = vmatpush1.msra.mxu0 0.0
        %2733 = vmatprep.subr.mxu0 0.0
        %2734 = vmatpush1.msra.mxu0 0.0
        %2735 = vmatprep.subr.mxu0 0.0
        %2736 = vmatpush1.msra.mxu0 0.0
        %2737 = vmatprep.subr.mxu0 0.0
        %2738 = vmatpush1.msra.mxu0 0.0
        %2739 = vmatprep.subr.mxu0 0.0
        %2740 = vmatpush1.msra.mxu0 0.0
        %2741 = vmatprep.subr.mxu0 0.0
        %2742 = vmatpush1.msra.mxu0 0.0
        %2743 = vmatprep.subr.mxu0 0.0
        %2744 = vmatpush1.msra.mxu0 0.0
        %2745 = vmatprep.subr.mxu0 0.0
        %2746 = vmatpush1.msra.mxu0 0.0
        %2747 = vmatprep.subr.mxu0 0.0
        %2748 = vmatpush1.msra.mxu0 0.0
        %2749 = vmatprep.subr.mxu0 0.0
        %2750 = vmatpush1.msra.mxu0 0.0
        %2751 = vmatprep.mubr.f32.mxu0 0.0
        %2752 = vmatmul.mubr.f32.gmra.mrb[0].mxu0 %v2682
        %v2753 = vpop.f32.mrb[0].mxu0
        %v2754 = vadd.f32 0.0, %v2753
        %v2755 = vpop.f32.mrb[0].mxu0
        %2756 = vdwg.mxu0
        %v2757 = vadd.f32 %v2678, %v2754
        %s2758 = scalar_lea.vmem %s4, 176
        %v2759 = vld [vmem:[%s2758] sm:$0x1f]
        %v2761 = vsel %vm1024, %v1008, 0
        %v2764 = vsel %vm1028, %v2759, 0
        %2766 = vmatprep.subr.mxu0 0.0
        %2767 = vmatpush1.msra.mxu0 %v2764
        %2768 = vmatprep.subr.mxu0 0.0
        %2769 = vmatpush1.msra.mxu0 0.0
        %2770 = vmatprep.subr.mxu0 0.0
        %2771 = vmatpush1.msra.mxu0 0.0
        %2772 = vmatprep.subr.mxu0 0.0
        %2773 = vmatpush1.msra.mxu0 0.0
        %2774 = vmatprep.subr.mxu0 0.0
        %2775 = vmatpush1.msra.mxu0 0.0
        %2776 = vmatprep.subr.mxu0 0.0
        %2777 = vmatpush1.msra.mxu0 0.0
        %2778 = vmatprep.subr.mxu0 0.0
        %2779 = vmatpush1.msra.mxu0 0.0
        %2780 = vmatprep.subr.mxu0 0.0
        %2781 = vmatpush1.msra.mxu0 0.0
        %2782 = vmatprep.subr.mxu0 0.0
        %2783 = vmatpush1.msra.mxu0 0.0
        %2784 = vmatprep.subr.mxu0 0.0
        %2785 = vmatpush1.msra.mxu0 0.0
        %2786 = vmatprep.subr.mxu0 0.0
        %2787 = vmatpush1.msra.mxu0 0.0
        %2788 = vmatprep.subr.mxu0 0.0
        %2789 = vmatpush1.msra.mxu0 0.0
        %2790 = vmatprep.subr.mxu0 0.0
        %2791 = vmatpush1.msra.mxu0 0.0
        %2792 = vmatprep.subr.mxu0 0.0
        %2793 = vmatpush1.msra.mxu0 0.0
        %2794 = vmatprep.subr.mxu0 0.0
        %2795 = vmatpush1.msra.mxu0 0.0
        %2796 = vmatprep.subr.mxu0 0.0
        %2797 = vmatpush1.msra.mxu0 0.0
        %2798 = vmatprep.subr.mxu0 0.0
        %2799 = vmatpush1.msra.mxu0 0.0
        %2800 = vmatprep.subr.mxu0 0.0
        %2801 = vmatpush1.msra.mxu0 0.0
        %2802 = vmatprep.subr.mxu0 0.0
        %2803 = vmatpush1.msra.mxu0 0.0
        %2804 = vmatprep.subr.mxu0 0.0
        %2805 = vmatpush1.msra.mxu0 0.0
        %2806 = vmatprep.subr.mxu0 0.0
        %2807 = vmatpush1.msra.mxu0 0.0
        %2808 = vmatprep.subr.mxu0 0.0
        %2809 = vmatpush1.msra.mxu0 0.0
        %2810 = vmatprep.subr.mxu0 0.0
        %2811 = vmatpush1.msra.mxu0 0.0
        %2812 = vmatprep.subr.mxu0 0.0
        %2813 = vmatpush1.msra.mxu0 0.0
        %2814 = vmatprep.subr.mxu0 0.0
        %2815 = vmatpush1.msra.mxu0 0.0
        %2816 = vmatprep.subr.mxu0 0.0
        %2817 = vmatpush1.msra.mxu0 0.0
        %2818 = vmatprep.subr.mxu0 0.0
        %2819 = vmatpush1.msra.mxu0 0.0
        %2820 = vmatprep.subr.mxu0 0.0
        %2821 = vmatpush1.msra.mxu0 0.0
        %2822 = vmatprep.subr.mxu0 0.0
        %2823 = vmatpush1.msra.mxu0 0.0
        %2824 = vmatprep.subr.mxu0 0.0
        %2825 = vmatpush1.msra.mxu0 0.0
        %2826 = vmatprep.subr.mxu0 0.0
        %2827 = vmatpush1.msra.mxu0 0.0
        %2828 = vmatprep.subr.mxu0 0.0
        %2829 = vmatpush1.msra.mxu0 0.0
        %2830 = vmatprep.mubr.f32.mxu0 0.0
        %2831 = vmatmul.mubr.f32.gmra.mrb[0].mxu0 %v2761
        %v2832 = vpop.f32.mrb[0].mxu0
        %v2833 = vadd.f32 0.0, %v2832
        %v2834 = vpop.f32.mrb[0].mxu0
        %2835 = vdwg.mxu0
        %v2836 = vadd.f32 %v2757, %v2833
        %s2837 = scalar_lea.vmem %s4, 184
        %v2838 = vld [vmem:[%s2837] sm:$0x1f]
        %v2840 = vsel %vm1024, %v1013, 0
        %v2843 = vsel %vm1028, %v2838, 0
        %2845 = vmatprep.subr.mxu0 0.0
        %2846 = vmatpush1.msra.mxu0 %v2843
        %2847 = vmatprep.subr.mxu0 0.0
        %2848 = vmatpush1.msra.mxu0 0.0
        %2849 = vmatprep.subr.mxu0 0.0
        %2850 = vmatpush1.msra.mxu0 0.0
        %2851 = vmatprep.subr.mxu0 0.0
        %2852 = vmatpush1.msra.mxu0 0.0
        %2853 = vmatprep.subr.mxu0 0.0
        %2854 = vmatpush1.msra.mxu0 0.0
        %2855 = vmatprep.subr.mxu0 0.0
        %2856 = vmatpush1.msra.mxu0 0.0
        %2857 = vmatprep.subr.mxu0 0.0
        %2858 = vmatpush1.msra.mxu0 0.0
        %2859 = vmatprep.subr.mxu0 0.0
        %2860 = vmatpush1.msra.mxu0 0.0
        %2861 = vmatprep.subr.mxu0 0.0
        %2862 = vmatpush1.msra.mxu0 0.0
        %2863 = vmatprep.subr.mxu0 0.0
        %2864 = vmatpush1.msra.mxu0 0.0
        %2865 = vmatprep.subr.mxu0 0.0
        %2866 = vmatpush1.msra.mxu0 0.0
        %2867 = vmatprep.subr.mxu0 0.0
        %2868 = vmatpush1.msra.mxu0 0.0
        %2869 = vmatprep.subr.mxu0 0.0
        %2870 = vmatpush1.msra.mxu0 0.0
        %2871 = vmatprep.subr.mxu0 0.0
        %2872 = vmatpush1.msra.mxu0 0.0
        %2873 = vmatprep.subr.mxu0 0.0
        %2874 = vmatpush1.msra.mxu0 0.0
        %2875 = vmatprep.subr.mxu0 0.0
        %2876 = vmatpush1.msra.mxu0 0.0
        %2877 = vmatprep.subr.mxu0 0.0
        %2878 = vmatpush1.msra.mxu0 0.0
        %2879 = vmatprep.subr.mxu0 0.0
        %2880 = vmatpush1.msra.mxu0 0.0
        %2881 = vmatprep.subr.mxu0 0.0
        %2882 = vmatpush1.msra.mxu0 0.0
        %2883 = vmatprep.subr.mxu0 0.0
        %2884 = vmatpush1.msra.mxu0 0.0
        %2885 = vmatprep.subr.mxu0 0.0
        %2886 = vmatpush1.msra.mxu0 0.0
        %2887 = vmatprep.subr.mxu0 0.0
        %2888 = vmatpush1.msra.mxu0 0.0
        %2889 = vmatprep.subr.mxu0 0.0
        %2890 = vmatpush1.msra.mxu0 0.0
        %2891 = vmatprep.subr.mxu0 0.0
        %2892 = vmatpush1.msra.mxu0 0.0
        %2893 = vmatprep.subr.mxu0 0.0
        %2894 = vmatpush1.msra.mxu0 0.0
        %2895 = vmatprep.subr.mxu0 0.0
        %2896 = vmatpush1.msra.mxu0 0.0
        %2897 = vmatprep.subr.mxu0 0.0
        %2898 = vmatpush1.msra.mxu0 0.0
        %2899 = vmatprep.subr.mxu0 0.0
        %2900 = vmatpush1.msra.mxu0 0.0
        %2901 = vmatprep.subr.mxu0 0.0
        %2902 = vmatpush1.msra.mxu0 0.0
        %2903 = vmatprep.subr.mxu0 0.0
        %2904 = vmatpush1.msra.mxu0 0.0
        %2905 = vmatprep.subr.mxu0 0.0
        %2906 = vmatpush1.msra.mxu0 0.0
        %2907 = vmatprep.subr.mxu0 0.0
        %2908 = vmatpush1.msra.mxu0 0.0
        %2909 = vmatprep.mubr.f32.mxu0 0.0
        %2910 = vmatmul.mubr.f32.gmra.mrb[0].mxu0 %v2840
        %v2911 = vpop.f32.mrb[0].mxu0
        %v2912 = vadd.f32 0.0, %v2911
        %v2913 = vpop.f32.mrb[0].mxu0
        %2914 = vdwg.mxu0
        %v2915 = vadd.f32 %v2836, %v2912
        %s2916 = scalar_lea.vmem %s4, 192
        %v2917 = vld [vmem:[%s2916] sm:$0x1f]
        %v2919 = vsel %vm1024, %v1018, 0
        %v2922 = vsel %vm1028, %v2917, 0
        %2924 = vmatprep.subr.mxu0 0.0
        %2925 = vmatpush1.msra.mxu0 %v2922
        %2926 = vmatprep.subr.mxu0 0.0
        %2927 = vmatpush1.msra.mxu0 0.0
        %2928 = vmatprep.subr.mxu0 0.0
        %2929 = vmatpush1.msra.mxu0 0.0
        %2930 = vmatprep.subr.mxu0 0.0
        %2931 = vmatpush1.msra.mxu0 0.0
        %2932 = vmatprep.subr.mxu0 0.0
        %2933 = vmatpush1.msra.mxu0 0.0
        %2934 = vmatprep.subr.mxu0 0.0
        %2935 = vmatpush1.msra.mxu0 0.0
        %2936 = vmatprep.subr.mxu0 0.0
        %2937 = vmatpush1.msra.mxu0 0.0
        %2938 = vmatprep.subr.mxu0 0.0
        %2939 = vmatpush1.msra.mxu0 0.0
        %2940 = vmatprep.subr.mxu0 0.0
        %2941 = vmatpush1.msra.mxu0 0.0
        %2942 = vmatprep.subr.mxu0 0.0
        %2943 = vmatpush1.msra.mxu0 0.0
        %2944 = vmatprep.subr.mxu0 0.0
        %2945 = vmatpush1.msra.mxu0 0.0
        %2946 = vmatprep.subr.mxu0 0.0
        %2947 = vmatpush1.msra.mxu0 0.0
        %2948 = vmatprep.subr.mxu0 0.0
        %2949 = vmatpush1.msra.mxu0 0.0
        %2950 = vmatprep.subr.mxu0 0.0
        %2951 = vmatpush1.msra.mxu0 0.0
        %2952 = vmatprep.subr.mxu0 0.0
        %2953 = vmatpush1.msra.mxu0 0.0
        %2954 = vmatprep.subr.mxu0 0.0
        %2955 = vmatpush1.msra.mxu0 0.0
        %2956 = vmatprep.subr.mxu0 0.0
        %2957 = vmatpush1.msra.mxu0 0.0
        %2958 = vmatprep.subr.mxu0 0.0
        %2959 = vmatpush1.msra.mxu0 0.0
        %2960 = vmatprep.subr.mxu0 0.0
        %2961 = vmatpush1.msra.mxu0 0.0
        %2962 = vmatprep.subr.mxu0 0.0
        %2963 = vmatpush1.msra.mxu0 0.0
        %2964 = vmatprep.subr.mxu0 0.0
        %2965 = vmatpush1.msra.mxu0 0.0
        %2966 = vmatprep.subr.mxu0 0.0
        %2967 = vmatpush1.msra.mxu0 0.0
        %2968 = vmatprep.subr.mxu0 0.0
        %2969 = vmatpush1.msra.mxu0 0.0
        %2970 = vmatprep.subr.mxu0 0.0
        %2971 = vmatpush1.msra.mxu0 0.0
        %2972 = vmatprep.subr.mxu0 0.0
        %2973 = vmatpush1.msra.mxu0 0.0
        %2974 = vmatprep.subr.mxu0 0.0
        %2975 = vmatpush1.msra.mxu0 0.0
        %2976 = vmatprep.subr.mxu0 0.0
        %2977 = vmatpush1.msra.mxu0 0.0
        %2978 = vmatprep.subr.mxu0 0.0
        %2979 = vmatpush1.msra.mxu0 0.0
        %2980 = vmatprep.subr.mxu0 0.0
        %2981 = vmatpush1.msra.mxu0 0.0
        %2982 = vmatprep.subr.mxu0 0.0
        %2983 = vmatpush1.msra.mxu0 0.0
        %2984 = vmatprep.subr.mxu0 0.0
        %2985 = vmatpush1.msra.mxu0 0.0
        %2986 = vmatprep.subr.mxu0 0.0
        %2987 = vmatpush1.msra.mxu0 0.0
        %2988 = vmatprep.mubr.f32.mxu0 0.0
        %2989 = vmatmul.mubr.f32.gmra.mrb[0].mxu0 %v2919
        %v2990 = vpop.f32.mrb[0].mxu0
        %v2991 = vadd.f32 0.0, %v2990
        %v2992 = vpop.f32.mrb[0].mxu0
        %2993 = vdwg.mxu0
        %v2994 = vadd.f32 %v2915, %v2991
        %v2995 = vld [vmem:[%s5] sm:$0x1]
        %v2997 = vlaneseq
        %v2998 = vshrl.u32 %v2997, 7
        %v2999 = vsub.s32 0, %v2998
        %v3000 = vrot.slane %v2995, %v2999
        %v3002 = vadd.f32 %v2994, %v3000
        %v3003 = vmax.f32 %v3002, 0.0
        %v3004 = vld [vmem:[%s6] sm:$0x1]
        %vm3005 = vcmask 64512
        %v3007 = vsel %vm3005, %v3004, 0
        %3009 = vmatprep.subr.mxu0 0.0
        %3010 = vmatpush1.msra.mxu0 %v3003
        %3011 = vmatprep.subr.mxu0 0.0
        %3012 = vmatpush1.msra.mxu0 0.0
        %3013 = vmatprep.subr.mxu0 0.0
        %3014 = vmatpush1.msra.mxu0 0.0
        %3015 = vmatprep.subr.mxu0 0.0
        %3016 = vmatpush1.msra.mxu0 0.0
        %3017 = vmatprep.subr.mxu0 0.0
        %3018 = vmatpush1.msra.mxu0 0.0
        %3019 = vmatprep.subr.mxu0 0.0
        %3020 = vmatpush1.msra.mxu0 0.0
        %3021 = vmatprep.subr.mxu0 0.0
        %3022 = vmatpush1.msra.mxu0 0.0
        %3023 = vmatprep.subr.mxu0 0.0
        %3024 = vmatpush1.msra.mxu0 0.0
        %3025 = vmatprep.subr.mxu0 0.0
        %3026 = vmatpush1.msra.mxu0 0.0
        %3027 = vmatprep.subr.mxu0 0.0
        %3028 = vmatpush1.msra.mxu0 0.0
        %3029 = vmatprep.subr.mxu0 0.0
        %3030 = vmatpush1.msra.mxu0 0.0
        %3031 = vmatprep.subr.mxu0 0.0
        %3032 = vmatpush1.msra.mxu0 0.0
        %3033 = vmatprep.subr.mxu0 0.0
        %3034 = vmatpush1.msra.mxu0 0.0
        %3035 = vmatprep.subr.mxu0 0.0
        %3036 = vmatpush1.msra.mxu0 0.0
        %3037 = vmatprep.subr.mxu0 0.0
        %3038 = vmatpush1.msra.mxu0 0.0
        %3039 = vmatprep.subr.mxu0 0.0
        %3040 = vmatpush1.msra.mxu0 0.0
        %3041 = vmatprep.subr.mxu0 0.0
        %3042 = vmatpush1.msra.mxu0 0.0
        %3043 = vmatprep.subr.mxu0 0.0
        %3044 = vmatpush1.msra.mxu0 0.0
        %3045 = vmatprep.subr.mxu0 0.0
        %3046 = vmatpush1.msra.mxu0 0.0
        %3047 = vmatprep.subr.mxu0 0.0
        %3048 = vmatpush1.msra.mxu0 0.0
        %3049 = vmatprep.subr.mxu0 0.0
        %3050 = vmatpush1.msra.mxu0 0.0
        %3051 = vmatprep.subr.mxu0 0.0
        %3052 = vmatpush1.msra.mxu0 0.0
        %3053 = vmatprep.subr.mxu0 0.0
        %3054 = vmatpush1.msra.mxu0 0.0
        %3055 = vmatprep.subr.mxu0 0.0
        %3056 = vmatpush1.msra.mxu0 0.0
        %3057 = vmatprep.subr.mxu0 0.0
        %3058 = vmatpush1.msra.mxu0 0.0
        %3059 = vmatprep.subr.mxu0 0.0
        %3060 = vmatpush1.msra.mxu0 0.0
        %3061 = vmatprep.subr.mxu0 0.0
        %3062 = vmatpush1.msra.mxu0 0.0
        %3063 = vmatprep.subr.mxu0 0.0
        %3064 = vmatpush1.msra.mxu0 0.0
        %3065 = vmatprep.subr.mxu0 0.0
        %3066 = vmatpush1.msra.mxu0 0.0
        %3067 = vmatprep.subr.mxu0 0.0
        %3068 = vmatpush1.msra.mxu0 0.0
        %3069 = vmatprep.subr.mxu0 0.0
        %3070 = vmatpush1.msra.mxu0 0.0
        %3071 = vmatprep.subr.mxu0 0.0
        %3072 = vmatpush1.msra.mxu0 0.0
        %3073 = vmatprep.mubr.f32.mxu0 0.0
        %3074 = vmatmul.mubr.f32.gmra.mrb[0].mxu0 %v3007
        %v3075 = vpop.f32.mrb[0].mxu0
        %v3076 = vadd.f32 0.0, %v3075
        %v3077 = vpop.f32.mrb[0].mxu0
        %3078 = vdwg.mxu0
        %v3079 = vld [vmem:[%s8] sm:$0x1]
        %v3080 = vld [vmem:[%s7] sm:$0xff]
        %v3081 = vld [vmem:[%s7 + $0x8] sm:$0x3]
        %vm3082 = vcmask 80896
        %v3084 = vsel %vm3082, %v3076, 0
        %vm3086 = vcmask 1041408
        %v3088 = vsel %vm3086, %v3081, 0
        %3090 = vmatprep.subr.mxu0 0.0
        %3091 = vmatpush1.msra.mxu0 %v3080
        %3092 = vmatprep.subr.mxu0 0.0
        %3093 = vmatpush1.msra.mxu0 %v3088
        %3094 = vmatprep.subr.mxu0 0.0
        %3095 = vmatpush1.msra.mxu0 0.0
        %3096 = vmatprep.subr.mxu0 0.0
        %3097 = vmatpush1.msra.mxu0 0.0
        %3098 = vmatprep.subr.mxu0 0.0
        %3099 = vmatpush1.msra.mxu0 0.0
        %3100 = vmatprep.subr.mxu0 0.0
        %3101 = vmatpush1.msra.mxu0 0.0
        %3102 = vmatprep.subr.mxu0 0.0
        %3103 = vmatpush1.msra.mxu0 0.0
        %3104 = vmatprep.subr.mxu0 0.0
        %3105 = vmatpush1.msra.mxu0 0.0
        %3106 = vmatprep.subr.mxu0 0.0
        %3107 = vmatpush1.msra.mxu0 0.0
        %3108 = vmatprep.subr.mxu0 0.0
        %3109 = vmatpush1.msra.mxu0 0.0
        %3110 = vmatprep.subr.mxu0 0.0
        %3111 = vmatpush1.msra.mxu0 0.0
        %3112 = vmatprep.subr.mxu0 0.0
        %3113 = vmatpush1.msra.mxu0 0.0
        %3114 = vmatprep.subr.mxu0 0.0
        %3115 = vmatpush1.msra.mxu0 0.0
        %3116 = vmatprep.subr.mxu0 0.0
        %3117 = vmatpush1.msra.mxu0 0.0
        %3118 = vmatprep.subr.mxu0 0.0
        %3119 = vmatpush1.msra.mxu0 0.0
        %3120 = vmatprep.subr.mxu0 0.0
        %3121 = vmatpush1.msra.mxu0 0.0
        %3122 = vmatprep.subr.mxu0 0.0
        %3123 = vmatpush1.msra.mxu0 0.0
        %3124 = vmatprep.subr.mxu0 0.0
        %3125 = vmatpush1.msra.mxu0 0.0
        %3126 = vmatprep.subr.mxu0 0.0
        %3127 = vmatpush1.msra.mxu0 0.0
        %3128 = vmatprep.subr.mxu0 0.0
        %3129 = vmatpush1.msra.mxu0 0.0
        %3130 = vmatprep.subr.mxu0 0.0
        %3131 = vmatpush1.msra.mxu0 0.0
        %3132 = vmatprep.subr.mxu0 0.0
        %3133 = vmatpush1.msra.mxu0 0.0
        %3134 = vmatprep.subr.mxu0 0.0
        %3135 = vmatpush1.msra.mxu0 0.0
        %3136 = vmatprep.subr.mxu0 0.0
        %3137 = vmatpush1.msra.mxu0 0.0
        %3138 = vmatprep.subr.mxu0 0.0
        %3139 = vmatpush1.msra.mxu0 0.0
        %3140 = vmatprep.subr.mxu0 0.0
        %3141 = vmatpush1.msra.mxu0 0.0
        %3142 = vmatprep.subr.mxu0 0.0
        %3143 = vmatpush1.msra.mxu0 0.0
        %3144 = vmatprep.subr.mxu0 0.0
        %3145 = vmatpush1.msra.mxu0 0.0
        %3146 = vmatprep.subr.mxu0 0.0
        %3147 = vmatpush1.msra.mxu0 0.0
        %3148 = vmatprep.subr.mxu0 0.0
        %3149 = vmatpush1.msra.mxu0 0.0
        %3150 = vmatprep.subr.mxu0 0.0
        %3151 = vmatpush1.msra.mxu0 0.0
        %3152 = vmatprep.subr.mxu0 0.0
        %3153 = vmatpush1.msra.mxu0 0.0
        %3154 = vmatprep.mubr.f32.mxu0 0.0
        %3155 = vmatmul.mubr.f32.gmra.mrb[0].mxu0 %v3084
        %v3156 = vpop.f32.mrb[0].mxu0
        %v3157 = vadd.f32 0.0, %v3156
        %v3158 = vpop.f32.mrb[0].mxu0
        %3159 = vdwg.mxu0
        %v3160 = vadd.f32 %v3079, %v3157
        %v3161 = vmax.f32 %v3160, 0.0
        %v3162 = vld [vmem:[%s9] sm:$0xff]
        %v3163 = vld [vmem:[%s9 + $0x8] sm:$0xff]
        %v3164 = vld [vmem:[%s9 + $0x10] sm:$0xff]
        %v3165 = vld [vmem:[%s9 + $0x18] sm:$0xff]
        %v3166 = vld [vmem:[%s10] sm:$0x1]
        %vm3167 = vcmask 261120
        %v3169 = vsel %vm3167, %v3161, 0
        %3171 = vmatprep.subr.mxu0 0.0
        %3172 = vmatpush1.msra.mxu0 %v3162
        %3173 = vmatprep.subr.mxu0 0.0
        %3174 = vmatpush1.msra.mxu0 %v3163
        %3175 = vmatprep.subr.mxu0 0.0
        %3176 = vmatpush1.msra.mxu0 %v3164
        %3177 = vmatprep.subr.mxu0 0.0
        %3178 = vmatpush1.msra.mxu0 %v3165
        %3179 = vmatprep.subr.mxu0 0.0
        %3180 = vmatpush1.msra.mxu0 0.0
        %3181 = vmatprep.subr.mxu0 0.0
        %3182 = vmatpush1.msra.mxu0 0.0
        %3183 = vmatprep.subr.mxu0 0.0
        %3184 = vmatpush1.msra.mxu0 0.0
        %3185 = vmatprep.subr.mxu0 0.0
        %3186 = vmatpush1.msra.mxu0 0.0
        %3187 = vmatprep.subr.mxu0 0.0
        %3188 = vmatpush1.msra.mxu0 0.0
        %3189 = vmatprep.subr.mxu0 0.0
        %3190 = vmatpush1.msra.mxu0 0.0
        %3191 = vmatprep.subr.mxu0 0.0
        %3192 = vmatpush1.msra.mxu0 0.0
        %3193 = vmatprep.subr.mxu0 0.0
        %3194 = vmatpush1.msra.mxu0 0.0
        %3195 = vmatprep.subr.mxu0 0.0
        %3196 = vmatpush1.msra.mxu0 0.0
        %3197 = vmatprep.subr.mxu0 0.0
        %3198 = vmatpush1.msra.mxu0 0.0
        %3199 = vmatprep.subr.mxu0 0.0
        %3200 = vmatpush1.msra.mxu0 0.0
        %3201 = vmatprep.subr.mxu0 0.0
        %3202 = vmatpush1.msra.mxu0 0.0
        %3203 = vmatprep.subr.mxu0 0.0
        %3204 = vmatpush1.msra.mxu0 0.0
        %3205 = vmatprep.subr.mxu0 0.0
        %3206 = vmatpush1.msra.mxu0 0.0
        %3207 = vmatprep.subr.mxu0 0.0
        %3208 = vmatpush1.msra.mxu0 0.0
        %3209 = vmatprep.subr.mxu0 0.0
        %3210 = vmatpush1.msra.mxu0 0.0
        %3211 = vmatprep.subr.mxu0 0.0
        %3212 = vmatpush1.msra.mxu0 0.0
        %3213 = vmatprep.subr.mxu0 0.0
        %3214 = vmatpush1.msra.mxu0 0.0
        %3215 = vmatprep.subr.mxu0 0.0
        %3216 = vmatpush1.msra.mxu0 0.0
        %3217 = vmatprep.subr.mxu0 0.0
        %3218 = vmatpush1.msra.mxu0 0.0
        %3219 = vmatprep.subr.mxu0 0.0
        %3220 = vmatpush1.msra.mxu0 0.0
        %3221 = vmatprep.subr.mxu0 0.0
        %3222 = vmatpush1.msra.mxu0 0.0
        %3223 = vmatprep.subr.mxu0 0.0
        %3224 = vmatpush1.msra.mxu0 0.0
        %3225 = vmatprep.subr.mxu0 0.0
        %3226 = vmatpush1.msra.mxu0 0.0
        %3227 = vmatprep.subr.mxu0 0.0
        %3228 = vmatpush1.msra.mxu0 0.0
        %3229 = vmatprep.subr.mxu0 0.0
        %3230 = vmatpush1.msra.mxu0 0.0
        %3231 = vmatprep.subr.mxu0 0.0
        %3232 = vmatpush1.msra.mxu0 0.0
        %3233 = vmatprep.subr.mxu0 0.0
        %3234 = vmatpush1.msra.mxu0 0.0
        %3235 = vmatprep.mubr.f32.mxu0 0.0
        %3236 = vmatmul.mubr.f32.gmra.mrb[0].mxu0 %v3169
        %v3237 = vpop.f32.mrb[0].mxu0
        %v3238 = vadd.f32 %v3166, %v3237
        %v3239 = vpop.f32.mrb[0].mxu0
        %3240 = vdwg.mxu0
        %v3241 = vmax.f32 %v3238, 0.0
        %v3242 = vld [vmem:[%s11] sm:$0xff]
        %v3243 = vld [vmem:[%s11 + $0x8] sm:$0xff]
        %v3244 = vld [vmem:[%s11 + $0x10] sm:$0xff]
        %v3245 = vld [vmem:[%s11 + $0x18] sm:$0xff]
        %v3246 = vld [vmem:[%s12] sm:$0x1]
        %v3248 = vsel %vm3167, %v3241, 0
        %3250 = vmatprep.subr.mxu0 0.0
        %3251 = vmatpush1.msra.mxu0 %v3242
        %3252 = vmatprep.subr.mxu0 0.0
        %3253 = vmatpush1.msra.mxu0 %v3243
        %3254 = vmatprep.subr.mxu0 0.0
        %3255 = vmatpush1.msra.mxu0 %v3244
        %3256 = vmatprep.subr.mxu0 0.0
        %3257 = vmatpush1.msra.mxu0 %v3245
        %3258 = vmatprep.subr.mxu0 0.0
        %3259 = vmatpush1.msra.mxu0 0.0
        %3260 = vmatprep.subr.mxu0 0.0
        %3261 = vmatpush1.msra.mxu0 0.0
        %3262 = vmatprep.subr.mxu0 0.0
        %3263 = vmatpush1.msra.mxu0 0.0
        %3264 = vmatprep.subr.mxu0 0.0
        %3265 = vmatpush1.msra.mxu0 0.0
        %3266 = vmatprep.subr.mxu0 0.0
        %3267 = vmatpush1.msra.mxu0 0.0
        %3268 = vmatprep.subr.mxu0 0.0
        %3269 = vmatpush1.msra.mxu0 0.0
        %3270 = vmatprep.subr.mxu0 0.0
        %3271 = vmatpush1.msra.mxu0 0.0
        %3272 = vmatprep.subr.mxu0 0.0
        %3273 = vmatpush1.msra.mxu0 0.0
        %3274 = vmatprep.subr.mxu0 0.0
        %3275 = vmatpush1.msra.mxu0 0.0
        %3276 = vmatprep.subr.mxu0 0.0
        %3277 = vmatpush1.msra.mxu0 0.0
        %3278 = vmatprep.subr.mxu0 0.0
        %3279 = vmatpush1.msra.mxu0 0.0
        %3280 = vmatprep.subr.mxu0 0.0
        %3281 = vmatpush1.msra.mxu0 0.0
        %3282 = vmatprep.subr.mxu0 0.0
        %3283 = vmatpush1.msra.mxu0 0.0
        %3284 = vmatprep.subr.mxu0 0.0
        %3285 = vmatpush1.msra.mxu0 0.0
        %3286 = vmatprep.subr.mxu0 0.0
        %3287 = vmatpush1.msra.mxu0 0.0
        %3288 = vmatprep.subr.mxu0 0.0
        %3289 = vmatpush1.msra.mxu0 0.0
        %3290 = vmatprep.subr.mxu0 0.0
        %3291 = vmatpush1.msra.mxu0 0.0
        %3292 = vmatprep.subr.mxu0 0.0
        %3293 = vmatpush1.msra.mxu0 0.0
        %3294 = vmatprep.subr.mxu0 0.0
        %3295 = vmatpush1.msra.mxu0 0.0
        %3296 = vmatprep.subr.mxu0 0.0
        %3297 = vmatpush1.msra.mxu0 0.0
        %3298 = vmatprep.subr.mxu0 0.0
        %3299 = vmatpush1.msra.mxu0 0.0
        %3300 = vmatprep.subr.mxu0 0.0
        %3301 = vmatpush1.msra.mxu0 0.0
        %3302 = vmatprep.subr.mxu0 0.0
        %3303 = vmatpush1.msra.mxu0 0.0
        %3304 = vmatprep.subr.mxu0 0.0
        %3305 = vmatpush1.msra.mxu0 0.0
        %3306 = vmatprep.subr.mxu0 0.0
        %3307 = vmatpush1.msra.mxu0 0.0
        %3308 = vmatprep.subr.mxu0 0.0
        %3309 = vmatpush1.msra.mxu0 0.0
        %3310 = vmatprep.subr.mxu0 0.0
        %3311 = vmatpush1.msra.mxu0 0.0
        %3312 = vmatprep.subr.mxu0 0.0
        %3313 = vmatpush1.msra.mxu0 0.0
        %3314 = vmatprep.mubr.f32.mxu0 0.0
        %3315 = vmatmul.mubr.f32.gmra.mrb[0].mxu0 %v3248
        %v3316 = vpop.f32.mrb[0].mxu0
        %v3317 = vadd.f32 %v3246, %v3316
        %v3318 = vpop.f32.mrb[0].mxu0
        %3319 = vdwg.mxu0
        %vm3320 = vcmask 57344
        %v3321 = vsel %vm3320, %v3317, -inf
        %3322 = vmax.xlane.f32.xlu0 %v3321
        %v3323 = vpop.xlane.xlu0 %3322
        %v3324 = vsub.f32 %v3317, %v3323
        %v3325 = vmul.f32 %v3324, 1.442695
        %v3326 = vpow.pop %v3325
        %v3327 = vsel %vm3320, %v3326, 0.0
        %3328 = vadd.xlane.f32.xlu0 %v3327
        %v3329 = vpop.xlane.xlu0 %3328
        %v3330 = vrcp.pop %v3329
        %v3331 = vmul.f32 %v3326, %v3330
        %3332 = vst.msk [vmem:[%s432] sm:$0x1] %vm3320, %v3331
        %s3333 = sand.u32 %s313, 1
        %s3334 = scalar_lea.sflag [#allocation3], %s3333
        %s3335 = sand.u32 %s313, 1
        %s3336 = scalar_lea.vmem [#allocation2], %s3335
        // Predicated region
        $region73: #{standard_thl_convnet.1} parent=71 // pred_check
          %p3337 = pneg %p323
        $region74: #{standard_thl_convnet.1} parent=71 // pred_check_branch
          %3339 = sbr.rel (%p3337) target = $region76
        $region75: #{standard_thl_convnet.1} parent=71 // pred_region
          %s3341 = ssub.s32 16, 16
          %3342 = vsyncadd %s3334, %s3341
          %s3343 = smul.addr %s27, 16
          %s3344 = scalar_lea.hbm %s13, %s3343
          %s3346 = sshll.u32 %s3336, 4
          %s3347 = int_to_ptr.vmem [resolvable:$true] %s3346
          %3349 = dma.vmem_to_hbm [thread:$0]  %s3347, 16, %s3344, %s3334
        $region76: #{standard_thl_convnet.1} parent=71 // pred_fallthru
          _
      $region72: #{standard_thl_convnet.1} parent=5 // pred_fallthru
        _
      %p3350 = scmp.le.s32.totalorder 2, %s22
      // Predicated region
      $region77: #{standard_thl_convnet.1} parent=5 // pred_check
        %p3351 = pneg %p3350
      $region78: #{standard_thl_convnet.1} parent=5 // pred_check_branch
        %3353 = sbr.rel (%p3351) target = $region80
      $region79: #{standard_thl_convnet.1} parent=5 // pred_region
        %s3354 = ssub.s32 %s22, 2
        // Predicated region
        $region81: #{standard_thl_convnet.1} parent=79 // pred_check
          %p3355 = pneg %p329
        $region82: #{standard_thl_convnet.1} parent=79 // pred_check_branch
          %3357 = sbr.rel (%p3355) target = $region84
        $region83: #{standard_thl_convnet.1} parent=79 // pred_region
          %s3358 = sand.u32 %s314, 1
          %s3359 = scalar_lea.sflag [#allocation3], %s3358
          %s3360 = sand.u32 %s314, 1
          %s3361 = scalar_lea.vmem [#allocation2], %s3360
          %3362 = dma.done %s3359, 16
        $region84: #{standard_thl_convnet.1} parent=79 // pred_fallthru
          _
      $region80: #{standard_thl_convnet.1} parent=5 // pred_fallthru
        _
    $region6: #{standard_thl_convnet.1} parent=1 // loop_footer
      %s26 = sadd.s32 1, %s22
    $region7: #{standard_thl_convnet.1} parent=1 // loop_footer_branch
      %21 = sbr.rel target = $region3
    $region8: #{standard_thl_convnet.1} parent=1 // loop_exit
      _
    %3363 = vsyncpa [#allocation3], 1
    %s3364 = scalar_lea.sflag [#allocation3], 1
    %3365 = vsyncpa %s3364, 1

</llo_original>
